<compile_context>
chip_gen: v5e
topology: v5e:2x2
jax: 0.10.0
libtpu: 0.0.40
codegen_flags: <defaults>
</compile_context>

<pallas_src>
import functools
import math

import jax
import jax.numpy as jnp
from jax import lax
from jax.experimental import pallas as pl
from jax.experimental.pallas import tpu as pltpu


def _round_up(n, m):
    return ((n + m - 1) // m) * m


def _sigmoid(x):
    # tanh-based sigmoid: keeps the transcendental on the EUP slot and avoids
    # a VPU divide in the inner loop.
    return 0.5 * (jnp.tanh(0.5 * x) + 1.0)


def _lstm_fc_kernel(num_layers, hidden_p, x_ref, *refs):
    """refs = [w_ih_0, w_hh_0, b_0, ..., w_ih_{L-1}, w_hh_{L-1}, b_{L-1},
               w_fc, b_fc, out_ref, h_scr, c_scr, seq_scr, gate_scr]"""
    n_w = 3 * num_layers + 2
    w_refs = refs[:n_w]
    out_ref = refs[n_w]
    h_scr, c_scr, seq_scr, gate_scr = refs[n_w + 1:]

    T, Bt, D = x_ref.shape
    Hp = hidden_p

    for l in range(num_layers):
        w_ih_ref = w_refs[3 * l]       # (in_l, 4*Hp)  bf16
        w_hh_ref = w_refs[3 * l + 1]   # (Hp,  4*Hp)   bf16
        b_ref = w_refs[3 * l + 2]      # (1,   4*Hp)   f32  (= b_ih + b_hh)

        # ---- Hoisted input projection: one big MXU matmul per layer. ----
        if l == 0:
            inp = x_ref[...].reshape(T * Bt, D).astype(w_ih_ref.dtype)
        else:
            inp = seq_scr[...].reshape(T * Bt, Hp)   # already bf16
        g_in = jnp.dot(inp, w_ih_ref[...], preferred_element_type=jnp.float32)
        gate_scr[...] = (g_in + b_ref[...]).reshape(T, Bt, 4 * Hp)

        h_scr[...] = jnp.zeros_like(h_scr)
        c_scr[...] = jnp.zeros_like(c_scr)

        last_layer = l == num_layers - 1

        def step(t, carry, w_hh_ref=w_hh_ref, last_layer=last_layer):
            h = h_scr[...]
            # Only the recurrent matmul remains inside the serial loop; the
            # weight is streamed from its VMEM Ref each iteration.
            gates = gate_scr[t] + jnp.dot(
                h.astype(w_hh_ref.dtype), w_hh_ref[...],
                preferred_element_type=jnp.float32)
            # Lane-aligned gate blocks (each gate is a whole 128-lane group).
            i = _sigmoid(gates[:, 0 * Hp:1 * Hp])
            f = _sigmoid(gates[:, 1 * Hp:2 * Hp])
            g = jnp.tanh(gates[:, 2 * Hp:3 * Hp])
            o = _sigmoid(gates[:, 3 * Hp:4 * Hp])
            c_new = f * c_scr[...] + i * g
            h_new = o * jnp.tanh(c_new)
            c_scr[...] = c_new
            h_scr[...] = h_new
            if not last_layer:   # top layer's sequence output is never read
                seq_scr[t] = h_new.astype(seq_scr.dtype)
            return carry

        lax.fori_loop(0, T, step, 0, unroll=True)

    # fc on the final timestep's hidden state of the top layer (== h_scr now).
    w_fc_ref = w_refs[3 * num_layers]      # (Hp, Op) bf16
    b_fc_ref = w_refs[3 * num_layers + 1]  # (1,  Op) f32
    out_ref[...] = (jnp.dot(h_scr[...].astype(w_fc_ref.dtype), w_fc_ref[...],
                            preferred_element_type=jnp.float32)
                    + b_fc_ref[...])


def _pad_gate_cols(w, H, Hp):
    """(rows, 4H) -> (rows, 4Hp): each gate block placed at a multiple of Hp."""
    if H == Hp:
        return w
    blocks = [jnp.pad(w[:, g * H:(g + 1) * H], ((0, 0), (0, Hp - H)))
              for g in range(4)]
    return jnp.concatenate(blocks, axis=1)


def _prep_weights(params, *, hidden_size, num_layers, output_size,
                  Hp, Op, compute_dtype):
    args = []
    for l, (w_ih, w_hh, b) in enumerate(params["layers"]):
        in_l = w_ih.shape[0]
        in_p = in_l if l == 0 else Hp
        w_ih_p = jnp.pad(w_ih, ((0, in_p - in_l), (0, 0)))
        w_ih_p = _pad_gate_cols(w_ih_p, hidden_size, Hp).astype(compute_dtype)
        w_hh_p = jnp.pad(w_hh, ((0, Hp - hidden_size), (0, 0)))
        w_hh_p = _pad_gate_cols(w_hh_p, hidden_size, Hp).astype(compute_dtype)
        b_p = _pad_gate_cols(b, hidden_size, Hp).astype(jnp.float32)
        args += [w_ih_p, w_hh_p, b_p]
    w_fc_p = jnp.pad(params["w_fc"],
                     ((0, Hp - hidden_size), (0, Op - output_size))
                     ).astype(compute_dtype)
    b_fc_p = jnp.pad(params["b_fc"],
                     ((0, 0), (0, Op - output_size))).astype(jnp.float32)
    args += [w_fc_p, b_fc_p]
    return args


def _full_block(arr):
    nd = arr.ndim
    return pl.BlockSpec(arr.shape, lambda bi, nd=nd: (0,) * nd)


def lstm_forward(x, params, *, hidden_size, num_layers, output_size,
                 compute_dtype=jnp.bfloat16):
    """x: (B, T, D) float32 -> (B, output_size) float32"""
    B, T, D = x.shape
    Hp = _round_up(hidden_size, 128)     # lane-aligned gate blocks
    Op = _round_up(output_size, 128)     # lane-dense fc output
    Bp = _round_up(B, 8)                 # sublane-aligned batch
    if Bp > 128:
        Bt = 128
        Bp = _round_up(Bp, Bt)
    else:
        Bt = Bp
    n_btiles = Bp // Bt

    x_p = jnp.pad(x, ((0, Bp - B), (0, 0), (0, 0)))
    x_tm = jnp.transpose(x_p, (1, 0, 2))         # (T, Bp, D) time-major, f32

    w_args = _prep_weights(params, hidden_size=hidden_size,
                           num_layers=num_layers, output_size=output_size,
                           Hp=Hp, Op=Op, compute_dtype=compute_dtype)
    args = [x_tm] + w_args

    in_specs = [pl.BlockSpec((T, Bt, D), lambda bi: (0, bi, 0))]
    in_specs += [_full_block(w) for w in w_args]

    kernel = functools.partial(_lstm_fc_kernel, num_layers, Hp)

    out = pl.pallas_call(
        kernel,
        out_shape=jax.ShapeDtypeStruct((Bp, Op), jnp.float32),
        grid=(n_btiles,),
        in_specs=in_specs,
        out_specs=pl.BlockSpec((Bt, Op), lambda bi: (bi, 0)),
        scratch_shapes=[
            pltpu.VMEM((Bt, Hp), jnp.float32),          # h
            pltpu.VMEM((Bt, Hp), jnp.float32),          # c
            pltpu.VMEM((T, Bt, Hp), compute_dtype),     # per-layer output seq
            pltpu.VMEM((T, Bt, 4 * Hp), jnp.float32),   # precomputed in-gates
        ],
        compiler_params=pltpu.CompilerParams(
            dimension_semantics=("parallel",),
            vmem_limit_bytes=64 * 1024 * 1024),
    )(*args)
    return out[:B, :output_size]


def init_params(key, *, input_size, hidden_size, num_layers, output_size):
    """Deterministic init, PyTorch-style uniform(-1/sqrt(H), 1/sqrt(H))."""
    bound = 1.0 / math.sqrt(hidden_size)
    layers = []
    for l in range(num_layers):
        in_l = input_size if l == 0 else hidden_size
        key, k1, k2, k3, k4 = jax.random.split(key, 5)
        w_ih = jax.random.uniform(k1, (in_l, 4 * hidden_size), jnp.float32,
                                  -bound, bound)
        w_hh = jax.random.uniform(k2, (hidden_size, 4 * hidden_size),
                                  jnp.float32, -bound, bound)
        b_ih = jax.random.uniform(k3, (1, 4 * hidden_size), jnp.float32,
                                  -bound, bound)
        b_hh = jax.random.uniform(k4, (1, 4 * hidden_size), jnp.float32,
                                  -bound, bound)
        layers.append((w_ih, w_hh, b_ih + b_hh))
    key, k5, k6 = jax.random.split(key, 3)
    w_fc = jax.random.uniform(k5, (hidden_size, output_size), jnp.float32,
                              -bound, bound)
    b_fc = jax.random.uniform(k6, (1, output_size), jnp.float32,
                              -bound, bound)
    return {"layers": layers, "w_fc": w_fc, "b_fc": b_fc}


def lstm_reference(x, params, *, hidden_size, num_layers):
    """Pure-JAX f32 reference reproducing nn.LSTM(batch_first=True) + fc."""
    B, T, _ = x.shape
    inp = x
    for l in range(num_layers):
        w_ih, w_hh, b = params["layers"][l]
        h = jnp.zeros((B, hidden_size), jnp.float32)
        c = jnp.zeros((B, hidden_size), jnp.float32)
        outs = []
        for t in range(T):
            gates = inp[:, t, :] @ w_ih + h @ w_hh + b
            i = jax.nn.sigmoid(gates[:, 0 * hidden_size:1 * hidden_size])
            f = jax.nn.sigmoid(gates[:, 1 * hidden_size:2 * hidden_size])
            g = jnp.tanh(gates[:, 2 * hidden_size:3 * hidden_size])
            o = jax.nn.sigmoid(gates[:, 3 * hidden_size:4 * hidden_size])
            c = f * c + i * g
            h = o * jnp.tanh(c)
            outs.append(h)
        inp = jnp.stack(outs, axis=1)
    return h @ params["w_fc"] + params["b_fc"]


if __name__ == "__main__":
    # Small shapes consistent with the module's forward.
    batch, seq_len = 2, 8
    input_size, hidden_size, num_layers, output_size = 4, 32, 2, 3

    key = jax.random.PRNGKey(0)
    key, xk = jax.random.split(key)
    x = jax.random.normal(xk, (batch, seq_len, input_size), jnp.float32)

    params = init_params(key, input_size=input_size, hidden_size=hidden_size,
                         num_layers=num_layers, output_size=output_size)

    out = lstm_forward(x, params, hidden_size=hidden_size,
                       num_layers=num_layers, output_size=output_size)
    out = jax.block_until_ready(out)

    ref = lstm_reference(x, params, hidden_size=hidden_size,
                         num_layers=num_layers)
    assert out.shape == (batch, output_size)
    # Tolerance accounts for bfloat16 weight/activation feeds into the MXU
    # (accumulation is f32).
    assert jnp.allclose(out, ref, atol=2e-2, rtol=2e-2), (out, ref)

    print("KERNEL_OK")
</pallas_src>

<mosaic_0001>
module attributes {stable_mosaic.version = 11 : i64} {
  func.func @_lstm_fc_kernel(%arg0: i32, %arg1: memref<8x8x4xf32, #tpu.memory_space<vmem>>, %arg2: memref<4x512xbf16, #tpu.memory_space<vmem>>, %arg3: memref<128x512xbf16, #tpu.memory_space<vmem>>, %arg4: memref<1x512xf32, #tpu.memory_space<vmem>>, %arg5: memref<128x512xbf16, #tpu.memory_space<vmem>>, %arg6: memref<128x512xbf16, #tpu.memory_space<vmem>>, %arg7: memref<1x512xf32, #tpu.memory_space<vmem>>, %arg8: memref<128x128xbf16, #tpu.memory_space<vmem>>, %arg9: memref<1x128xf32, #tpu.memory_space<vmem>>, %arg10: memref<8x128xf32, #tpu.memory_space<vmem>>, %arg11: memref<8x128xf32, #tpu.memory_space<vmem>>, %arg12: memref<8x128xf32, #tpu.memory_space<vmem>>, %arg13: memref<8x8x128xbf16, #tpu.memory_space<vmem>>, %arg14: memref<8x8x512xf32, #tpu.memory_space<vmem>>) attributes {dimension_semantics = [#tpu.dimension_semantics<parallel>], iteration_bounds = array<i64: 1>, scalar_prefetch = 0 : i64, scratch_operands = 4 : i64, tpu.core_type = #tpu.core_type<tc>, window_params = [{transform_indices = @transform_0, window_bounds = array<i64: 8, 8, 4>}, {pipeline_mode = #tpu.pipeline_mode<synchronous>, transform_indices = @transform_1, window_bounds = array<i64: 4, 512>}, {pipeline_mode = #tpu.pipeline_mode<synchronous>, transform_indices = @transform_2, window_bounds = array<i64: 128, 512>}, {pipeline_mode = #tpu.pipeline_mode<synchronous>, transform_indices = @transform_3, window_bounds = array<i64: 1, 512>}, {pipeline_mode = #tpu.pipeline_mode<synchronous>, transform_indices = @transform_4, window_bounds = array<i64: 128, 512>}, {pipeline_mode = #tpu.pipeline_mode<synchronous>, transform_indices = @transform_5, window_bounds = array<i64: 128, 512>}, {pipeline_mode = #tpu.pipeline_mode<synchronous>, transform_indices = @transform_6, window_bounds = array<i64: 1, 512>}, {pipeline_mode = #tpu.pipeline_mode<synchronous>, transform_indices = @transform_7, window_bounds = array<i64: 128, 128>}, {pipeline_mode = #tpu.pipeline_mode<synchronous>, transform_indices = @transform_8, window_bounds = array<i64: 1, 128>}, {transform_indices = @transform_9, window_bounds = array<i64: 8, 128>}]} {
    %c0 = arith.constant 0 : index
    %c0_0 = arith.constant 0 : index
    %c0_1 = arith.constant 0 : index
    %0 = vector.load %arg1[%c0, %c0_0, %c0_1] : memref<8x8x4xf32, #tpu.memory_space<vmem>>, vector<8x8x4xf32>
    %1 = vector.shape_cast %0 : vector<8x8x4xf32> to vector<64x4xf32>
    %2 = arith.truncf %1 : vector<64x4xf32> to vector<64x4xbf16>
    %c0_2 = arith.constant 0 : index
    %c0_3 = arith.constant 0 : index
    %3 = vector.load %arg2[%c0_2, %c0_3] : memref<4x512xbf16, #tpu.memory_space<vmem>>, vector<4x512xbf16>
    %cst = arith.constant dense<0.000000e+00> : vector<64x512xf32>
    %4 = tpu.matmul %2, %3, %cst {dimension_numbers = #tpu.dot_dimension_numbers<[1], [0], [0], [1], [0, 0, 1, 1], [], []>} : vector<64x4xbf16>, vector<4x512xbf16>, vector<64x512xf32> -> vector<64x512xf32>
    %c0_4 = arith.constant 0 : index
    %c0_5 = arith.constant 0 : index
    %5 = vector.load %arg4[%c0_4, %c0_5] : memref<1x512xf32, #tpu.memory_space<vmem>>, vector<1x512xf32>
    %6 = vector.broadcast %5 : vector<1x512xf32> to vector<64x512xf32>
    %7 = arith.addf %4, %6 : vector<64x512xf32>
    %8 = vector.shape_cast %7 : vector<64x512xf32> to vector<8x8x512xf32>
    %c0_6 = arith.constant 0 : index
    %c0_7 = arith.constant 0 : index
    %c0_8 = arith.constant 0 : index
    %9 = vector.load %arg14[%c0_6, %c0_7, %c0_8] : memref<8x8x512xf32, #tpu.memory_space<vmem>>, vector<8x8x512xf32>
    tpu.vector_store %arg14[%c0_6, %c0_7, %c0_8], %8 {strides = array<i32>} : memref<8x8x512xf32, #tpu.memory_space<vmem>>, vector<8x8x512xf32>,
    %cst_9 = arith.constant 0.000000e+00 : f32
    %10 = vector.broadcast %cst_9 : f32 to vector<8x128xf32>
    %c0_10 = arith.constant 0 : index
    %c0_11 = arith.constant 0 : index
    %11 = vector.load %arg11[%c0_10, %c0_11] : memref<8x128xf32, #tpu.memory_space<vmem>>, vector<8x128xf32>
    tpu.vector_store %arg11[%c0_10, %c0_11], %10 {strides = array<i32>} : memref<8x128xf32, #tpu.memory_space<vmem>>, vector<8x128xf32>,
    %cst_12 = arith.constant 0.000000e+00 : f32
    %12 = vector.broadcast %cst_12 : f32 to vector<8x128xf32>
    %c0_13 = arith.constant 0 : index
    %c0_14 = arith.constant 0 : index
    %13 = vector.load %arg12[%c0_13, %c0_14] : memref<8x128xf32, #tpu.memory_space<vmem>>, vector<8x128xf32>
    tpu.vector_store %arg12[%c0_13, %c0_14], %12 {strides = array<i32>} : memref<8x128xf32, #tpu.memory_space<vmem>>, vector<8x128xf32>,
    %c0_i32 = arith.constant 0 : i32
    %c0_15 = arith.constant 0 : index
    %c0_16 = arith.constant 0 : index
    %14 = vector.load %arg11[%c0_15, %c0_16] : memref<8x128xf32, #tpu.memory_space<vmem>>, vector<8x128xf32>
    %15 = arith.index_cast %c0_i32 : i32 to index
    %c0_17 = arith.constant 0 : index
    %c0_18 = arith.constant 0 : index
    %16 = vector.load %arg14[%15, %c0_17, %c0_18] : memref<8x8x512xf32, #tpu.memory_space<vmem>>, vector<1x8x512xf32>
    %17 = vector.shape_cast %16 : vector<1x8x512xf32> to vector<8x512xf32>
    %18 = arith.truncf %14 : vector<8x128xf32> to vector<8x128xbf16>
    %c0_19 = arith.constant 0 : index
    %c0_20 = arith.constant 0 : index
    %19 = vector.load %arg3[%c0_19, %c0_20] : memref<128x512xbf16, #tpu.memory_space<vmem>>, vector<128x512xbf16>
    %cst_21 = arith.constant dense<0.000000e+00> : vector<8x512xf32>
    %20 = tpu.matmul %18, %19, %cst_21 {dimension_numbers = #tpu.dot_dimension_numbers<[1], [0], [0], [1], [0, 0, 1, 1], [], []>} : vector<8x128xbf16>, vector<128x512xbf16>, vector<8x512xf32> -> vector<8x512xf32>
    %21 = arith.addf %17, %20 : vector<8x512xf32>
    %22 = vector.extract_strided_slice %21 {offsets = [0, 0], sizes = [8, 128], strides = [1, 1]} : vector<8x512xf32> to vector<8x128xf32>
    %cst_22 = arith.constant 5.000000e-01 : f32
    %23 = vector.broadcast %cst_22 : f32 to vector<8x128xf32>
    %24 = arith.mulf %23, %22 : vector<8x128xf32>
    %25 = math.tanh %24 : vector<8x128xf32>
    %cst_23 = arith.constant 1.000000e+00 : f32
    %26 = vector.broadcast %cst_23 : f32 to vector<8x128xf32>
    %27 = arith.addf %25, %26 : vector<8x128xf32>
    %cst_24 = arith.constant 5.000000e-01 : f32
    %28 = vector.broadcast %cst_24 : f32 to vector<8x128xf32>
    %29 = arith.mulf %28, %27 : vector<8x128xf32>
    %30 = vector.extract_strided_slice %21 {offsets = [0, 128], sizes = [8, 128], strides = [1, 1]} : vector<8x512xf32> to vector<8x128xf32>
    %cst_25 = arith.constant 5.000000e-01 : f32
    %31 = vector.broadcast %cst_25 : f32 to vector<8x128xf32>
    %32 = arith.mulf %31, %30 : vector<8x128xf32>
    %33 = math.tanh %32 : vector<8x128xf32>
    %cst_26 = arith.constant 1.000000e+00 : f32
    %34 = vector.broadcast %cst_26 : f32 to vector<8x128xf32>
    %35 = arith.addf %33, %34 : vector<8x128xf32>
    %cst_27 = arith.constant 5.000000e-01 : f32
    %36 = vector.broadcast %cst_27 : f32 to vector<8x128xf32>
    %37 = arith.mulf %36, %35 : vector<8x128xf32>
    %38 = vector.extract_strided_slice %21 {offsets = [0, 256], sizes = [8, 128], strides = [1, 1]} : vector<8x512xf32> to vector<8x128xf32>
    %39 = math.tanh %38 : vector<8x128xf32>
    %40 = vector.extract_strided_slice %21 {offsets = [0, 384], sizes = [8, 128], strides = [1, 1]} : vector<8x512xf32> to vector<8x128xf32>
    %cst_28 = arith.constant 5.000000e-01 : f32
    %41 = vector.broadcast %cst_28 : f32 to vector<8x128xf32>
    %42 = arith.mulf %41, %40 : vector<8x128xf32>
    %43 = math.tanh %42 : vector<8x128xf32>
    %cst_29 = arith.constant 1.000000e+00 : f32
    %44 = vector.broadcast %cst_29 : f32 to vector<8x128xf32>
    %45 = arith.addf %43, %44 : vector<8x128xf32>
    %cst_30 = arith.constant 5.000000e-01 : f32
    %46 = vector.broadcast %cst_30 : f32 to vector<8x128xf32>
    %47 = arith.mulf %46, %45 : vector<8x128xf32>
    %c0_31 = arith.constant 0 : index
    %c0_32 = arith.constant 0 : index
    %48 = vector.load %arg12[%c0_31, %c0_32] : memref<8x128xf32, #tpu.memory_space<vmem>>, vector<8x128xf32>
    %49 = arith.mulf %37, %48 : vector<8x128xf32>
    %50 = arith.mulf %29, %39 : vector<8x128xf32>
    %51 = arith.addf %49, %50 : vector<8x128xf32>
    %52 = math.tanh %51 : vector<8x128xf32>
    %53 = arith.mulf %47, %52 : vector<8x128xf32>
    %c0_33 = arith.constant 0 : index
    %c0_34 = arith.constant 0 : index
    %54 = vector.load %arg12[%c0_33, %c0_34] : memref<8x128xf32, #tpu.memory_space<vmem>>, vector<8x128xf32>
    tpu.vector_store %arg12[%c0_33, %c0_34], %51 {strides = array<i32>} : memref<8x128xf32, #tpu.memory_space<vmem>>, vector<8x128xf32>,
    %c0_35 = arith.constant 0 : index
    %c0_36 = arith.constant 0 : index
    %55 = vector.load %arg11[%c0_35, %c0_36] : memref<8x128xf32, #tpu.memory_space<vmem>>, vector<8x128xf32>
    tpu.vector_store %arg11[%c0_35, %c0_36], %53 {strides = array<i32>} : memref<8x128xf32, #tpu.memory_space<vmem>>, vector<8x128xf32>,
    %56 = arith.truncf %53 : vector<8x128xf32> to vector<8x128xbf16>
    %57 = arith.index_cast %c0_i32 : i32 to index
    %c0_37 = arith.constant 0 : index
    %c0_38 = arith.constant 0 : index
    %58 = vector.load %arg13[%57, %c0_37, %c0_38] : memref<8x8x128xbf16, #tpu.memory_space<vmem>>, vector<1x8x128xbf16>
    %59 = vector.shape_cast %58 : vector<1x8x128xbf16> to vector<8x128xbf16>
    %60 = vector.shape_cast %56 : vector<8x128xbf16> to vector<1x8x128xbf16>
    tpu.vector_store %arg13[%57, %c0_37, %c0_38], %60 {strides = array<i32>} : memref<8x8x128xbf16, #tpu.memory_space<vmem>>, vector<1x8x128xbf16>,
    %c1_i32 = arith.constant 1 : i32
    %c0_39 = arith.constant 0 : index
    %c0_40 = arith.constant 0 : index
    %61 = vector.load %arg11[%c0_39, %c0_40] : memref<8x128xf32, #tpu.memory_space<vmem>>, vector<8x128xf32>
    %62 = arith.index_cast %c1_i32 : i32 to index
    %c0_41 = arith.constant 0 : index
    %c0_42 = arith.constant 0 : index
    %63 = vector.load %arg14[%62, %c0_41, %c0_42] : memref<8x8x512xf32, #tpu.memory_space<vmem>>, vector<1x8x512xf32>
    %64 = vector.shape_cast %63 : vector<1x8x512xf32> to vector<8x512xf32>
    %65 = arith.truncf %61 : vector<8x128xf32> to vector<8x128xbf16>
    %c0_43 = arith.constant 0 : index
    %c0_44 = arith.constant 0 : index
    %66 = vector.load %arg3[%c0_43, %c0_44] : memref<128x512xbf16, #tpu.memory_space<vmem>>, vector<128x512xbf16>
    %cst_45 = arith.constant dense<0.000000e+00> : vector<8x512xf32>
    %67 = tpu.matmul %65, %66, %cst_45 {dimension_numbers = #tpu.dot_dimension_numbers<[1], [0], [0], [1], [0, 0, 1, 1], [], []>} : vector<8x128xbf16>, vector<128x512xbf16>, vector<8x512xf32> -> vector<8x512xf32>
    %68 = arith.addf %64, %67 : vector<8x512xf32>
    %69 = vector.extract_strided_slice %68 {offsets = [0, 0], sizes = [8, 128], strides = [1, 1]} : vector<8x512xf32> to vector<8x128xf32>
    %cst_46 = arith.constant 5.000000e-01 : f32
    %70 = vector.broadcast %cst_46 : f32 to vector<8x128xf32>
    %71 = arith.mulf %70, %69 : vector<8x128xf32>
    %72 = math.tanh %71 : vector<8x128xf32>
    %cst_47 = arith.constant 1.000000e+00 : f32
    %73 = vector.broadcast %cst_47 : f32 to vector<8x128xf32>
    %74 = arith.addf %72, %73 : vector<8x128xf32>
    %cst_48 = arith.constant 5.000000e-01 : f32
    %75 = vector.broadcast %cst_48 : f32 to vector<8x128xf32>
    %76 = arith.mulf %75, %74 : vector<8x128xf32>
    %77 = vector.extract_strided_slice %68 {offsets = [0, 128], sizes = [8, 128], strides = [1, 1]} : vector<8x512xf32> to vector<8x128xf32>
    %cst_49 = arith.constant 5.000000e-01 : f32
    %78 = vector.broadcast %cst_49 : f32 to vector<8x128xf32>
    %79 = arith.mulf %78, %77 : vector<8x128xf32>
    %80 = math.tanh %79 : vector<8x128xf32>
    %cst_50 = arith.constant 1.000000e+00 : f32
    %81 = vector.broadcast %cst_50 : f32 to vector<8x128xf32>
    %82 = arith.addf %80, %81 : vector<8x128xf32>
    %cst_51 = arith.constant 5.000000e-01 : f32
    %83 = vector.broadcast %cst_51 : f32 to vector<8x128xf32>
    %84 = arith.mulf %83, %82 : vector<8x128xf32>
    %85 = vector.extract_strided_slice %68 {offsets = [0, 256], sizes = [8, 128], strides = [1, 1]} : vector<8x512xf32> to vector<8x128xf32>
    %86 = math.tanh %85 : vector<8x128xf32>
    %87 = vector.extract_strided_slice %68 {offsets = [0, 384], sizes = [8, 128], strides = [1, 1]} : vector<8x512xf32> to vector<8x128xf32>
    %cst_52 = arith.constant 5.000000e-01 : f32
    %88 = vector.broadcast %cst_52 : f32 to vector<8x128xf32>
    %89 = arith.mulf %88, %87 : vector<8x128xf32>
    %90 = math.tanh %89 : vector<8x128xf32>
    %cst_53 = arith.constant 1.000000e+00 : f32
    %91 = vector.broadcast %cst_53 : f32 to vector<8x128xf32>
    %92 = arith.addf %90, %91 : vector<8x128xf32>
    %cst_54 = arith.constant 5.000000e-01 : f32
    %93 = vector.broadcast %cst_54 : f32 to vector<8x128xf32>
    %94 = arith.mulf %93, %92 : vector<8x128xf32>
    %c0_55 = arith.constant 0 : index
    %c0_56 = arith.constant 0 : index
    %95 = vector.load %arg12[%c0_55, %c0_56] : memref<8x128xf32, #tpu.memory_space<vmem>>, vector<8x128xf32>
    %96 = arith.mulf %84, %95 : vector<8x128xf32>
    %97 = arith.mulf %76, %86 : vector<8x128xf32>
    %98 = arith.addf %96, %97 : vector<8x128xf32>
    %99 = math.tanh %98 : vector<8x128xf32>
    %100 = arith.mulf %94, %99 : vector<8x128xf32>
    %c0_57 = arith.constant 0 : index
    %c0_58 = arith.constant 0 : index
    %101 = vector.load %arg12[%c0_57, %c0_58] : memref<8x128xf32, #tpu.memory_space<vmem>>, vector<8x128xf32>
    tpu.vector_store %arg12[%c0_57, %c0_58], %98 {strides = array<i32>} : memref<8x128xf32, #tpu.memory_space<vmem>>, vector<8x128xf32>,
    %c0_59 = arith.constant 0 : index
    %c0_60 = arith.constant 0 : index
    %102 = vector.load %arg11[%c0_59, %c0_60] : memref<8x128xf32, #tpu.memory_space<vmem>>, vector<8x128xf32>
    tpu.vector_store %arg11[%c0_59, %c0_60], %100 {strides = array<i32>} : memref<8x128xf32, #tpu.memory_space<vmem>>, vector<8x128xf32>,
    %103 = arith.truncf %100 : vector<8x128xf32> to vector<8x128xbf16>
    %104 = arith.index_cast %c1_i32 : i32 to index
    %c0_61 = arith.constant 0 : index
    %c0_62 = arith.constant 0 : index
    %105 = vector.load %arg13[%104, %c0_61, %c0_62] : memref<8x8x128xbf16, #tpu.memory_space<vmem>>, vector<1x8x128xbf16>
    %106 = vector.shape_cast %105 : vector<1x8x128xbf16> to vector<8x128xbf16>
    %107 = vector.shape_cast %103 : vector<8x128xbf16> to vector<1x8x128xbf16>
    tpu.vector_store %arg13[%104, %c0_61, %c0_62], %107 {strides = array<i32>} : memref<8x8x128xbf16, #tpu.memory_space<vmem>>, vector<1x8x128xbf16>,
    %c2_i32 = arith.constant 2 : i32
    %c0_63 = arith.constant 0 : index
    %c0_64 = arith.constant 0 : index
    %108 = vector.load %arg11[%c0_63, %c0_64] : memref<8x128xf32, #tpu.memory_space<vmem>>, vector<8x128xf32>
    %109 = arith.index_cast %c2_i32 : i32 to index
    %c0_65 = arith.constant 0 : index
    %c0_66 = arith.constant 0 : index
    %110 = vector.load %arg14[%109, %c0_65, %c0_66] : memref<8x8x512xf32, #tpu.memory_space<vmem>>, vector<1x8x512xf32>
    %111 = vector.shape_cast %110 : vector<1x8x512xf32> to vector<8x512xf32>
    %112 = arith.truncf %108 : vector<8x128xf32> to vector<8x128xbf16>
    %c0_67 = arith.constant 0 : index
    %c0_68 = arith.constant 0 : index
    %113 = vector.load %arg3[%c0_67, %c0_68] : memref<128x512xbf16, #tpu.memory_space<vmem>>, vector<128x512xbf16>
    %cst_69 = arith.constant dense<0.000000e+00> : vector<8x512xf32>
    %114 = tpu.matmul %112, %113, %cst_69 {dimension_numbers = #tpu.dot_dimension_numbers<[1], [0], [0], [1], [0, 0, 1, 1], [], []>} : vector<8x128xbf16>, vector<128x512xbf16>, vector<8x512xf32> -> vector<8x512xf32>
    %115 = arith.addf %111, %114 : vector<8x512xf32>
    %116 = vector.extract_strided_slice %115 {offsets = [0, 0], sizes = [8, 128], strides = [1, 1]} : vector<8x512xf32> to vector<8x128xf32>
    %cst_70 = arith.constant 5.000000e-01 : f32
    %117 = vector.broadcast %cst_70 : f32 to vector<8x128xf32>
    %118 = arith.mulf %117, %116 : vector<8x128xf32>
    %119 = math.tanh %118 : vector<8x128xf32>
    %cst_71 = arith.constant 1.000000e+00 : f32
    %120 = vector.broadcast %cst_71 : f32 to vector<8x128xf32>
    %121 = arith.addf %119, %120 : vector<8x128xf32>
    %cst_72 = arith.constant 5.000000e-01 : f32
    %122 = vector.broadcast %cst_72 : f32 to vector<8x128xf32>
    %123 = arith.mulf %122, %121 : vector<8x128xf32>
    %124 = vector.extract_strided_slice %115 {offsets = [0, 128], sizes = [8, 128], strides = [1, 1]} : vector<8x512xf32> to vector<8x128xf32>
    %cst_73 = arith.constant 5.000000e-01 : f32
    %125 = vector.broadcast %cst_73 : f32 to vector<8x128xf32>
    %126 = arith.mulf %125, %124 : vector<8x128xf32>
    %127 = math.tanh %126 : vector<8x128xf32>
    %cst_74 = arith.constant 1.000000e+00 : f32
    %128 = vector.broadcast %cst_74 : f32 to vector<8x128xf32>
    %129 = arith.addf %127, %128 : vector<8x128xf32>
    %cst_75 = arith.constant 5.000000e-01 : f32
    %130 = vector.broadcast %cst_75 : f32 to vector<8x128xf32>
    %131 = arith.mulf %130, %129 : vector<8x128xf32>
    %132 = vector.extract_strided_slice %115 {offsets = [0, 256], sizes = [8, 128], strides = [1, 1]} : vector<8x512xf32> to vector<8x128xf32>
    %133 = math.tanh %132 : vector<8x128xf32>
    %134 = vector.extract_strided_slice %115 {offsets = [0, 384], sizes = [8, 128], strides = [1, 1]} : vector<8x512xf32> to vector<8x128xf32>
    %cst_76 = arith.constant 5.000000e-01 : f32
    %135 = vector.broadcast %cst_76 : f32 to vector<8x128xf32>
    %136 = arith.mulf %135, %134 : vector<8x128xf32>
    %137 = math.tanh %136 : vector<8x128xf32>
    %cst_77 = arith.constant 1.000000e+00 : f32
    %138 = vector.broadcast %cst_77 : f32 to vector<8x128xf32>
    %139 = arith.addf %137, %138 : vector<8x128xf32>
    %cst_78 = arith.constant 5.000000e-01 : f32
    %140 = vector.broadcast %cst_78 : f32 to vector<8x128xf32>
    %141 = arith.mulf %140, %139 : vector<8x128xf32>
    %c0_79 = arith.constant 0 : index
    %c0_80 = arith.constant 0 : index
    %142 = vector.load %arg12[%c0_79, %c0_80] : memref<8x128xf32, #tpu.memory_space<vmem>>, vector<8x128xf32>
    %143 = arith.mulf %131, %142 : vector<8x128xf32>
    %144 = arith.mulf %123, %133 : vector<8x128xf32>
    %145 = arith.addf %143, %144 : vector<8x128xf32>
    %146 = math.tanh %145 : vector<8x128xf32>
    %147 = arith.mulf %141, %146 : vector<8x128xf32>
    %c0_81 = arith.constant 0 : index
    %c0_82 = arith.constant 0 : index
    %148 = vector.load %arg12[%c0_81, %c0_82] : memref<8x128xf32, #tpu.memory_space<vmem>>, vector<8x128xf32>
    tpu.vector_store %arg12[%c0_81, %c0_82], %145 {strides = array<i32>} : memref<8x128xf32, #tpu.memory_space<vmem>>, vector<8x128xf32>,
    %c0_83 = arith.constant 0 : index
    %c0_84 = arith.constant 0 : index
    %149 = vector.load %arg11[%c0_83, %c0_84] : memref<8x128xf32, #tpu.memory_space<vmem>>, vector<8x128xf32>
    tpu.vector_store %arg11[%c0_83, %c0_84], %147 {strides = array<i32>} : memref<8x128xf32, #tpu.memory_space<vmem>>, vector<8x128xf32>,
    %150 = arith.truncf %147 : vector<8x128xf32> to vector<8x128xbf16>
    %151 = arith.index_cast %c2_i32 : i32 to index
    %c0_85 = arith.constant 0 : index
    %c0_86 = arith.constant 0 : index
    %152 = vector.load %arg13[%151, %c0_85, %c0_86] : memref<8x8x128xbf16, #tpu.memory_space<vmem>>, vector<1x8x128xbf16>
    %153 = vector.shape_cast %152 : vector<1x8x128xbf16> to vector<8x128xbf16>
    %154 = vector.shape_cast %150 : vector<8x128xbf16> to vector<1x8x128xbf16>
    tpu.vector_store %arg13[%151, %c0_85, %c0_86], %154 {strides = array<i32>} : memref<8x8x128xbf16, #tpu.memory_space<vmem>>, vector<1x8x128xbf16>,
    %c3_i32 = arith.constant 3 : i32
    %c0_87 = arith.constant 0 : index
    %c0_88 = arith.constant 0 : index
    %155 = vector.load %arg11[%c0_87, %c0_88] : memref<8x128xf32, #tpu.memory_space<vmem>>, vector<8x128xf32>
    %156 = arith.index_cast %c3_i32 : i32 to index
    %c0_89 = arith.constant 0 : index
    %c0_90 = arith.constant 0 : index
    %157 = vector.load %arg14[%156, %c0_89, %c0_90] : memref<8x8x512xf32, #tpu.memory_space<vmem>>, vector<1x8x512xf32>
    %158 = vector.shape_cast %157 : vector<1x8x512xf32> to vector<8x512xf32>
    %159 = arith.truncf %155 : vector<8x128xf32> to vector<8x128xbf16>
    %c0_91 = arith.constant 0 : index
    %c0_92 = arith.constant 0 : index
    %160 = vector.load %arg3[%c0_91, %c0_92] : memref<128x512xbf16, #tpu.memory_space<vmem>>, vector<128x512xbf16>
    %cst_93 = arith.constant dense<0.000000e+00> : vector<8x512xf32>
    %161 = tpu.matmul %159, %160, %cst_93 {dimension_numbers = #tpu.dot_dimension_numbers<[1], [0], [0], [1], [0, 0, 1, 1], [], []>} : vector<8x128xbf16>, vector<128x512xbf16>, vector<8x512xf32> -> vector<8x512xf32>
    %162 = arith.addf %158, %161 : vector<8x512xf32>
    %163 = vector.extract_strided_slice %162 {offsets = [0, 0], sizes = [8, 128], strides = [1, 1]} : vector<8x512xf32> to vector<8x128xf32>
    %cst_94 = arith.constant 5.000000e-01 : f32
    %164 = vector.broadcast %cst_94 : f32 to vector<8x128xf32>
    %165 = arith.mulf %164, %163 : vector<8x128xf32>
    %166 = math.tanh %165 : vector<8x128xf32>
    %cst_95 = arith.constant 1.000000e+00 : f32
    %167 = vector.broadcast %cst_95 : f32 to vector<8x128xf32>
    %168 = arith.addf %166, %167 : vector<8x128xf32>
    %cst_96 = arith.constant 5.000000e-01 : f32
    %169 = vector.broadcast %cst_96 : f32 to vector<8x128xf32>
    %170 = arith.mulf %169, %168 : vector<8x128xf32>
    %171 = vector.extract_strided_slice %162 {offsets = [0, 128], sizes = [8, 128], strides = [1, 1]} : vector<8x512xf32> to vector<8x128xf32>
    %cst_97 = arith.constant 5.000000e-01 : f32
    %172 = vector.broadcast %cst_97 : f32 to vector<8x128xf32>
    %173 = arith.mulf %172, %171 : vector<8x128xf32>
    %174 = math.tanh %173 : vector<8x128xf32>
    %cst_98 = arith.constant 1.000000e+00 : f32
    %175 = vector.broadcast %cst_98 : f32 to vector<8x128xf32>
    %176 = arith.addf %174, %175 : vector<8x128xf32>
    %cst_99 = arith.constant 5.000000e-01 : f32
    %177 = vector.broadcast %cst_99 : f32 to vector<8x128xf32>
    %178 = arith.mulf %177, %176 : vector<8x128xf32>
    %179 = vector.extract_strided_slice %162 {offsets = [0, 256], sizes = [8, 128], strides = [1, 1]} : vector<8x512xf32> to vector<8x128xf32>
    %180 = math.tanh %179 : vector<8x128xf32>
    %181 = vector.extract_strided_slice %162 {offsets = [0, 384], sizes = [8, 128], strides = [1, 1]} : vector<8x512xf32> to vector<8x128xf32>
    %cst_100 = arith.constant 5.000000e-01 : f32
    %182 = vector.broadcast %cst_100 : f32 to vector<8x128xf32>
    %183 = arith.mulf %182, %181 : vector<8x128xf32>
    %184 = math.tanh %183 : vector<8x128xf32>
    %cst_101 = arith.constant 1.000000e+00 : f32
    %185 = vector.broadcast %cst_101 : f32 to vector<8x128xf32>
    %186 = arith.addf %184, %185 : vector<8x128xf32>
    %cst_102 = arith.constant 5.000000e-01 : f32
    %187 = vector.broadcast %cst_102 : f32 to vector<8x128xf32>
    %188 = arith.mulf %187, %186 : vector<8x128xf32>
    %c0_103 = arith.constant 0 : index
    %c0_104 = arith.constant 0 : index
    %189 = vector.load %arg12[%c0_103, %c0_104] : memref<8x128xf32, #tpu.memory_space<vmem>>, vector<8x128xf32>
    %190 = arith.mulf %178, %189 : vector<8x128xf32>
    %191 = arith.mulf %170, %180 : vector<8x128xf32>
    %192 = arith.addf %190, %191 : vector<8x128xf32>
    %193 = math.tanh %192 : vector<8x128xf32>
    %194 = arith.mulf %188, %193 : vector<8x128xf32>
    %c0_105 = arith.constant 0 : index
    %c0_106 = arith.constant 0 : index
    %195 = vector.load %arg12[%c0_105, %c0_106] : memref<8x128xf32, #tpu.memory_space<vmem>>, vector<8x128xf32>
    tpu.vector_store %arg12[%c0_105, %c0_106], %192 {strides = array<i32>} : memref<8x128xf32, #tpu.memory_space<vmem>>, vector<8x128xf32>,
    %c0_107 = arith.constant 0 : index
    %c0_108 = arith.constant 0 : index
    %196 = vector.load %arg11[%c0_107, %c0_108] : memref<8x128xf32, #tpu.memory_space<vmem>>, vector<8x128xf32>
    tpu.vector_store %arg11[%c0_107, %c0_108], %194 {strides = array<i32>} : memref<8x128xf32, #tpu.memory_space<vmem>>, vector<8x128xf32>,
    %197 = arith.truncf %194 : vector<8x128xf32> to vector<8x128xbf16>
    %198 = arith.index_cast %c3_i32 : i32 to index
    %c0_109 = arith.constant 0 : index
    %c0_110 = arith.constant 0 : index
    %199 = vector.load %arg13[%198, %c0_109, %c0_110] : memref<8x8x128xbf16, #tpu.memory_space<vmem>>, vector<1x8x128xbf16>
    %200 = vector.shape_cast %199 : vector<1x8x128xbf16> to vector<8x128xbf16>
    %201 = vector.shape_cast %197 : vector<8x128xbf16> to vector<1x8x128xbf16>
    tpu.vector_store %arg13[%198, %c0_109, %c0_110], %201 {strides = array<i32>} : memref<8x8x128xbf16, #tpu.memory_space<vmem>>, vector<1x8x128xbf16>,
    %c4_i32 = arith.constant 4 : i32
    %c0_111 = arith.constant 0 : index
    %c0_112 = arith.constant 0 : index
    %202 = vector.load %arg11[%c0_111, %c0_112] : memref<8x128xf32, #tpu.memory_space<vmem>>, vector<8x128xf32>
    %203 = arith.index_cast %c4_i32 : i32 to index
    %c0_113 = arith.constant 0 : index
    %c0_114 = arith.constant 0 : index
    %204 = vector.load %arg14[%203, %c0_113, %c0_114] : memref<8x8x512xf32, #tpu.memory_space<vmem>>, vector<1x8x512xf32>
    %205 = vector.shape_cast %204 : vector<1x8x512xf32> to vector<8x512xf32>
    %206 = arith.truncf %202 : vector<8x128xf32> to vector<8x128xbf16>
    %c0_115 = arith.constant 0 : index
    %c0_116 = arith.constant 0 : index
    %207 = vector.load %arg3[%c0_115, %c0_116] : memref<128x512xbf16, #tpu.memory_space<vmem>>, vector<128x512xbf16>
    %cst_117 = arith.constant dense<0.000000e+00> : vector<8x512xf32>
    %208 = tpu.matmul %206, %207, %cst_117 {dimension_numbers = #tpu.dot_dimension_numbers<[1], [0], [0], [1], [0, 0, 1, 1], [], []>} : vector<8x128xbf16>, vector<128x512xbf16>, vector<8x512xf32> -> vector<8x512xf32>
    %209 = arith.addf %205, %208 : vector<8x512xf32>
    %210 = vector.extract_strided_slice %209 {offsets = [0, 0], sizes = [8, 128], strides = [1, 1]} : vector<8x512xf32> to vector<8x128xf32>
    %cst_118 = arith.constant 5.000000e-01 : f32
    %211 = vector.broadcast %cst_118 : f32 to vector<8x128xf32>
    %212 = arith.mulf %211, %210 : vector<8x128xf32>
    %213 = math.tanh %212 : vector<8x128xf32>
    %cst_119 = arith.constant 1.000000e+00 : f32
    %214 = vector.broadcast %cst_119 : f32 to vector<8x128xf32>
    %215 = arith.addf %213, %214 : vector<8x128xf32>
    %cst_120 = arith.constant 5.000000e-01 : f32
    %216 = vector.broadcast %cst_120 : f32 to vector<8x128xf32>
    %217 = arith.mulf %216, %215 : vector<8x128xf32>
    %218 = vector.extract_strided_slice %209 {offsets = [0, 128], sizes = [8, 128], strides = [1, 1]} : vector<8x512xf32> to vector<8x128xf32>
    %cst_121 = arith.constant 5.000000e-01 : f32
    %219 = vector.broadcast %cst_121 : f32 to vector<8x128xf32>
    %220 = arith.mulf %219, %218 : vector<8x128xf32>
    %221 = math.tanh %220 : vector<8x128xf32>
    %cst_122 = arith.constant 1.000000e+00 : f32
    %222 = vector.broadcast %cst_122 : f32 to vector<8x128xf32>
    %223 = arith.addf %221, %222 : vector<8x128xf32>
    %cst_123 = arith.constant 5.000000e-01 : f32
    %224 = vector.broadcast %cst_123 : f32 to vector<8x128xf32>
    %225 = arith.mulf %224, %223 : vector<8x128xf32>
    %226 = vector.extract_strided_slice %209 {offsets = [0, 256], sizes = [8, 128], strides = [1, 1]} : vector<8x512xf32> to vector<8x128xf32>
    %227 = math.tanh %226 : vector<8x128xf32>
    %228 = vector.extract_strided_slice %209 {offsets = [0, 384], sizes = [8, 128], strides = [1, 1]} : vector<8x512xf32> to vector<8x128xf32>
    %cst_124 = arith.constant 5.000000e-01 : f32
    %229 = vector.broadcast %cst_124 : f32 to vector<8x128xf32>
    %230 = arith.mulf %229, %228 : vector<8x128xf32>
    %231 = math.tanh %230 : vector<8x128xf32>
    %cst_125 = arith.constant 1.000000e+00 : f32
    %232 = vector.broadcast %cst_125 : f32 to vector<8x128xf32>
    %233 = arith.addf %231, %232 : vector<8x128xf32>
    %cst_126 = arith.constant 5.000000e-01 : f32
    %234 = vector.broadcast %cst_126 : f32 to vector<8x128xf32>
    %235 = arith.mulf %234, %233 : vector<8x128xf32>
    %c0_127 = arith.constant 0 : index
    %c0_128 = arith.constant 0 : index
    %236 = vector.load %arg12[%c0_127, %c0_128] : memref<8x128xf32, #tpu.memory_space<vmem>>, vector<8x128xf32>
    %237 = arith.mulf %225, %236 : vector<8x128xf32>
    %238 = arith.mulf %217, %227 : vector<8x128xf32>
    %239 = arith.addf %237, %238 : vector<8x128xf32>
    %240 = math.tanh %239 : vector<8x128xf32>
    %241 = arith.mulf %235, %240 : vector<8x128xf32>
    %c0_129 = arith.constant 0 : index
    %c0_130 = arith.constant 0 : index
    %242 = vector.load %arg12[%c0_129, %c0_130] : memref<8x128xf32, #tpu.memory_space<vmem>>, vector<8x128xf32>
    tpu.vector_store %arg12[%c0_129, %c0_130], %239 {strides = array<i32>} : memref<8x128xf32, #tpu.memory_space<vmem>>, vector<8x128xf32>,
    %c0_131 = arith.constant 0 : index
    %c0_132 = arith.constant 0 : index
    %243 = vector.load %arg11[%c0_131, %c0_132] : memref<8x128xf32, #tpu.memory_space<vmem>>, vector<8x128xf32>
    tpu.vector_store %arg11[%c0_131, %c0_132], %241 {strides = array<i32>} : memref<8x128xf32, #tpu.memory_space<vmem>>, vector<8x128xf32>,
    %244 = arith.truncf %241 : vector<8x128xf32> to vector<8x128xbf16>
    %245 = arith.index_cast %c4_i32 : i32 to index
    %c0_133 = arith.constant 0 : index
    %c0_134 = arith.constant 0 : index
    %246 = vector.load %arg13[%245, %c0_133, %c0_134] : memref<8x8x128xbf16, #tpu.memory_space<vmem>>, vector<1x8x128xbf16>
    %247 = vector.shape_cast %246 : vector<1x8x128xbf16> to vector<8x128xbf16>
    %248 = vector.shape_cast %244 : vector<8x128xbf16> to vector<1x8x128xbf16>
    tpu.vector_store %arg13[%245, %c0_133, %c0_134], %248 {strides = array<i32>} : memref<8x8x128xbf16, #tpu.memory_space<vmem>>, vector<1x8x128xbf16>,
    %c5_i32 = arith.constant 5 : i32
    %c0_135 = arith.constant 0 : index
    %c0_136 = arith.constant 0 : index
    %249 = vector.load %arg11[%c0_135, %c0_136] : memref<8x128xf32, #tpu.memory_space<vmem>>, vector<8x128xf32>
    %250 = arith.index_cast %c5_i32 : i32 to index
    %c0_137 = arith.constant 0 : index
    %c0_138 = arith.constant 0 : index
    %251 = vector.load %arg14[%250, %c0_137, %c0_138] : memref<8x8x512xf32, #tpu.memory_space<vmem>>, vector<1x8x512xf32>
    %252 = vector.shape_cast %251 : vector<1x8x512xf32> to vector<8x512xf32>
    %253 = arith.truncf %249 : vector<8x128xf32> to vector<8x128xbf16>
    %c0_139 = arith.constant 0 : index
    %c0_140 = arith.constant 0 : index
    %254 = vector.load %arg3[%c0_139, %c0_140] : memref<128x512xbf16, #tpu.memory_space<vmem>>, vector<128x512xbf16>
    %cst_141 = arith.constant dense<0.000000e+00> : vector<8x512xf32>
    %255 = tpu.matmul %253, %254, %cst_141 {dimension_numbers = #tpu.dot_dimension_numbers<[1], [0], [0], [1], [0, 0, 1, 1], [], []>} : vector<8x128xbf16>, vector<128x512xbf16>, vector<8x512xf32> -> vector<8x512xf32>
    %256 = arith.addf %252, %255 : vector<8x512xf32>
    %257 = vector.extract_strided_slice %256 {offsets = [0, 0], sizes = [8, 128], strides = [1, 1]} : vector<8x512xf32> to vector<8x128xf32>
    %cst_142 = arith.constant 5.000000e-01 : f32
    %258 = vector.broadcast %cst_142 : f32 to vector<8x128xf32>
    %259 = arith.mulf %258, %257 : vector<8x128xf32>
    %260 = math.tanh %259 : vector<8x128xf32>
    %cst_143 = arith.constant 1.000000e+00 : f32
    %261 = vector.broadcast %cst_143 : f32 to vector<8x128xf32>
    %262 = arith.addf %260, %261 : vector<8x128xf32>
    %cst_144 = arith.constant 5.000000e-01 : f32
    %263 = vector.broadcast %cst_144 : f32 to vector<8x128xf32>
    %264 = arith.mulf %263, %262 : vector<8x128xf32>
    %265 = vector.extract_strided_slice %256 {offsets = [0, 128], sizes = [8, 128], strides = [1, 1]} : vector<8x512xf32> to vector<8x128xf32>
    %cst_145 = arith.constant 5.000000e-01 : f32
    %266 = vector.broadcast %cst_145 : f32 to vector<8x128xf32>
    %267 = arith.mulf %266, %265 : vector<8x128xf32>
    %268 = math.tanh %267 : vector<8x128xf32>
    %cst_146 = arith.constant 1.000000e+00 : f32
    %269 = vector.broadcast %cst_146 : f32 to vector<8x128xf32>
    %270 = arith.addf %268, %269 : vector<8x128xf32>
    %cst_147 = arith.constant 5.000000e-01 : f32
    %271 = vector.broadcast %cst_147 : f32 to vector<8x128xf32>
    %272 = arith.mulf %271, %270 : vector<8x128xf32>
    %273 = vector.extract_strided_slice %256 {offsets = [0, 256], sizes = [8, 128], strides = [1, 1]} : vector<8x512xf32> to vector<8x128xf32>
    %274 = math.tanh %273 : vector<8x128xf32>
    %275 = vector.extract_strided_slice %256 {offsets = [0, 384], sizes = [8, 128], strides = [1, 1]} : vector<8x512xf32> to vector<8x128xf32>
    %cst_148 = arith.constant 5.000000e-01 : f32
    %276 = vector.broadcast %cst_148 : f32 to vector<8x128xf32>
    %277 = arith.mulf %276, %275 : vector<8x128xf32>
    %278 = math.tanh %277 : vector<8x128xf32>
    %cst_149 = arith.constant 1.000000e+00 : f32
    %279 = vector.broadcast %cst_149 : f32 to vector<8x128xf32>
    %280 = arith.addf %278, %279 : vector<8x128xf32>
    %cst_150 = arith.constant 5.000000e-01 : f32
    %281 = vector.broadcast %cst_150 : f32 to vector<8x128xf32>
    %282 = arith.mulf %281, %280 : vector<8x128xf32>
    %c0_151 = arith.constant 0 : index
    %c0_152 = arith.constant 0 : index
    %283 = vector.load %arg12[%c0_151, %c0_152] : memref<8x128xf32, #tpu.memory_space<vmem>>, vector<8x128xf32>
    %284 = arith.mulf %272, %283 : vector<8x128xf32>
    %285 = arith.mulf %264, %274 : vector<8x128xf32>
    %286 = arith.addf %284, %285 : vector<8x128xf32>
    %287 = math.tanh %286 : vector<8x128xf32>
    %288 = arith.mulf %282, %287 : vector<8x128xf32>
    %c0_153 = arith.constant 0 : index
    %c0_154 = arith.constant 0 : index
    %289 = vector.load %arg12[%c0_153, %c0_154] : memref<8x128xf32, #tpu.memory_space<vmem>>, vector<8x128xf32>
    tpu.vector_store %arg12[%c0_153, %c0_154], %286 {strides = array<i32>} : memref<8x128xf32, #tpu.memory_space<vmem>>, vector<8x128xf32>,
    %c0_155 = arith.constant 0 : index
    %c0_156 = arith.constant 0 : index
    %290 = vector.load %arg11[%c0_155, %c0_156] : memref<8x128xf32, #tpu.memory_space<vmem>>, vector<8x128xf32>
    tpu.vector_store %arg11[%c0_155, %c0_156], %288 {strides = array<i32>} : memref<8x128xf32, #tpu.memory_space<vmem>>, vector<8x128xf32>,
    %291 = arith.truncf %288 : vector<8x128xf32> to vector<8x128xbf16>
    %292 = arith.index_cast %c5_i32 : i32 to index
    %c0_157 = arith.constant 0 : index
    %c0_158 = arith.constant 0 : index
    %293 = vector.load %arg13[%292, %c0_157, %c0_158] : memref<8x8x128xbf16, #tpu.memory_space<vmem>>, vector<1x8x128xbf16>
    %294 = vector.shape_cast %293 : vector<1x8x128xbf16> to vector<8x128xbf16>
    %295 = vector.shape_cast %291 : vector<8x128xbf16> to vector<1x8x128xbf16>
    tpu.vector_store %arg13[%292, %c0_157, %c0_158], %295 {strides = array<i32>} : memref<8x8x128xbf16, #tpu.memory_space<vmem>>, vector<1x8x128xbf16>,
    %c6_i32 = arith.constant 6 : i32
    %c0_159 = arith.constant 0 : index
    %c0_160 = arith.constant 0 : index
    %296 = vector.load %arg11[%c0_159, %c0_160] : memref<8x128xf32, #tpu.memory_space<vmem>>, vector<8x128xf32>
    %297 = arith.index_cast %c6_i32 : i32 to index
    %c0_161 = arith.constant 0 : index
    %c0_162 = arith.constant 0 : index
    %298 = vector.load %arg14[%297, %c0_161, %c0_162] : memref<8x8x512xf32, #tpu.memory_space<vmem>>, vector<1x8x512xf32>
    %299 = vector.shape_cast %298 : vector<1x8x512xf32> to vector<8x512xf32>
    %300 = arith.truncf %296 : vector<8x128xf32> to vector<8x128xbf16>
    %c0_163 = arith.constant 0 : index
    %c0_164 = arith.constant 0 : index
    %301 = vector.load %arg3[%c0_163, %c0_164] : memref<128x512xbf16, #tpu.memory_space<vmem>>, vector<128x512xbf16>
    %cst_165 = arith.constant dense<0.000000e+00> : vector<8x512xf32>
    %302 = tpu.matmul %300, %301, %cst_165 {dimension_numbers = #tpu.dot_dimension_numbers<[1], [0], [0], [1], [0, 0, 1, 1], [], []>} : vector<8x128xbf16>, vector<128x512xbf16>, vector<8x512xf32> -> vector<8x512xf32>
    %303 = arith.addf %299, %302 : vector<8x512xf32>
    %304 = vector.extract_strided_slice %303 {offsets = [0, 0], sizes = [8, 128], strides = [1, 1]} : vector<8x512xf32> to vector<8x128xf32>
    %cst_166 = arith.constant 5.000000e-01 : f32
    %305 = vector.broadcast %cst_166 : f32 to vector<8x128xf32>
    %306 = arith.mulf %305, %304 : vector<8x128xf32>
    %307 = math.tanh %306 : vector<8x128xf32>
    %cst_167 = arith.constant 1.000000e+00 : f32
    %308 = vector.broadcast %cst_167 : f32 to vector<8x128xf32>
    %309 = arith.addf %307, %308 : vector<8x128xf32>
    %cst_168 = arith.constant 5.000000e-01 : f32
    %310 = vector.broadcast %cst_168 : f32 to vector<8x128xf32>
    %311 = arith.mulf %310, %309 : vector<8x128xf32>
    %312 = vector.extract_strided_slice %303 {offsets = [0, 128], sizes = [8, 128], strides = [1, 1]} : vector<8x512xf32> to vector<8x128xf32>
    %cst_169 = arith.constant 5.000000e-01 : f32
    %313 = vector.broadcast %cst_169 : f32 to vector<8x128xf32>
    %314 = arith.mulf %313, %312 : vector<8x128xf32>
    %315 = math.tanh %314 : vector<8x128xf32>
    %cst_170 = arith.constant 1.000000e+00 : f32
    %316 = vector.broadcast %cst_170 : f32 to vector<8x128xf32>
    %317 = arith.addf %315, %316 : vector<8x128xf32>
    %cst_171 = arith.constant 5.000000e-01 : f32
    %318 = vector.broadcast %cst_171 : f32 to vector<8x128xf32>
    %319 = arith.mulf %318, %317 : vector<8x128xf32>
    %320 = vector.extract_strided_slice %303 {offsets = [0, 256], sizes = [8, 128], strides = [1, 1]} : vector<8x512xf32> to vector<8x128xf32>
    %321 = math.tanh %320 : vector<8x128xf32>
    %322 = vector.extract_strided_slice %303 {offsets = [0, 384], sizes = [8, 128], strides = [1, 1]} : vector<8x512xf32> to vector<8x128xf32>
    %cst_172 = arith.constant 5.000000e-01 : f32
    %323 = vector.broadcast %cst_172 : f32 to vector<8x128xf32>
    %324 = arith.mulf %323, %322 : vector<8x128xf32>
    %325 = math.tanh %324 : vector<8x128xf32>
    %cst_173 = arith.constant 1.000000e+00 : f32
    %326 = vector.broadcast %cst_173 : f32 to vector<8x128xf32>
    %327 = arith.addf %325, %326 : vector<8x128xf32>
    %cst_174 = arith.constant 5.000000e-01 : f32
    %328 = vector.broadcast %cst_174 : f32 to vector<8x128xf32>
    %329 = arith.mulf %328, %327 : vector<8x128xf32>
    %c0_175 = arith.constant 0 : index
    %c0_176 = arith.constant 0 : index
    %330 = vector.load %arg12[%c0_175, %c0_176] : memref<8x128xf32, #tpu.memory_space<vmem>>, vector<8x128xf32>
    %331 = arith.mulf %319, %330 : vector<8x128xf32>
    %332 = arith.mulf %311, %321 : vector<8x128xf32>
    %333 = arith.addf %331, %332 : vector<8x128xf32>
    %334 = math.tanh %333 : vector<8x128xf32>
    %335 = arith.mulf %329, %334 : vector<8x128xf32>
    %c0_177 = arith.constant 0 : index
    %c0_178 = arith.constant 0 : index
    %336 = vector.load %arg12[%c0_177, %c0_178] : memref<8x128xf32, #tpu.memory_space<vmem>>, vector<8x128xf32>
    tpu.vector_store %arg12[%c0_177, %c0_178], %333 {strides = array<i32>} : memref<8x128xf32, #tpu.memory_space<vmem>>, vector<8x128xf32>,
    %c0_179 = arith.constant 0 : index
    %c0_180 = arith.constant 0 : index
    %337 = vector.load %arg11[%c0_179, %c0_180] : memref<8x128xf32, #tpu.memory_space<vmem>>, vector<8x128xf32>
    tpu.vector_store %arg11[%c0_179, %c0_180], %335 {strides = array<i32>} : memref<8x128xf32, #tpu.memory_space<vmem>>, vector<8x128xf32>,
    %338 = arith.truncf %335 : vector<8x128xf32> to vector<8x128xbf16>
    %339 = arith.index_cast %c6_i32 : i32 to index
    %c0_181 = arith.constant 0 : index
    %c0_182 = arith.constant 0 : index
    %340 = vector.load %arg13[%339, %c0_181, %c0_182] : memref<8x8x128xbf16, #tpu.memory_space<vmem>>, vector<1x8x128xbf16>
    %341 = vector.shape_cast %340 : vector<1x8x128xbf16> to vector<8x128xbf16>
    %342 = vector.shape_cast %338 : vector<8x128xbf16> to vector<1x8x128xbf16>
    tpu.vector_store %arg13[%339, %c0_181, %c0_182], %342 {strides = array<i32>} : memref<8x8x128xbf16, #tpu.memory_space<vmem>>, vector<1x8x128xbf16>,
    %c7_i32 = arith.constant 7 : i32
    %c0_183 = arith.constant 0 : index
    %c0_184 = arith.constant 0 : index
    %343 = vector.load %arg11[%c0_183, %c0_184] : memref<8x128xf32, #tpu.memory_space<vmem>>, vector<8x128xf32>
    %344 = arith.index_cast %c7_i32 : i32 to index
    %c0_185 = arith.constant 0 : index
    %c0_186 = arith.constant 0 : index
    %345 = vector.load %arg14[%344, %c0_185, %c0_186] : memref<8x8x512xf32, #tpu.memory_space<vmem>>, vector<1x8x512xf32>
    %346 = vector.shape_cast %345 : vector<1x8x512xf32> to vector<8x512xf32>
    %347 = arith.truncf %343 : vector<8x128xf32> to vector<8x128xbf16>
    %c0_187 = arith.constant 0 : index
    %c0_188 = arith.constant 0 : index
    %348 = vector.load %arg3[%c0_187, %c0_188] : memref<128x512xbf16, #tpu.memory_space<vmem>>, vector<128x512xbf16>
    %cst_189 = arith.constant dense<0.000000e+00> : vector<8x512xf32>
    %349 = tpu.matmul %347, %348, %cst_189 {dimension_numbers = #tpu.dot_dimension_numbers<[1], [0], [0], [1], [0, 0, 1, 1], [], []>} : vector<8x128xbf16>, vector<128x512xbf16>, vector<8x512xf32> -> vector<8x512xf32>
    %350 = arith.addf %346, %349 : vector<8x512xf32>
    %351 = vector.extract_strided_slice %350 {offsets = [0, 0], sizes = [8, 128], strides = [1, 1]} : vector<8x512xf32> to vector<8x128xf32>
    %cst_190 = arith.constant 5.000000e-01 : f32
    %352 = vector.broadcast %cst_190 : f32 to vector<8x128xf32>
    %353 = arith.mulf %352, %351 : vector<8x128xf32>
    %354 = math.tanh %353 : vector<8x128xf32>
    %cst_191 = arith.constant 1.000000e+00 : f32
    %355 = vector.broadcast %cst_191 : f32 to vector<8x128xf32>
    %356 = arith.addf %354, %355 : vector<8x128xf32>
    %cst_192 = arith.constant 5.000000e-01 : f32
    %357 = vector.broadcast %cst_192 : f32 to vector<8x128xf32>
    %358 = arith.mulf %357, %356 : vector<8x128xf32>
    %359 = vector.extract_strided_slice %350 {offsets = [0, 128], sizes = [8, 128], strides = [1, 1]} : vector<8x512xf32> to vector<8x128xf32>
    %cst_193 = arith.constant 5.000000e-01 : f32
    %360 = vector.broadcast %cst_193 : f32 to vector<8x128xf32>
    %361 = arith.mulf %360, %359 : vector<8x128xf32>
    %362 = math.tanh %361 : vector<8x128xf32>
    %cst_194 = arith.constant 1.000000e+00 : f32
    %363 = vector.broadcast %cst_194 : f32 to vector<8x128xf32>
    %364 = arith.addf %362, %363 : vector<8x128xf32>
    %cst_195 = arith.constant 5.000000e-01 : f32
    %365 = vector.broadcast %cst_195 : f32 to vector<8x128xf32>
    %366 = arith.mulf %365, %364 : vector<8x128xf32>
    %367 = vector.extract_strided_slice %350 {offsets = [0, 256], sizes = [8, 128], strides = [1, 1]} : vector<8x512xf32> to vector<8x128xf32>
    %368 = math.tanh %367 : vector<8x128xf32>
    %369 = vector.extract_strided_slice %350 {offsets = [0, 384], sizes = [8, 128], strides = [1, 1]} : vector<8x512xf32> to vector<8x128xf32>
    %cst_196 = arith.constant 5.000000e-01 : f32
    %370 = vector.broadcast %cst_196 : f32 to vector<8x128xf32>
    %371 = arith.mulf %370, %369 : vector<8x128xf32>
    %372 = math.tanh %371 : vector<8x128xf32>
    %cst_197 = arith.constant 1.000000e+00 : f32
    %373 = vector.broadcast %cst_197 : f32 to vector<8x128xf32>
    %374 = arith.addf %372, %373 : vector<8x128xf32>
    %cst_198 = arith.constant 5.000000e-01 : f32
    %375 = vector.broadcast %cst_198 : f32 to vector<8x128xf32>
    %376 = arith.mulf %375, %374 : vector<8x128xf32>
    %c0_199 = arith.constant 0 : index
    %c0_200 = arith.constant 0 : index
    %377 = vector.load %arg12[%c0_199, %c0_200] : memref<8x128xf32, #tpu.memory_space<vmem>>, vector<8x128xf32>
    %378 = arith.mulf %366, %377 : vector<8x128xf32>
    %379 = arith.mulf %358, %368 : vector<8x128xf32>
    %380 = arith.addf %378, %379 : vector<8x128xf32>
    %381 = math.tanh %380 : vector<8x128xf32>
    %382 = arith.mulf %376, %381 : vector<8x128xf32>
    %c0_201 = arith.constant 0 : index
    %c0_202 = arith.constant 0 : index
    %383 = vector.load %arg12[%c0_201, %c0_202] : memref<8x128xf32, #tpu.memory_space<vmem>>, vector<8x128xf32>
    tpu.vector_store %arg12[%c0_201, %c0_202], %380 {strides = array<i32>} : memref<8x128xf32, #tpu.memory_space<vmem>>, vector<8x128xf32>,
    %c0_203 = arith.constant 0 : index
    %c0_204 = arith.constant 0 : index
    %384 = vector.load %arg11[%c0_203, %c0_204] : memref<8x128xf32, #tpu.memory_space<vmem>>, vector<8x128xf32>
    tpu.vector_store %arg11[%c0_203, %c0_204], %382 {strides = array<i32>} : memref<8x128xf32, #tpu.memory_space<vmem>>, vector<8x128xf32>,
    %385 = arith.truncf %382 : vector<8x128xf32> to vector<8x128xbf16>
    %386 = arith.index_cast %c7_i32 : i32 to index
    %c0_205 = arith.constant 0 : index
    %c0_206 = arith.constant 0 : index
    %387 = vector.load %arg13[%386, %c0_205, %c0_206] : memref<8x8x128xbf16, #tpu.memory_space<vmem>>, vector<1x8x128xbf16>
    %388 = vector.shape_cast %387 : vector<1x8x128xbf16> to vector<8x128xbf16>
    %389 = vector.shape_cast %385 : vector<8x128xbf16> to vector<1x8x128xbf16>
    tpu.vector_store %arg13[%386, %c0_205, %c0_206], %389 {strides = array<i32>} : memref<8x8x128xbf16, #tpu.memory_space<vmem>>, vector<1x8x128xbf16>,
    %c8_i32 = arith.constant 8 : i32
    %c0_207 = arith.constant 0 : index
    %c0_208 = arith.constant 0 : index
    %c0_209 = arith.constant 0 : index
    %390 = vector.load %arg13[%c0_207, %c0_208, %c0_209] : memref<8x8x128xbf16, #tpu.memory_space<vmem>>, vector<8x8x128xbf16>
    %391 = vector.shape_cast %390 : vector<8x8x128xbf16> to vector<64x128xbf16>
    %c0_210 = arith.constant 0 : index
    %c0_211 = arith.constant 0 : index
    %392 = vector.load %arg5[%c0_210, %c0_211] : memref<128x512xbf16, #tpu.memory_space<vmem>>, vector<128x512xbf16>
    %cst_212 = arith.constant dense<0.000000e+00> : vector<64x512xf32>
    %393 = tpu.matmul %391, %392, %cst_212 {dimension_numbers = #tpu.dot_dimension_numbers<[1], [0], [0], [1], [0, 0, 1, 1], [], []>} : vector<64x128xbf16>, vector<128x512xbf16>, vector<64x512xf32> -> vector<64x512xf32>
    %c0_213 = arith.constant 0 : index
    %c0_214 = arith.constant 0 : index
    %394 = vector.load %arg7[%c0_213, %c0_214] : memref<1x512xf32, #tpu.memory_space<vmem>>, vector<1x512xf32>
    %395 = vector.broadcast %394 : vector<1x512xf32> to vector<64x512xf32>
    %396 = arith.addf %393, %395 : vector<64x512xf32>
    %397 = vector.shape_cast %396 : vector<64x512xf32> to vector<8x8x512xf32>
    %c0_215 = arith.constant 0 : index
    %c0_216 = arith.constant 0 : index
    %c0_217 = arith.constant 0 : index
    %398 = vector.load %arg14[%c0_215, %c0_216, %c0_217] : memref<8x8x512xf32, #tpu.memory_space<vmem>>, vector<8x8x512xf32>
    tpu.vector_store %arg14[%c0_215, %c0_216, %c0_217], %397 {strides = array<i32>} : memref<8x8x512xf32, #tpu.memory_space<vmem>>, vector<8x8x512xf32>,
    %cst_218 = arith.constant 0.000000e+00 : f32
    %399 = vector.broadcast %cst_218 : f32 to vector<8x128xf32>
    %c0_219 = arith.constant 0 : index
    %c0_220 = arith.constant 0 : index
    %400 = vector.load %arg11[%c0_219, %c0_220] : memref<8x128xf32, #tpu.memory_space<vmem>>, vector<8x128xf32>
    tpu.vector_store %arg11[%c0_219, %c0_220], %399 {strides = array<i32>} : memref<8x128xf32, #tpu.memory_space<vmem>>, vector<8x128xf32>,
    %cst_221 = arith.constant 0.000000e+00 : f32
    %401 = vector.broadcast %cst_221 : f32 to vector<8x128xf32>
    %c0_222 = arith.constant 0 : index
    %c0_223 = arith.constant 0 : index
    %402 = vector.load %arg12[%c0_222, %c0_223] : memref<8x128xf32, #tpu.memory_space<vmem>>, vector<8x128xf32>
    tpu.vector_store %arg12[%c0_222, %c0_223], %401 {strides = array<i32>} : memref<8x128xf32, #tpu.memory_space<vmem>>, vector<8x128xf32>,
    %c0_i32_224 = arith.constant 0 : i32
    %c0_225 = arith.constant 0 : index
    %c0_226 = arith.constant 0 : index
    %403 = vector.load %arg11[%c0_225, %c0_226] : memref<8x128xf32, #tpu.memory_space<vmem>>, vector<8x128xf32>
    %404 = arith.index_cast %c0_i32_224 : i32 to index
    %c0_227 = arith.constant 0 : index
    %c0_228 = arith.constant 0 : index
    %405 = vector.load %arg14[%404, %c0_227, %c0_228] : memref<8x8x512xf32, #tpu.memory_space<vmem>>, vector<1x8x512xf32>
    %406 = vector.shape_cast %405 : vector<1x8x512xf32> to vector<8x512xf32>
    %407 = arith.truncf %403 : vector<8x128xf32> to vector<8x128xbf16>
    %c0_229 = arith.constant 0 : index
    %c0_230 = arith.constant 0 : index
    %408 = vector.load %arg6[%c0_229, %c0_230] : memref<128x512xbf16, #tpu.memory_space<vmem>>, vector<128x512xbf16>
    %cst_231 = arith.constant dense<0.000000e+00> : vector<8x512xf32>
    %409 = tpu.matmul %407, %408, %cst_231 {dimension_numbers = #tpu.dot_dimension_numbers<[1], [0], [0], [1], [0, 0, 1, 1], [], []>} : vector<8x128xbf16>, vector<128x512xbf16>, vector<8x512xf32> -> vector<8x512xf32>
    %410 = arith.addf %406, %409 : vector<8x512xf32>
    %411 = vector.extract_strided_slice %410 {offsets = [0, 0], sizes = [8, 128], strides = [1, 1]} : vector<8x512xf32> to vector<8x128xf32>
    %cst_232 = arith.constant 5.000000e-01 : f32
    %412 = vector.broadcast %cst_232 : f32 to vector<8x128xf32>
    %413 = arith.mulf %412, %411 : vector<8x128xf32>
    %414 = math.tanh %413 : vector<8x128xf32>
    %cst_233 = arith.constant 1.000000e+00 : f32
    %415 = vector.broadcast %cst_233 : f32 to vector<8x128xf32>
    %416 = arith.addf %414, %415 : vector<8x128xf32>
    %cst_234 = arith.constant 5.000000e-01 : f32
    %417 = vector.broadcast %cst_234 : f32 to vector<8x128xf32>
    %418 = arith.mulf %417, %416 : vector<8x128xf32>
    %419 = vector.extract_strided_slice %410 {offsets = [0, 128], sizes = [8, 128], strides = [1, 1]} : vector<8x512xf32> to vector<8x128xf32>
    %cst_235 = arith.constant 5.000000e-01 : f32
    %420 = vector.broadcast %cst_235 : f32 to vector<8x128xf32>
    %421 = arith.mulf %420, %419 : vector<8x128xf32>
    %422 = math.tanh %421 : vector<8x128xf32>
    %cst_236 = arith.constant 1.000000e+00 : f32
    %423 = vector.broadcast %cst_236 : f32 to vector<8x128xf32>
    %424 = arith.addf %422, %423 : vector<8x128xf32>
    %cst_237 = arith.constant 5.000000e-01 : f32
    %425 = vector.broadcast %cst_237 : f32 to vector<8x128xf32>
    %426 = arith.mulf %425, %424 : vector<8x128xf32>
    %427 = vector.extract_strided_slice %410 {offsets = [0, 256], sizes = [8, 128], strides = [1, 1]} : vector<8x512xf32> to vector<8x128xf32>
    %428 = math.tanh %427 : vector<8x128xf32>
    %429 = vector.extract_strided_slice %410 {offsets = [0, 384], sizes = [8, 128], strides = [1, 1]} : vector<8x512xf32> to vector<8x128xf32>
    %cst_238 = arith.constant 5.000000e-01 : f32
    %430 = vector.broadcast %cst_238 : f32 to vector<8x128xf32>
    %431 = arith.mulf %430, %429 : vector<8x128xf32>
    %432 = math.tanh %431 : vector<8x128xf32>
    %cst_239 = arith.constant 1.000000e+00 : f32
    %433 = vector.broadcast %cst_239 : f32 to vector<8x128xf32>
    %434 = arith.addf %432, %433 : vector<8x128xf32>
    %cst_240 = arith.constant 5.000000e-01 : f32
    %435 = vector.broadcast %cst_240 : f32 to vector<8x128xf32>
    %436 = arith.mulf %435, %434 : vector<8x128xf32>
    %c0_241 = arith.constant 0 : index
    %c0_242 = arith.constant 0 : index
    %437 = vector.load %arg12[%c0_241, %c0_242] : memref<8x128xf32, #tpu.memory_space<vmem>>, vector<8x128xf32>
    %438 = arith.mulf %426, %437 : vector<8x128xf32>
    %439 = arith.mulf %418, %428 : vector<8x128xf32>
    %440 = arith.addf %438, %439 : vector<8x128xf32>
    %441 = math.tanh %440 : vector<8x128xf32>
    %442 = arith.mulf %436, %441 : vector<8x128xf32>
    %c0_243 = arith.constant 0 : index
    %c0_244 = arith.constant 0 : index
    %443 = vector.load %arg12[%c0_243, %c0_244] : memref<8x128xf32, #tpu.memory_space<vmem>>, vector<8x128xf32>
    tpu.vector_store %arg12[%c0_243, %c0_244], %440 {strides = array<i32>} : memref<8x128xf32, #tpu.memory_space<vmem>>, vector<8x128xf32>,
    %c0_245 = arith.constant 0 : index
    %c0_246 = arith.constant 0 : index
    %444 = vector.load %arg11[%c0_245, %c0_246] : memref<8x128xf32, #tpu.memory_space<vmem>>, vector<8x128xf32>
    tpu.vector_store %arg11[%c0_245, %c0_246], %442 {strides = array<i32>} : memref<8x128xf32, #tpu.memory_space<vmem>>, vector<8x128xf32>,
    %c1_i32_247 = arith.constant 1 : i32
    %c0_248 = arith.constant 0 : index
    %c0_249 = arith.constant 0 : index
    %445 = vector.load %arg11[%c0_248, %c0_249] : memref<8x128xf32, #tpu.memory_space<vmem>>, vector<8x128xf32>
    %446 = arith.index_cast %c1_i32_247 : i32 to index
    %c0_250 = arith.constant 0 : index
    %c0_251 = arith.constant 0 : index
    %447 = vector.load %arg14[%446, %c0_250, %c0_251] : memref<8x8x512xf32, #tpu.memory_space<vmem>>, vector<1x8x512xf32>
    %448 = vector.shape_cast %447 : vector<1x8x512xf32> to vector<8x512xf32>
    %449 = arith.truncf %445 : vector<8x128xf32> to vector<8x128xbf16>
    %c0_252 = arith.constant 0 : index
    %c0_253 = arith.constant 0 : index
    %450 = vector.load %arg6[%c0_252, %c0_253] : memref<128x512xbf16, #tpu.memory_space<vmem>>, vector<128x512xbf16>
    %cst_254 = arith.constant dense<0.000000e+00> : vector<8x512xf32>
    %451 = tpu.matmul %449, %450, %cst_254 {dimension_numbers = #tpu.dot_dimension_numbers<[1], [0], [0], [1], [0, 0, 1, 1], [], []>} : vector<8x128xbf16>, vector<128x512xbf16>, vector<8x512xf32> -> vector<8x512xf32>
    %452 = arith.addf %448, %451 : vector<8x512xf32>
    %453 = vector.extract_strided_slice %452 {offsets = [0, 0], sizes = [8, 128], strides = [1, 1]} : vector<8x512xf32> to vector<8x128xf32>
    %cst_255 = arith.constant 5.000000e-01 : f32
    %454 = vector.broadcast %cst_255 : f32 to vector<8x128xf32>
    %455 = arith.mulf %454, %453 : vector<8x128xf32>
    %456 = math.tanh %455 : vector<8x128xf32>
    %cst_256 = arith.constant 1.000000e+00 : f32
    %457 = vector.broadcast %cst_256 : f32 to vector<8x128xf32>
    %458 = arith.addf %456, %457 : vector<8x128xf32>
    %cst_257 = arith.constant 5.000000e-01 : f32
    %459 = vector.broadcast %cst_257 : f32 to vector<8x128xf32>
    %460 = arith.mulf %459, %458 : vector<8x128xf32>
    %461 = vector.extract_strided_slice %452 {offsets = [0, 128], sizes = [8, 128], strides = [1, 1]} : vector<8x512xf32> to vector<8x128xf32>
    %cst_258 = arith.constant 5.000000e-01 : f32
    %462 = vector.broadcast %cst_258 : f32 to vector<8x128xf32>
    %463 = arith.mulf %462, %461 : vector<8x128xf32>
    %464 = math.tanh %463 : vector<8x128xf32>
    %cst_259 = arith.constant 1.000000e+00 : f32
    %465 = vector.broadcast %cst_259 : f32 to vector<8x128xf32>
    %466 = arith.addf %464, %465 : vector<8x128xf32>
    %cst_260 = arith.constant 5.000000e-01 : f32
    %467 = vector.broadcast %cst_260 : f32 to vector<8x128xf32>
    %468 = arith.mulf %467, %466 : vector<8x128xf32>
    %469 = vector.extract_strided_slice %452 {offsets = [0, 256], sizes = [8, 128], strides = [1, 1]} : vector<8x512xf32> to vector<8x128xf32>
    %470 = math.tanh %469 : vector<8x128xf32>
    %471 = vector.extract_strided_slice %452 {offsets = [0, 384], sizes = [8, 128], strides = [1, 1]} : vector<8x512xf32> to vector<8x128xf32>
    %cst_261 = arith.constant 5.000000e-01 : f32
    %472 = vector.broadcast %cst_261 : f32 to vector<8x128xf32>
    %473 = arith.mulf %472, %471 : vector<8x128xf32>
    %474 = math.tanh %473 : vector<8x128xf32>
    %cst_262 = arith.constant 1.000000e+00 : f32
    %475 = vector.broadcast %cst_262 : f32 to vector<8x128xf32>
    %476 = arith.addf %474, %475 : vector<8x128xf32>
    %cst_263 = arith.constant 5.000000e-01 : f32
    %477 = vector.broadcast %cst_263 : f32 to vector<8x128xf32>
    %478 = arith.mulf %477, %476 : vector<8x128xf32>
    %c0_264 = arith.constant 0 : index
    %c0_265 = arith.constant 0 : index
    %479 = vector.load %arg12[%c0_264, %c0_265] : memref<8x128xf32, #tpu.memory_space<vmem>>, vector<8x128xf32>
    %480 = arith.mulf %468, %479 : vector<8x128xf32>
    %481 = arith.mulf %460, %470 : vector<8x128xf32>
    %482 = arith.addf %480, %481 : vector<8x128xf32>
    %483 = math.tanh %482 : vector<8x128xf32>
    %484 = arith.mulf %478, %483 : vector<8x128xf32>
    %c0_266 = arith.constant 0 : index
    %c0_267 = arith.constant 0 : index
    %485 = vector.load %arg12[%c0_266, %c0_267] : memref<8x128xf32, #tpu.memory_space<vmem>>, vector<8x128xf32>
    tpu.vector_store %arg12[%c0_266, %c0_267], %482 {strides = array<i32>} : memref<8x128xf32, #tpu.memory_space<vmem>>, vector<8x128xf32>,
    %c0_268 = arith.constant 0 : index
    %c0_269 = arith.constant 0 : index
    %486 = vector.load %arg11[%c0_268, %c0_269] : memref<8x128xf32, #tpu.memory_space<vmem>>, vector<8x128xf32>
    tpu.vector_store %arg11[%c0_268, %c0_269], %484 {strides = array<i32>} : memref<8x128xf32, #tpu.memory_space<vmem>>, vector<8x128xf32>,
    %c2_i32_270 = arith.constant 2 : i32
    %c0_271 = arith.constant 0 : index
    %c0_272 = arith.constant 0 : index
    %487 = vector.load %arg11[%c0_271, %c0_272] : memref<8x128xf32, #tpu.memory_space<vmem>>, vector<8x128xf32>
    %488 = arith.index_cast %c2_i32_270 : i32 to index
    %c0_273 = arith.constant 0 : index
    %c0_274 = arith.constant 0 : index
    %489 = vector.load %arg14[%488, %c0_273, %c0_274] : memref<8x8x512xf32, #tpu.memory_space<vmem>>, vector<1x8x512xf32>
    %490 = vector.shape_cast %489 : vector<1x8x512xf32> to vector<8x512xf32>
    %491 = arith.truncf %487 : vector<8x128xf32> to vector<8x128xbf16>
    %c0_275 = arith.constant 0 : index
    %c0_276 = arith.constant 0 : index
    %492 = vector.load %arg6[%c0_275, %c0_276] : memref<128x512xbf16, #tpu.memory_space<vmem>>, vector<128x512xbf16>
    %cst_277 = arith.constant dense<0.000000e+00> : vector<8x512xf32>
    %493 = tpu.matmul %491, %492, %cst_277 {dimension_numbers = #tpu.dot_dimension_numbers<[1], [0], [0], [1], [0, 0, 1, 1], [], []>} : vector<8x128xbf16>, vector<128x512xbf16>, vector<8x512xf32> -> vector<8x512xf32>
    %494 = arith.addf %490, %493 : vector<8x512xf32>
    %495 = vector.extract_strided_slice %494 {offsets = [0, 0], sizes = [8, 128], strides = [1, 1]} : vector<8x512xf32> to vector<8x128xf32>
    %cst_278 = arith.constant 5.000000e-01 : f32
    %496 = vector.broadcast %cst_278 : f32 to vector<8x128xf32>
    %497 = arith.mulf %496, %495 : vector<8x128xf32>
    %498 = math.tanh %497 : vector<8x128xf32>
    %cst_279 = arith.constant 1.000000e+00 : f32
    %499 = vector.broadcast %cst_279 : f32 to vector<8x128xf32>
    %500 = arith.addf %498, %499 : vector<8x128xf32>
    %cst_280 = arith.constant 5.000000e-01 : f32
    %501 = vector.broadcast %cst_280 : f32 to vector<8x128xf32>
    %502 = arith.mulf %501, %500 : vector<8x128xf32>
    %503 = vector.extract_strided_slice %494 {offsets = [0, 128], sizes = [8, 128], strides = [1, 1]} : vector<8x512xf32> to vector<8x128xf32>
    %cst_281 = arith.constant 5.000000e-01 : f32
    %504 = vector.broadcast %cst_281 : f32 to vector<8x128xf32>
    %505 = arith.mulf %504, %503 : vector<8x128xf32>
    %506 = math.tanh %505 : vector<8x128xf32>
    %cst_282 = arith.constant 1.000000e+00 : f32
    %507 = vector.broadcast %cst_282 : f32 to vector<8x128xf32>
    %508 = arith.addf %506, %507 : vector<8x128xf32>
    %cst_283 = arith.constant 5.000000e-01 : f32
    %509 = vector.broadcast %cst_283 : f32 to vector<8x128xf32>
    %510 = arith.mulf %509, %508 : vector<8x128xf32>
    %511 = vector.extract_strided_slice %494 {offsets = [0, 256], sizes = [8, 128], strides = [1, 1]} : vector<8x512xf32> to vector<8x128xf32>
    %512 = math.tanh %511 : vector<8x128xf32>
    %513 = vector.extract_strided_slice %494 {offsets = [0, 384], sizes = [8, 128], strides = [1, 1]} : vector<8x512xf32> to vector<8x128xf32>
    %cst_284 = arith.constant 5.000000e-01 : f32
    %514 = vector.broadcast %cst_284 : f32 to vector<8x128xf32>
    %515 = arith.mulf %514, %513 : vector<8x128xf32>
    %516 = math.tanh %515 : vector<8x128xf32>
    %cst_285 = arith.constant 1.000000e+00 : f32
    %517 = vector.broadcast %cst_285 : f32 to vector<8x128xf32>
    %518 = arith.addf %516, %517 : vector<8x128xf32>
    %cst_286 = arith.constant 5.000000e-01 : f32
    %519 = vector.broadcast %cst_286 : f32 to vector<8x128xf32>
    %520 = arith.mulf %519, %518 : vector<8x128xf32>
    %c0_287 = arith.constant 0 : index
    %c0_288 = arith.constant 0 : index
    %521 = vector.load %arg12[%c0_287, %c0_288] : memref<8x128xf32, #tpu.memory_space<vmem>>, vector<8x128xf32>
    %522 = arith.mulf %510, %521 : vector<8x128xf32>
    %523 = arith.mulf %502, %512 : vector<8x128xf32>
    %524 = arith.addf %522, %523 : vector<8x128xf32>
    %525 = math.tanh %524 : vector<8x128xf32>
    %526 = arith.mulf %520, %525 : vector<8x128xf32>
    %c0_289 = arith.constant 0 : index
    %c0_290 = arith.constant 0 : index
    %527 = vector.load %arg12[%c0_289, %c0_290] : memref<8x128xf32, #tpu.memory_space<vmem>>, vector<8x128xf32>
    tpu.vector_store %arg12[%c0_289, %c0_290], %524 {strides = array<i32>} : memref<8x128xf32, #tpu.memory_space<vmem>>, vector<8x128xf32>,
    %c0_291 = arith.constant 0 : index
    %c0_292 = arith.constant 0 : index
    %528 = vector.load %arg11[%c0_291, %c0_292] : memref<8x128xf32, #tpu.memory_space<vmem>>, vector<8x128xf32>
    tpu.vector_store %arg11[%c0_291, %c0_292], %526 {strides = array<i32>} : memref<8x128xf32, #tpu.memory_space<vmem>>, vector<8x128xf32>,
    %c3_i32_293 = arith.constant 3 : i32
    %c0_294 = arith.constant 0 : index
    %c0_295 = arith.constant 0 : index
    %529 = vector.load %arg11[%c0_294, %c0_295] : memref<8x128xf32, #tpu.memory_space<vmem>>, vector<8x128xf32>
    %530 = arith.index_cast %c3_i32_293 : i32 to index
    %c0_296 = arith.constant 0 : index
    %c0_297 = arith.constant 0 : index
    %531 = vector.load %arg14[%530, %c0_296, %c0_297] : memref<8x8x512xf32, #tpu.memory_space<vmem>>, vector<1x8x512xf32>
    %532 = vector.shape_cast %531 : vector<1x8x512xf32> to vector<8x512xf32>
    %533 = arith.truncf %529 : vector<8x128xf32> to vector<8x128xbf16>
    %c0_298 = arith.constant 0 : index
    %c0_299 = arith.constant 0 : index
    %534 = vector.load %arg6[%c0_298, %c0_299] : memref<128x512xbf16, #tpu.memory_space<vmem>>, vector<128x512xbf16>
    %cst_300 = arith.constant dense<0.000000e+00> : vector<8x512xf32>
    %535 = tpu.matmul %533, %534, %cst_300 {dimension_numbers = #tpu.dot_dimension_numbers<[1], [0], [0], [1], [0, 0, 1, 1], [], []>} : vector<8x128xbf16>, vector<128x512xbf16>, vector<8x512xf32> -> vector<8x512xf32>
    %536 = arith.addf %532, %535 : vector<8x512xf32>
    %537 = vector.extract_strided_slice %536 {offsets = [0, 0], sizes = [8, 128], strides = [1, 1]} : vector<8x512xf32> to vector<8x128xf32>
    %cst_301 = arith.constant 5.000000e-01 : f32
    %538 = vector.broadcast %cst_301 : f32 to vector<8x128xf32>
    %539 = arith.mulf %538, %537 : vector<8x128xf32>
    %540 = math.tanh %539 : vector<8x128xf32>
    %cst_302 = arith.constant 1.000000e+00 : f32
    %541 = vector.broadcast %cst_302 : f32 to vector<8x128xf32>
    %542 = arith.addf %540, %541 : vector<8x128xf32>
    %cst_303 = arith.constant 5.000000e-01 : f32
    %543 = vector.broadcast %cst_303 : f32 to vector<8x128xf32>
    %544 = arith.mulf %543, %542 : vector<8x128xf32>
    %545 = vector.extract_strided_slice %536 {offsets = [0, 128], sizes = [8, 128], strides = [1, 1]} : vector<8x512xf32> to vector<8x128xf32>
    %cst_304 = arith.constant 5.000000e-01 : f32
    %546 = vector.broadcast %cst_304 : f32 to vector<8x128xf32>
    %547 = arith.mulf %546, %545 : vector<8x128xf32>
    %548 = math.tanh %547 : vector<8x128xf32>
    %cst_305 = arith.constant 1.000000e+00 : f32
    %549 = vector.broadcast %cst_305 : f32 to vector<8x128xf32>
    %550 = arith.addf %548, %549 : vector<8x128xf32>
    %cst_306 = arith.constant 5.000000e-01 : f32
    %551 = vector.broadcast %cst_306 : f32 to vector<8x128xf32>
    %552 = arith.mulf %551, %550 : vector<8x128xf32>
    %553 = vector.extract_strided_slice %536 {offsets = [0, 256], sizes = [8, 128], strides = [1, 1]} : vector<8x512xf32> to vector<8x128xf32>
    %554 = math.tanh %553 : vector<8x128xf32>
    %555 = vector.extract_strided_slice %536 {offsets = [0, 384], sizes = [8, 128], strides = [1, 1]} : vector<8x512xf32> to vector<8x128xf32>
    %cst_307 = arith.constant 5.000000e-01 : f32
    %556 = vector.broadcast %cst_307 : f32 to vector<8x128xf32>
    %557 = arith.mulf %556, %555 : vector<8x128xf32>
    %558 = math.tanh %557 : vector<8x128xf32>
    %cst_308 = arith.constant 1.000000e+00 : f32
    %559 = vector.broadcast %cst_308 : f32 to vector<8x128xf32>
    %560 = arith.addf %558, %559 : vector<8x128xf32>
    %cst_309 = arith.constant 5.000000e-01 : f32
    %561 = vector.broadcast %cst_309 : f32 to vector<8x128xf32>
    %562 = arith.mulf %561, %560 : vector<8x128xf32>
    %c0_310 = arith.constant 0 : index
    %c0_311 = arith.constant 0 : index
    %563 = vector.load %arg12[%c0_310, %c0_311] : memref<8x128xf32, #tpu.memory_space<vmem>>, vector<8x128xf32>
    %564 = arith.mulf %552, %563 : vector<8x128xf32>
    %565 = arith.mulf %544, %554 : vector<8x128xf32>
    %566 = arith.addf %564, %565 : vector<8x128xf32>
    %567 = math.tanh %566 : vector<8x128xf32>
    %568 = arith.mulf %562, %567 : vector<8x128xf32>
    %c0_312 = arith.constant 0 : index
    %c0_313 = arith.constant 0 : index
    %569 = vector.load %arg12[%c0_312, %c0_313] : memref<8x128xf32, #tpu.memory_space<vmem>>, vector<8x128xf32>
    tpu.vector_store %arg12[%c0_312, %c0_313], %566 {strides = array<i32>} : memref<8x128xf32, #tpu.memory_space<vmem>>, vector<8x128xf32>,
    %c0_314 = arith.constant 0 : index
    %c0_315 = arith.constant 0 : index
    %570 = vector.load %arg11[%c0_314, %c0_315] : memref<8x128xf32, #tpu.memory_space<vmem>>, vector<8x128xf32>
    tpu.vector_store %arg11[%c0_314, %c0_315], %568 {strides = array<i32>} : memref<8x128xf32, #tpu.memory_space<vmem>>, vector<8x128xf32>,
    %c4_i32_316 = arith.constant 4 : i32
    %c0_317 = arith.constant 0 : index
    %c0_318 = arith.constant 0 : index
    %571 = vector.load %arg11[%c0_317, %c0_318] : memref<8x128xf32, #tpu.memory_space<vmem>>, vector<8x128xf32>
    %572 = arith.index_cast %c4_i32_316 : i32 to index
    %c0_319 = arith.constant 0 : index
    %c0_320 = arith.constant 0 : index
    %573 = vector.load %arg14[%572, %c0_319, %c0_320] : memref<8x8x512xf32, #tpu.memory_space<vmem>>, vector<1x8x512xf32>
    %574 = vector.shape_cast %573 : vector<1x8x512xf32> to vector<8x512xf32>
    %575 = arith.truncf %571 : vector<8x128xf32> to vector<8x128xbf16>
    %c0_321 = arith.constant 0 : index
    %c0_322 = arith.constant 0 : index
    %576 = vector.load %arg6[%c0_321, %c0_322] : memref<128x512xbf16, #tpu.memory_space<vmem>>, vector<128x512xbf16>
    %cst_323 = arith.constant dense<0.000000e+00> : vector<8x512xf32>
    %577 = tpu.matmul %575, %576, %cst_323 {dimension_numbers = #tpu.dot_dimension_numbers<[1], [0], [0], [1], [0, 0, 1, 1], [], []>} : vector<8x128xbf16>, vector<128x512xbf16>, vector<8x512xf32> -> vector<8x512xf32>
    %578 = arith.addf %574, %577 : vector<8x512xf32>
    %579 = vector.extract_strided_slice %578 {offsets = [0, 0], sizes = [8, 128], strides = [1, 1]} : vector<8x512xf32> to vector<8x128xf32>
    %cst_324 = arith.constant 5.000000e-01 : f32
    %580 = vector.broadcast %cst_324 : f32 to vector<8x128xf32>
    %581 = arith.mulf %580, %579 : vector<8x128xf32>
    %582 = math.tanh %581 : vector<8x128xf32>
    %cst_325 = arith.constant 1.000000e+00 : f32
    %583 = vector.broadcast %cst_325 : f32 to vector<8x128xf32>
    %584 = arith.addf %582, %583 : vector<8x128xf32>
    %cst_326 = arith.constant 5.000000e-01 : f32
    %585 = vector.broadcast %cst_326 : f32 to vector<8x128xf32>
    %586 = arith.mulf %585, %584 : vector<8x128xf32>
    %587 = vector.extract_strided_slice %578 {offsets = [0, 128], sizes = [8, 128], strides = [1, 1]} : vector<8x512xf32> to vector<8x128xf32>
    %cst_327 = arith.constant 5.000000e-01 : f32
    %588 = vector.broadcast %cst_327 : f32 to vector<8x128xf32>
    %589 = arith.mulf %588, %587 : vector<8x128xf32>
    %590 = math.tanh %589 : vector<8x128xf32>
    %cst_328 = arith.constant 1.000000e+00 : f32
    %591 = vector.broadcast %cst_328 : f32 to vector<8x128xf32>
    %592 = arith.addf %590, %591 : vector<8x128xf32>
    %cst_329 = arith.constant 5.000000e-01 : f32
    %593 = vector.broadcast %cst_329 : f32 to vector<8x128xf32>
    %594 = arith.mulf %593, %592 : vector<8x128xf32>
    %595 = vector.extract_strided_slice %578 {offsets = [0, 256], sizes = [8, 128], strides = [1, 1]} : vector<8x512xf32> to vector<8x128xf32>
    %596 = math.tanh %595 : vector<8x128xf32>
    %597 = vector.extract_strided_slice %578 {offsets = [0, 384], sizes = [8, 128], strides = [1, 1]} : vector<8x512xf32> to vector<8x128xf32>
    %cst_330 = arith.constant 5.000000e-01 : f32
    %598 = vector.broadcast %cst_330 : f32 to vector<8x128xf32>
    %599 = arith.mulf %598, %597 : vector<8x128xf32>
    %600 = math.tanh %599 : vector<8x128xf32>
    %cst_331 = arith.constant 1.000000e+00 : f32
    %601 = vector.broadcast %cst_331 : f32 to vector<8x128xf32>
    %602 = arith.addf %600, %601 : vector<8x128xf32>
    %cst_332 = arith.constant 5.000000e-01 : f32
    %603 = vector.broadcast %cst_332 : f32 to vector<8x128xf32>
    %604 = arith.mulf %603, %602 : vector<8x128xf32>
    %c0_333 = arith.constant 0 : index
    %c0_334 = arith.constant 0 : index
    %605 = vector.load %arg12[%c0_333, %c0_334] : memref<8x128xf32, #tpu.memory_space<vmem>>, vector<8x128xf32>
    %606 = arith.mulf %594, %605 : vector<8x128xf32>
    %607 = arith.mulf %586, %596 : vector<8x128xf32>
    %608 = arith.addf %606, %607 : vector<8x128xf32>
    %609 = math.tanh %608 : vector<8x128xf32>
    %610 = arith.mulf %604, %609 : vector<8x128xf32>
    %c0_335 = arith.constant 0 : index
    %c0_336 = arith.constant 0 : index
    %611 = vector.load %arg12[%c0_335, %c0_336] : memref<8x128xf32, #tpu.memory_space<vmem>>, vector<8x128xf32>
    tpu.vector_store %arg12[%c0_335, %c0_336], %608 {strides = array<i32>} : memref<8x128xf32, #tpu.memory_space<vmem>>, vector<8x128xf32>,
    %c0_337 = arith.constant 0 : index
    %c0_338 = arith.constant 0 : index
    %612 = vector.load %arg11[%c0_337, %c0_338] : memref<8x128xf32, #tpu.memory_space<vmem>>, vector<8x128xf32>
    tpu.vector_store %arg11[%c0_337, %c0_338], %610 {strides = array<i32>} : memref<8x128xf32, #tpu.memory_space<vmem>>, vector<8x128xf32>,
    %c5_i32_339 = arith.constant 5 : i32
    %c0_340 = arith.constant 0 : index
    %c0_341 = arith.constant 0 : index
    %613 = vector.load %arg11[%c0_340, %c0_341] : memref<8x128xf32, #tpu.memory_space<vmem>>, vector<8x128xf32>
    %614 = arith.index_cast %c5_i32_339 : i32 to index
    %c0_342 = arith.constant 0 : index
    %c0_343 = arith.constant 0 : index
    %615 = vector.load %arg14[%614, %c0_342, %c0_343] : memref<8x8x512xf32, #tpu.memory_space<vmem>>, vector<1x8x512xf32>
    %616 = vector.shape_cast %615 : vector<1x8x512xf32> to vector<8x512xf32>
    %617 = arith.truncf %613 : vector<8x128xf32> to vector<8x128xbf16>
    %c0_344 = arith.constant 0 : index
    %c0_345 = arith.constant 0 : index
    %618 = vector.load %arg6[%c0_344, %c0_345] : memref<128x512xbf16, #tpu.memory_space<vmem>>, vector<128x512xbf16>
    %cst_346 = arith.constant dense<0.000000e+00> : vector<8x512xf32>
    %619 = tpu.matmul %617, %618, %cst_346 {dimension_numbers = #tpu.dot_dimension_numbers<[1], [0], [0], [1], [0, 0, 1, 1], [], []>} : vector<8x128xbf16>, vector<128x512xbf16>, vector<8x512xf32> -> vector<8x512xf32>
    %620 = arith.addf %616, %619 : vector<8x512xf32>
    %621 = vector.extract_strided_slice %620 {offsets = [0, 0], sizes = [8, 128], strides = [1, 1]} : vector<8x512xf32> to vector<8x128xf32>
    %cst_347 = arith.constant 5.000000e-01 : f32
    %622 = vector.broadcast %cst_347 : f32 to vector<8x128xf32>
    %623 = arith.mulf %622, %621 : vector<8x128xf32>
    %624 = math.tanh %623 : vector<8x128xf32>
    %cst_348 = arith.constant 1.000000e+00 : f32
    %625 = vector.broadcast %cst_348 : f32 to vector<8x128xf32>
    %626 = arith.addf %624, %625 : vector<8x128xf32>
    %cst_349 = arith.constant 5.000000e-01 : f32
    %627 = vector.broadcast %cst_349 : f32 to vector<8x128xf32>
    %628 = arith.mulf %627, %626 : vector<8x128xf32>
    %629 = vector.extract_strided_slice %620 {offsets = [0, 128], sizes = [8, 128], strides = [1, 1]} : vector<8x512xf32> to vector<8x128xf32>
    %cst_350 = arith.constant 5.000000e-01 : f32
    %630 = vector.broadcast %cst_350 : f32 to vector<8x128xf32>
    %631 = arith.mulf %630, %629 : vector<8x128xf32>
    %632 = math.tanh %631 : vector<8x128xf32>
    %cst_351 = arith.constant 1.000000e+00 : f32
    %633 = vector.broadcast %cst_351 : f32 to vector<8x128xf32>
    %634 = arith.addf %632, %633 : vector<8x128xf32>
    %cst_352 = arith.constant 5.000000e-01 : f32
    %635 = vector.broadcast %cst_352 : f32 to vector<8x128xf32>
    %636 = arith.mulf %635, %634 : vector<8x128xf32>
    %637 = vector.extract_strided_slice %620 {offsets = [0, 256], sizes = [8, 128], strides = [1, 1]} : vector<8x512xf32> to vector<8x128xf32>
    %638 = math.tanh %637 : vector<8x128xf32>
    %639 = vector.extract_strided_slice %620 {offsets = [0, 384], sizes = [8, 128], strides = [1, 1]} : vector<8x512xf32> to vector<8x128xf32>
    %cst_353 = arith.constant 5.000000e-01 : f32
    %640 = vector.broadcast %cst_353 : f32 to vector<8x128xf32>
    %641 = arith.mulf %640, %639 : vector<8x128xf32>
    %642 = math.tanh %641 : vector<8x128xf32>
    %cst_354 = arith.constant 1.000000e+00 : f32
    %643 = vector.broadcast %cst_354 : f32 to vector<8x128xf32>
    %644 = arith.addf %642, %643 : vector<8x128xf32>
    %cst_355 = arith.constant 5.000000e-01 : f32
    %645 = vector.broadcast %cst_355 : f32 to vector<8x128xf32>
    %646 = arith.mulf %645, %644 : vector<8x128xf32>
    %c0_356 = arith.constant 0 : index
    %c0_357 = arith.constant 0 : index
    %647 = vector.load %arg12[%c0_356, %c0_357] : memref<8x128xf32, #tpu.memory_space<vmem>>, vector<8x128xf32>
    %648 = arith.mulf %636, %647 : vector<8x128xf32>
    %649 = arith.mulf %628, %638 : vector<8x128xf32>
    %650 = arith.addf %648, %649 : vector<8x128xf32>
    %651 = math.tanh %650 : vector<8x128xf32>
    %652 = arith.mulf %646, %651 : vector<8x128xf32>
    %c0_358 = arith.constant 0 : index
    %c0_359 = arith.constant 0 : index
    %653 = vector.load %arg12[%c0_358, %c0_359] : memref<8x128xf32, #tpu.memory_space<vmem>>, vector<8x128xf32>
    tpu.vector_store %arg12[%c0_358, %c0_359], %650 {strides = array<i32>} : memref<8x128xf32, #tpu.memory_space<vmem>>, vector<8x128xf32>,
    %c0_360 = arith.constant 0 : index
    %c0_361 = arith.constant 0 : index
    %654 = vector.load %arg11[%c0_360, %c0_361] : memref<8x128xf32, #tpu.memory_space<vmem>>, vector<8x128xf32>
    tpu.vector_store %arg11[%c0_360, %c0_361], %652 {strides = array<i32>} : memref<8x128xf32, #tpu.memory_space<vmem>>, vector<8x128xf32>,
    %c6_i32_362 = arith.constant 6 : i32
    %c0_363 = arith.constant 0 : index
    %c0_364 = arith.constant 0 : index
    %655 = vector.load %arg11[%c0_363, %c0_364] : memref<8x128xf32, #tpu.memory_space<vmem>>, vector<8x128xf32>
    %656 = arith.index_cast %c6_i32_362 : i32 to index
    %c0_365 = arith.constant 0 : index
    %c0_366 = arith.constant 0 : index
    %657 = vector.load %arg14[%656, %c0_365, %c0_366] : memref<8x8x512xf32, #tpu.memory_space<vmem>>, vector<1x8x512xf32>
    %658 = vector.shape_cast %657 : vector<1x8x512xf32> to vector<8x512xf32>
    %659 = arith.truncf %655 : vector<8x128xf32> to vector<8x128xbf16>
    %c0_367 = arith.constant 0 : index
    %c0_368 = arith.constant 0 : index
    %660 = vector.load %arg6[%c0_367, %c0_368] : memref<128x512xbf16, #tpu.memory_space<vmem>>, vector<128x512xbf16>
    %cst_369 = arith.constant dense<0.000000e+00> : vector<8x512xf32>
    %661 = tpu.matmul %659, %660, %cst_369 {dimension_numbers = #tpu.dot_dimension_numbers<[1], [0], [0], [1], [0, 0, 1, 1], [], []>} : vector<8x128xbf16>, vector<128x512xbf16>, vector<8x512xf32> -> vector<8x512xf32>
    %662 = arith.addf %658, %661 : vector<8x512xf32>
    %663 = vector.extract_strided_slice %662 {offsets = [0, 0], sizes = [8, 128], strides = [1, 1]} : vector<8x512xf32> to vector<8x128xf32>
    %cst_370 = arith.constant 5.000000e-01 : f32
    %664 = vector.broadcast %cst_370 : f32 to vector<8x128xf32>
    %665 = arith.mulf %664, %663 : vector<8x128xf32>
    %666 = math.tanh %665 : vector<8x128xf32>
    %cst_371 = arith.constant 1.000000e+00 : f32
    %667 = vector.broadcast %cst_371 : f32 to vector<8x128xf32>
    %668 = arith.addf %666, %667 : vector<8x128xf32>
    %cst_372 = arith.constant 5.000000e-01 : f32
    %669 = vector.broadcast %cst_372 : f32 to vector<8x128xf32>
    %670 = arith.mulf %669, %668 : vector<8x128xf32>
    %671 = vector.extract_strided_slice %662 {offsets = [0, 128], sizes = [8, 128], strides = [1, 1]} : vector<8x512xf32> to vector<8x128xf32>
    %cst_373 = arith.constant 5.000000e-01 : f32
    %672 = vector.broadcast %cst_373 : f32 to vector<8x128xf32>
    %673 = arith.mulf %672, %671 : vector<8x128xf32>
    %674 = math.tanh %673 : vector<8x128xf32>
    %cst_374 = arith.constant 1.000000e+00 : f32
    %675 = vector.broadcast %cst_374 : f32 to vector<8x128xf32>
    %676 = arith.addf %674, %675 : vector<8x128xf32>
    %cst_375 = arith.constant 5.000000e-01 : f32
    %677 = vector.broadcast %cst_375 : f32 to vector<8x128xf32>
    %678 = arith.mulf %677, %676 : vector<8x128xf32>
    %679 = vector.extract_strided_slice %662 {offsets = [0, 256], sizes = [8, 128], strides = [1, 1]} : vector<8x512xf32> to vector<8x128xf32>
    %680 = math.tanh %679 : vector<8x128xf32>
    %681 = vector.extract_strided_slice %662 {offsets = [0, 384], sizes = [8, 128], strides = [1, 1]} : vector<8x512xf32> to vector<8x128xf32>
    %cst_376 = arith.constant 5.000000e-01 : f32
    %682 = vector.broadcast %cst_376 : f32 to vector<8x128xf32>
    %683 = arith.mulf %682, %681 : vector<8x128xf32>
    %684 = math.tanh %683 : vector<8x128xf32>
    %cst_377 = arith.constant 1.000000e+00 : f32
    %685 = vector.broadcast %cst_377 : f32 to vector<8x128xf32>
    %686 = arith.addf %684, %685 : vector<8x128xf32>
    %cst_378 = arith.constant 5.000000e-01 : f32
    %687 = vector.broadcast %cst_378 : f32 to vector<8x128xf32>
    %688 = arith.mulf %687, %686 : vector<8x128xf32>
    %c0_379 = arith.constant 0 : index
    %c0_380 = arith.constant 0 : index
    %689 = vector.load %arg12[%c0_379, %c0_380] : memref<8x128xf32, #tpu.memory_space<vmem>>, vector<8x128xf32>
    %690 = arith.mulf %678, %689 : vector<8x128xf32>
    %691 = arith.mulf %670, %680 : vector<8x128xf32>
    %692 = arith.addf %690, %691 : vector<8x128xf32>
    %693 = math.tanh %692 : vector<8x128xf32>
    %694 = arith.mulf %688, %693 : vector<8x128xf32>
    %c0_381 = arith.constant 0 : index
    %c0_382 = arith.constant 0 : index
    %695 = vector.load %arg12[%c0_381, %c0_382] : memref<8x128xf32, #tpu.memory_space<vmem>>, vector<8x128xf32>
    tpu.vector_store %arg12[%c0_381, %c0_382], %692 {strides = array<i32>} : memref<8x128xf32, #tpu.memory_space<vmem>>, vector<8x128xf32>,
    %c0_383 = arith.constant 0 : index
    %c0_384 = arith.constant 0 : index
    %696 = vector.load %arg11[%c0_383, %c0_384] : memref<8x128xf32, #tpu.memory_space<vmem>>, vector<8x128xf32>
    tpu.vector_store %arg11[%c0_383, %c0_384], %694 {strides = array<i32>} : memref<8x128xf32, #tpu.memory_space<vmem>>, vector<8x128xf32>,
    %c7_i32_385 = arith.constant 7 : i32
    %c0_386 = arith.constant 0 : index
    %c0_387 = arith.constant 0 : index
    %697 = vector.load %arg11[%c0_386, %c0_387] : memref<8x128xf32, #tpu.memory_space<vmem>>, vector<8x128xf32>
    %698 = arith.index_cast %c7_i32_385 : i32 to index
    %c0_388 = arith.constant 0 : index
    %c0_389 = arith.constant 0 : index
    %699 = vector.load %arg14[%698, %c0_388, %c0_389] : memref<8x8x512xf32, #tpu.memory_space<vmem>>, vector<1x8x512xf32>
    %700 = vector.shape_cast %699 : vector<1x8x512xf32> to vector<8x512xf32>
    %701 = arith.truncf %697 : vector<8x128xf32> to vector<8x128xbf16>
    %c0_390 = arith.constant 0 : index
    %c0_391 = arith.constant 0 : index
    %702 = vector.load %arg6[%c0_390, %c0_391] : memref<128x512xbf16, #tpu.memory_space<vmem>>, vector<128x512xbf16>
    %cst_392 = arith.constant dense<0.000000e+00> : vector<8x512xf32>
    %703 = tpu.matmul %701, %702, %cst_392 {dimension_numbers = #tpu.dot_dimension_numbers<[1], [0], [0], [1], [0, 0, 1, 1], [], []>} : vector<8x128xbf16>, vector<128x512xbf16>, vector<8x512xf32> -> vector<8x512xf32>
    %704 = arith.addf %700, %703 : vector<8x512xf32>
    %705 = vector.extract_strided_slice %704 {offsets = [0, 0], sizes = [8, 128], strides = [1, 1]} : vector<8x512xf32> to vector<8x128xf32>
    %cst_393 = arith.constant 5.000000e-01 : f32
    %706 = vector.broadcast %cst_393 : f32 to vector<8x128xf32>
    %707 = arith.mulf %706, %705 : vector<8x128xf32>
    %708 = math.tanh %707 : vector<8x128xf32>
    %cst_394 = arith.constant 1.000000e+00 : f32
    %709 = vector.broadcast %cst_394 : f32 to vector<8x128xf32>
    %710 = arith.addf %708, %709 : vector<8x128xf32>
    %cst_395 = arith.constant 5.000000e-01 : f32
    %711 = vector.broadcast %cst_395 : f32 to vector<8x128xf32>
    %712 = arith.mulf %711, %710 : vector<8x128xf32>
    %713 = vector.extract_strided_slice %704 {offsets = [0, 128], sizes = [8, 128], strides = [1, 1]} : vector<8x512xf32> to vector<8x128xf32>
    %cst_396 = arith.constant 5.000000e-01 : f32
    %714 = vector.broadcast %cst_396 : f32 to vector<8x128xf32>
    %715 = arith.mulf %714, %713 : vector<8x128xf32>
    %716 = math.tanh %715 : vector<8x128xf32>
    %cst_397 = arith.constant 1.000000e+00 : f32
    %717 = vector.broadcast %cst_397 : f32 to vector<8x128xf32>
    %718 = arith.addf %716, %717 : vector<8x128xf32>
    %cst_398 = arith.constant 5.000000e-01 : f32
    %719 = vector.broadcast %cst_398 : f32 to vector<8x128xf32>
    %720 = arith.mulf %719, %718 : vector<8x128xf32>
    %721 = vector.extract_strided_slice %704 {offsets = [0, 256], sizes = [8, 128], strides = [1, 1]} : vector<8x512xf32> to vector<8x128xf32>
    %722 = math.tanh %721 : vector<8x128xf32>
    %723 = vector.extract_strided_slice %704 {offsets = [0, 384], sizes = [8, 128], strides = [1, 1]} : vector<8x512xf32> to vector<8x128xf32>
    %cst_399 = arith.constant 5.000000e-01 : f32
    %724 = vector.broadcast %cst_399 : f32 to vector<8x128xf32>
    %725 = arith.mulf %724, %723 : vector<8x128xf32>
    %726 = math.tanh %725 : vector<8x128xf32>
    %cst_400 = arith.constant 1.000000e+00 : f32
    %727 = vector.broadcast %cst_400 : f32 to vector<8x128xf32>
    %728 = arith.addf %726, %727 : vector<8x128xf32>
    %cst_401 = arith.constant 5.000000e-01 : f32
    %729 = vector.broadcast %cst_401 : f32 to vector<8x128xf32>
    %730 = arith.mulf %729, %728 : vector<8x128xf32>
    %c0_402 = arith.constant 0 : index
    %c0_403 = arith.constant 0 : index
    %731 = vector.load %arg12[%c0_402, %c0_403] : memref<8x128xf32, #tpu.memory_space<vmem>>, vector<8x128xf32>
    %732 = arith.mulf %720, %731 : vector<8x128xf32>
    %733 = arith.mulf %712, %722 : vector<8x128xf32>
    %734 = arith.addf %732, %733 : vector<8x128xf32>
    %735 = math.tanh %734 : vector<8x128xf32>
    %736 = arith.mulf %730, %735 : vector<8x128xf32>
    %c0_404 = arith.constant 0 : index
    %c0_405 = arith.constant 0 : index
    %737 = vector.load %arg12[%c0_404, %c0_405] : memref<8x128xf32, #tpu.memory_space<vmem>>, vector<8x128xf32>
    tpu.vector_store %arg12[%c0_404, %c0_405], %734 {strides = array<i32>} : memref<8x128xf32, #tpu.memory_space<vmem>>, vector<8x128xf32>,
    %c0_406 = arith.constant 0 : index
    %c0_407 = arith.constant 0 : index
    %738 = vector.load %arg11[%c0_406, %c0_407] : memref<8x128xf32, #tpu.memory_space<vmem>>, vector<8x128xf32>
    tpu.vector_store %arg11[%c0_406, %c0_407], %736 {strides = array<i32>} : memref<8x128xf32, #tpu.memory_space<vmem>>, vector<8x128xf32>,
    %c8_i32_408 = arith.constant 8 : i32
    %c0_409 = arith.constant 0 : index
    %c0_410 = arith.constant 0 : index
    %739 = vector.load %arg11[%c0_409, %c0_410] : memref<8x128xf32, #tpu.memory_space<vmem>>, vector<8x128xf32>
    %740 = arith.truncf %739 : vector<8x128xf32> to vector<8x128xbf16>
    %c0_411 = arith.constant 0 : index
    %c0_412 = arith.constant 0 : index
    %741 = vector.load %arg8[%c0_411, %c0_412] : memref<128x128xbf16, #tpu.memory_space<vmem>>, vector<128x128xbf16>
    %cst_413 = arith.constant dense<0.000000e+00> : vector<8x128xf32>
    %742 = tpu.matmul %740, %741, %cst_413 {dimension_numbers = #tpu.dot_dimension_numbers<[1], [0], [0], [1], [0, 0, 1, 1], [], []>} : vector<8x128xbf16>, vector<128x128xbf16>, vector<8x128xf32> -> vector<8x128xf32>
    %c0_414 = arith.constant 0 : index
    %c0_415 = arith.constant 0 : index
    %743 = vector.load %arg9[%c0_414, %c0_415] : memref<1x128xf32, #tpu.memory_space<vmem>>, vector<1x128xf32>
    %744 = vector.broadcast %743 : vector<1x128xf32> to vector<8x128xf32>
    %745 = arith.addf %742, %744 : vector<8x128xf32>
    %c0_416 = arith.constant 0 : index
    %c0_417 = arith.constant 0 : index
    %746 = vector.load %arg10[%c0_416, %c0_417] : memref<8x128xf32, #tpu.memory_space<vmem>>, vector<8x128xf32>
    tpu.vector_store %arg10[%c0_416, %c0_417], %745 {strides = array<i32>} : memref<8x128xf32, #tpu.memory_space<vmem>>, vector<8x128xf32>,
    return
  }
  func.func @transform_0(%arg0: i32) -> (i32, i32, i32) {
    %c0_i32 = arith.constant 0 : i32
    %c0_i32_0 = arith.constant 0 : i32
    %c0_i32_1 = arith.constant 0 : i32
    return %c0_i32, %arg0, %c0_i32_0 : i32, i32, i32
  }
  func.func @transform_1(%arg0: i32) -> (i32, i32) {
    %c0_i32 = arith.constant 0 : i32
    %c0_i32_0 = arith.constant 0 : i32
    %c0_i32_1 = arith.constant 0 : i32
    return %c0_i32, %c0_i32_0 : i32, i32
  }
  func.func @transform_2(%arg0: i32) -> (i32, i32) {
    %c0_i32 = arith.constant 0 : i32
    %c0_i32_0 = arith.constant 0 : i32
    %c0_i32_1 = arith.constant 0 : i32
    return %c0_i32, %c0_i32_0 : i32, i32
  }
  func.func @transform_3(%arg0: i32) -> (i32, i32) {
    %c0_i32 = arith.constant 0 : i32
    %c0_i32_0 = arith.constant 0 : i32
    %c0_i32_1 = arith.constant 0 : i32
    return %c0_i32, %c0_i32_0 : i32, i32
  }
  func.func @transform_4(%arg0: i32) -> (i32, i32) {
    %c0_i32 = arith.constant 0 : i32
    %c0_i32_0 = arith.constant 0 : i32
    %c0_i32_1 = arith.constant 0 : i32
    return %c0_i32, %c0_i32_0 : i32, i32
  }
  func.func @transform_5(%arg0: i32) -> (i32, i32) {
    %c0_i32 = arith.constant 0 : i32
    %c0_i32_0 = arith.constant 0 : i32
    %c0_i32_1 = arith.constant 0 : i32
    return %c0_i32, %c0_i32_0 : i32, i32
  }
  func.func @transform_6(%arg0: i32) -> (i32, i32) {
    %c0_i32 = arith.constant 0 : i32
    %c0_i32_0 = arith.constant 0 : i32
    %c0_i32_1 = arith.constant 0 : i32
    return %c0_i32, %c0_i32_0 : i32, i32
  }
  func.func @transform_7(%arg0: i32) -> (i32, i32) {
    %c0_i32 = arith.constant 0 : i32
    %c0_i32_0 = arith.constant 0 : i32
    %c0_i32_1 = arith.constant 0 : i32
    return %c0_i32, %c0_i32_0 : i32, i32
  }
  func.func @transform_8(%arg0: i32) -> (i32, i32) {
    %c0_i32 = arith.constant 0 : i32
    %c0_i32_0 = arith.constant 0 : i32
    %c0_i32_1 = arith.constant 0 : i32
    return %c0_i32, %c0_i32_0 : i32, i32
  }
  func.func @transform_9(%arg0: i32) -> (i32, i32) {
    %c0_i32 = arith.constant 0 : i32
    %c0_i32_0 = arith.constant 0 : i32
    return %arg0, %c0_i32 : i32, i32
  }
}

</mosaic_0001>

<llo_original>
// kernel: tpu_custom_call.1
$region0: #{tpu_custom_call.1}
  #allocation0 [shape = 'u32[]', space=smem, size = 0x4, offset = 0x4, fixed_abs, tag = 'smem constant byte address 0x4 - core index']
  #allocation1 [shape = 'u32[72,128]{1,0:T(1,128)}', space=vmem, size = 0x9000, scoped, tag = 'internal scratch']
  #allocation2 [shape = 'f32[8,128]{1,0:T(8,128)}', space=vmem, size = 0x1000, scoped, tag = 'scratch operand']
  #allocation3 [shape = 'f32[8,128]{1,0:T(8,128)}', space=vmem, size = 0x1000, scoped, tag = 'scratch operand']
  #allocation4 [shape = 'bf16[8,8,128]{2,1,0:T(8,128)(2,1)}', space=vmem, size = 0x4000, scoped, tag = 'scratch operand']
  #allocation5 [shape = 'f32[8,8,512]{2,1,0:T(8,128)}', space=vmem, size = 0x20000, scoped, tag = 'scratch operand']
  %s0 = inlined_call_operand.vmem [shape: f32[8,8,4], index: 0, kind: input, shape index: {}]
  %s1 = inlined_call_operand.vmem [shape: bf16[4,512], index: 1, kind: input, shape index: {}]
  %s2 = inlined_call_operand.hbm [shape: bf16[128,512], index: 2, kind: input, shape index: {}]
  %s3 = inlined_call_operand.vmem [shape: f32[1,512], index: 3, kind: input, shape index: {}]
  %s4 = inlined_call_operand.hbm [shape: bf16[128,512], index: 4, kind: input, shape index: {}]
  %s5 = inlined_call_operand.hbm [shape: bf16[128,512], index: 5, kind: input, shape index: {}]
  %s6 = inlined_call_operand.vmem [shape: f32[1,512], index: 6, kind: input, shape index: {}]
  %s7 = inlined_call_operand.vmem [shape: bf16[128,128], index: 7, kind: input, shape index: {}]
  %s8 = inlined_call_operand.vmem [shape: f32[1,128], index: 8, kind: input, shape index: {}]
  %s9 = inlined_call_operand.hbm [shape: f32[8,128], index: 9, kind: output, shape index: {}]
  %s10 = sld [smem:[#allocation0]]
  $region58: #{tpu_custom_call.1} parent=0
    _
  %s12 = ssub.s32 1, %s10
  %s13 = scalar_select 0, %s12, %s10
  $region1: #{tpu_custom_call.1} parent=0
    #allocation6 [shape = 'u8[131072]{0}', space=vmem, size = 0x20000, scoped, tag = 'input window, operand 2, single buffered']
    #allocation7 [shape = 's32[1]{0}', space=sflag, size = 0x4, scoped, tag = 'scoped memory for tpu_custom_call.1']
    #allocation8 [shape = 's32[1]{0}', space=sflag, size = 0x4, scoped, tag = 'scoped memory for tpu_custom_call.1']
    #allocation9 [shape = 'u8[131072]{0}', space=vmem, size = 0x20000, scoped, tag = 'input window, operand 4, single buffered']
    #allocation10 [shape = 's32[1]{0}', space=sflag, size = 0x4, scoped, tag = 'scoped memory for tpu_custom_call.1']
    #allocation11 [shape = 'u8[131072]{0}', space=vmem, size = 0x20000, scoped, tag = 'input window, operand 5, single buffered']
    #allocation12 [shape = 'u8[4096]{0}', space=vmem, size = 0x1000, scoped, tag = 'output window, operand 0, single buffered']
    %14 = vsyncpa [#allocation7], 0
    %15 = vsyncpa [#allocation10], 0
    %16 = vsyncpa [#allocation8], 0
    // Predicated region
    $region2: #{tpu_custom_call.1} parent=1 // pred_check
      _
    $region3: #{tpu_custom_call.1} parent=1 // pred_check_branch
      %18 = sbr.rel (0) target = $region5
    $region4: #{tpu_custom_call.1} parent=1 // pred_region
      _
    $region5: #{tpu_custom_call.1} parent=1 // pred_fallthru
      _
    // Predicated region
    $region6: #{tpu_custom_call.1} parent=1 // pred_check
      _
    $region7: #{tpu_custom_call.1} parent=1 // pred_check_branch
      %20 = sbr.rel (0) target = $region9
    $region8: #{tpu_custom_call.1} parent=1 // pred_region
      _
    $region9: #{tpu_custom_call.1} parent=1 // pred_fallthru
      _
    // Predicated region
    $region10: #{tpu_custom_call.1} parent=1 // pred_check
      _
    $region11: #{tpu_custom_call.1} parent=1 // pred_check_branch
      %22 = sbr.rel (0) target = $region13
    $region12: #{tpu_custom_call.1} parent=1 // pred_region
      %24 = vsyncadd [#allocation7], 0
      %s25 = sshll.u32 %s2, 4
      %s26 = int_to_ptr.hbm [resolvable:$true] %s25
      %s27 = sshll.u32 [#allocation6], 4
      %s28 = int_to_ptr.vmem [resolvable:$true] %s27
      %33 = dma.hbm_to_vmem [thread:$0]  %s26, 4096, %s28, [#allocation7], 256, 256, 16
    $region13: #{tpu_custom_call.1} parent=1 // pred_fallthru
      _
    // Predicated region
    $region14: #{tpu_custom_call.1} parent=1 // pred_check
      _
    $region15: #{tpu_custom_call.1} parent=1 // pred_check_branch
      %35 = sbr.rel (0) target = $region17
    $region16: #{tpu_custom_call.1} parent=1 // pred_region
      _
    $region17: #{tpu_custom_call.1} parent=1 // pred_fallthru
      _
    // Predicated region
    $region18: #{tpu_custom_call.1} parent=1 // pred_check
      _
    $region19: #{tpu_custom_call.1} parent=1 // pred_check_branch
      %37 = sbr.rel (0) target = $region21
    $region20: #{tpu_custom_call.1} parent=1 // pred_region
      %39 = vsyncadd [#allocation10], 0
      %s40 = sshll.u32 %s4, 4
      %s41 = int_to_ptr.hbm [resolvable:$true] %s40
      %s42 = sshll.u32 [#allocation9], 4
      %s43 = int_to_ptr.vmem [resolvable:$true] %s42
      %48 = dma.hbm_to_vmem [thread:$0]  %s41, 4096, %s43, [#allocation10], 256, 256, 16
    $region21: #{tpu_custom_call.1} parent=1 // pred_fallthru
      _
    // Predicated region
    $region22: #{tpu_custom_call.1} parent=1 // pred_check
      _
    $region23: #{tpu_custom_call.1} parent=1 // pred_check_branch
      %50 = sbr.rel (0) target = $region25
    $region24: #{tpu_custom_call.1} parent=1 // pred_region
      %52 = vsyncadd [#allocation10], 0
      %s53 = sshll.u32 %s5, 4
      %s54 = int_to_ptr.hbm [resolvable:$true] %s53
      %s55 = sshll.u32 [#allocation11], 4
      %s56 = int_to_ptr.vmem [resolvable:$true] %s55
      %61 = dma.hbm_to_vmem [thread:$0]  %s54, 4096, %s56, [#allocation10], 256, 256, 16
    $region25: #{tpu_custom_call.1} parent=1 // pred_fallthru
      _
    // Predicated region
    $region26: #{tpu_custom_call.1} parent=1 // pred_check
      _
    $region27: #{tpu_custom_call.1} parent=1 // pred_check_branch
      %63 = sbr.rel (0) target = $region29
    $region28: #{tpu_custom_call.1} parent=1 // pred_region
      _
    $region29: #{tpu_custom_call.1} parent=1 // pred_fallthru
      _
    // Predicated region
    $region30: #{tpu_custom_call.1} parent=1 // pred_check
      _
    $region31: #{tpu_custom_call.1} parent=1 // pred_check_branch
      %65 = sbr.rel (0) target = $region33
    $region32: #{tpu_custom_call.1} parent=1 // pred_region
      _
    $region33: #{tpu_custom_call.1} parent=1 // pred_fallthru
      _
    // Predicated region
    $region34: #{tpu_custom_call.1} parent=1 // pred_check
      _
    $region35: #{tpu_custom_call.1} parent=1 // pred_check_branch
      %67 = sbr.rel (0) target = $region37
    $region36: #{tpu_custom_call.1} parent=1 // pred_region
      _
    $region37: #{tpu_custom_call.1} parent=1 // pred_fallthru
      _
    // Predicated region
    $region38: #{tpu_custom_call.1} parent=1 // pred_check
      _
    $region39: #{tpu_custom_call.1} parent=1 // pred_check_branch
      %69 = sbr.rel (0) target = $region41
    $region40: #{tpu_custom_call.1} parent=1 // pred_region
      %71 = dma.done [#allocation7], 4096
    $region41: #{tpu_custom_call.1} parent=1 // pred_fallthru
      _
    // Predicated region
    $region42: #{tpu_custom_call.1} parent=1 // pred_check
      _
    $region43: #{tpu_custom_call.1} parent=1 // pred_check_branch
      %73 = sbr.rel (0) target = $region45
    $region44: #{tpu_custom_call.1} parent=1 // pred_region
      %75 = dma.done [#allocation10], 4096
    $region45: #{tpu_custom_call.1} parent=1 // pred_fallthru
      _
    // Predicated region
    $region46: #{tpu_custom_call.1} parent=1 // pred_check
      _
    $region47: #{tpu_custom_call.1} parent=1 // pred_check_branch
      %77 = sbr.rel (0) target = $region49
    $region48: #{tpu_custom_call.1} parent=1 // pred_region
      %79 = dma.done [#allocation10], 4096
    $region49: #{tpu_custom_call.1} parent=1 // pred_fallthru
      _
    %v81 = vld [vmem:[%s0] sm:$0xff]
    %v82 = vld [vmem:[%s0 + $0x8] sm:$0xff]
    %v83 = vld [vmem:[%s0 + $0x10] sm:$0xff]
    %v84 = vld [vmem:[%s0 + $0x18] sm:$0xff]
    %v85 = vld [vmem:[%s0 + $0x20] sm:$0xff]
    %v86 = vld [vmem:[%s0 + $0x28] sm:$0xff]
    %v87 = vld [vmem:[%s0 + $0x30] sm:$0xff]
    %v88 = vld [vmem:[%s0 + $0x38] sm:$0xff]
    %v89 = vpack.c.bf16 %v82, %v81
    %v90 = vpack.c.bf16 %v84, %v83
    %v91 = vpack.c.bf16 %v86, %v85
    %v92 = vpack.c.bf16 %v88, %v87
    %v93 = vld [vmem:[%s1] sm:$0xff]
    %v94 = vld [vmem:[%s3] sm:$0xf]
    %v96 = vperm.slane %v94, 0
    %v97 = vperm.slane %v94, 1
    %v98 = vperm.slane %v94, 2
    %v99 = vperm.slane %v94, 3
    %105 = vst [vmem:[#allocation1] ss:$4 sm:$0xff] %v93
    %v106 = vld.sshfl [vmem:[#allocation1] sm:$0xff pattern:$0x73625140]
    %v107 = vld.sshfl [vmem:[#allocation1 + $0x8] sm:$0xff pattern:$0x73625140]
    %v108 = vld.sshfl [vmem:[#allocation1 + $0x10] sm:$0xff pattern:$0x73625140]
    %v109 = vld.sshfl [vmem:[#allocation1 + $0x18] sm:$0xff pattern:$0x73625140]
    %vm110 = vcmask 31744
    %v112 = vsel %vm110, %v89, 0
    %v115 = vsel %vm110, %v90, 0
    %v118 = vsel %vm110, %v91, 0
    %v121 = vsel %vm110, %v92, 0
    %vm123 = vcmask 1041408
    %v124 = vsel %vm123, %v106, 0
    %v126 = vsel %vm123, %v107, 0
    %v128 = vsel %vm123, %v108, 0
    %v130 = vsel %vm123, %v109, 0
    %132 = vmatpush.bf16.msra.mxu0 0
    %133 = vmatpush.bf16.msra.mxu0 0
    %134 = vmatpush.bf16.msra.mxu0 0
    %135 = vmatpush.bf16.msra.mxu0 0
    %136 = vmatpush.bf16.msra.mxu0 0
    %137 = vmatpush.bf16.msra.mxu0 0
    %138 = vmatpush.bf16.msra.mxu0 0
    %139 = vmatpush.bf16.msra.mxu0 %v124
    %140 = vmatmul.bf16.gmra.mxu0 %v112
    %v141 = vpop.f32.mrf.mxu0
    %v142 = vadd.f32 %v96, %v141
    %v143 = vpop.f32.mrf.mxu0
    %v144 = vadd.f32 %v96, %v143
    %145 = vmatmul.bf16.gmra.mxu0 %v115
    %v146 = vpop.f32.mrf.mxu0
    %v147 = vadd.f32 %v96, %v146
    %v148 = vpop.f32.mrf.mxu0
    %v149 = vadd.f32 %v96, %v148
    %150 = vmatmul.bf16.gmra.mxu0 %v118
    %v151 = vpop.f32.mrf.mxu0
    %v152 = vadd.f32 %v96, %v151
    %v153 = vpop.f32.mrf.mxu0
    %v154 = vadd.f32 %v96, %v153
    %155 = vmatmul.bf16.gmra.mxu0 %v121
    %v156 = vpop.f32.mrf.mxu0
    %v157 = vadd.f32 %v96, %v156
    %v158 = vpop.f32.mrf.mxu0
    %v159 = vadd.f32 %v96, %v158
    %160 = vdwg.mxu0
    %161 = vmatpush.bf16.msra.mxu0 0
    %162 = vmatpush.bf16.msra.mxu0 0
    %163 = vmatpush.bf16.msra.mxu0 0
    %164 = vmatpush.bf16.msra.mxu0 0
    %165 = vmatpush.bf16.msra.mxu0 0
    %166 = vmatpush.bf16.msra.mxu0 0
    %167 = vmatpush.bf16.msra.mxu0 0
    %168 = vmatpush.bf16.msra.mxu0 %v126
    %169 = vmatmul.bf16.gmra.mxu0 %v112
    %v170 = vpop.f32.mrf.mxu0
    %v171 = vadd.f32 %v97, %v170
    %v172 = vpop.f32.mrf.mxu0
    %v173 = vadd.f32 %v97, %v172
    %174 = vmatmul.bf16.gmra.mxu0 %v115
    %v175 = vpop.f32.mrf.mxu0
    %v176 = vadd.f32 %v97, %v175
    %v177 = vpop.f32.mrf.mxu0
    %v178 = vadd.f32 %v97, %v177
    %179 = vmatmul.bf16.gmra.mxu0 %v118
    %v180 = vpop.f32.mrf.mxu0
    %v181 = vadd.f32 %v97, %v180
    %v182 = vpop.f32.mrf.mxu0
    %v183 = vadd.f32 %v97, %v182
    %184 = vmatmul.bf16.gmra.mxu0 %v121
    %v185 = vpop.f32.mrf.mxu0
    %v186 = vadd.f32 %v97, %v185
    %v187 = vpop.f32.mrf.mxu0
    %v188 = vadd.f32 %v97, %v187
    %189 = vdwg.mxu0
    %190 = vmatpush.bf16.msra.mxu0 0
    %191 = vmatpush.bf16.msra.mxu0 0
    %192 = vmatpush.bf16.msra.mxu0 0
    %193 = vmatpush.bf16.msra.mxu0 0
    %194 = vmatpush.bf16.msra.mxu0 0
    %195 = vmatpush.bf16.msra.mxu0 0
    %196 = vmatpush.bf16.msra.mxu0 0
    %197 = vmatpush.bf16.msra.mxu0 %v128
    %198 = vmatmul.bf16.gmra.mxu0 %v112
    %v199 = vpop.f32.mrf.mxu0
    %v200 = vadd.f32 %v98, %v199
    %v201 = vpop.f32.mrf.mxu0
    %v202 = vadd.f32 %v98, %v201
    %203 = vmatmul.bf16.gmra.mxu0 %v115
    %v204 = vpop.f32.mrf.mxu0
    %v205 = vadd.f32 %v98, %v204
    %v206 = vpop.f32.mrf.mxu0
    %v207 = vadd.f32 %v98, %v206
    %208 = vmatmul.bf16.gmra.mxu0 %v118
    %v209 = vpop.f32.mrf.mxu0
    %v210 = vadd.f32 %v98, %v209
    %v211 = vpop.f32.mrf.mxu0
    %v212 = vadd.f32 %v98, %v211
    %213 = vmatmul.bf16.gmra.mxu0 %v121
    %v214 = vpop.f32.mrf.mxu0
    %v215 = vadd.f32 %v98, %v214
    %v216 = vpop.f32.mrf.mxu0
    %v217 = vadd.f32 %v98, %v216
    %218 = vdwg.mxu0
    %219 = vmatpush.bf16.msra.mxu0 0
    %220 = vmatpush.bf16.msra.mxu0 0
    %221 = vmatpush.bf16.msra.mxu0 0
    %222 = vmatpush.bf16.msra.mxu0 0
    %223 = vmatpush.bf16.msra.mxu0 0
    %224 = vmatpush.bf16.msra.mxu0 0
    %225 = vmatpush.bf16.msra.mxu0 0
    %226 = vmatpush.bf16.msra.mxu0 %v130
    %227 = vmatmul.bf16.gmra.mxu0 %v112
    %v228 = vpop.f32.mrf.mxu0
    %v229 = vadd.f32 %v99, %v228
    %v230 = vpop.f32.mrf.mxu0
    %v231 = vadd.f32 %v99, %v230
    %232 = vmatmul.bf16.gmra.mxu0 %v115
    %v233 = vpop.f32.mrf.mxu0
    %v234 = vadd.f32 %v99, %v233
    %v235 = vpop.f32.mrf.mxu0
    %v236 = vadd.f32 %v99, %v235
    %237 = vmatmul.bf16.gmra.mxu0 %v118
    %v238 = vpop.f32.mrf.mxu0
    %v239 = vadd.f32 %v99, %v238
    %v240 = vpop.f32.mrf.mxu0
    %v241 = vadd.f32 %v99, %v240
    %242 = vmatmul.bf16.gmra.mxu0 %v121
    %v243 = vpop.f32.mrf.mxu0
    %v244 = vadd.f32 %v99, %v243
    %v245 = vpop.f32.mrf.mxu0
    %v246 = vadd.f32 %v99, %v245
    %247 = vdwg.mxu0
    %248 = vst [vmem:[#allocation5] sm:$0xff] %v142
    %249 = vst [vmem:[#allocation5 + $0x8] sm:$0xff] %v171
    %250 = vst [vmem:[#allocation5 + $0x10] sm:$0xff] %v200
    %251 = vst [vmem:[#allocation5 + $0x18] sm:$0xff] %v229
    %252 = vst [vmem:[#allocation5 + $0x20] sm:$0xff] %v144
    %253 = vst [vmem:[#allocation5 + $0x28] sm:$0xff] %v173
    %254 = vst [vmem:[#allocation5 + $0x30] sm:$0xff] %v202
    %255 = vst [vmem:[#allocation5 + $0x38] sm:$0xff] %v231
    %256 = vst [vmem:[#allocation5 + $0x40] sm:$0xff] %v147
    %257 = vst [vmem:[#allocation5 + $0x48] sm:$0xff] %v176
    %258 = vst [vmem:[#allocation5 + $0x50] sm:$0xff] %v205
    %259 = vst [vmem:[#allocation5 + $0x58] sm:$0xff] %v234
    %260 = vst [vmem:[#allocation5 + $0x60] sm:$0xff] %v149
    %261 = vst [vmem:[#allocation5 + $0x68] sm:$0xff] %v178
    %262 = vst [vmem:[#allocation5 + $0x70] sm:$0xff] %v207
    %263 = vst [vmem:[#allocation5 + $0x78] sm:$0xff] %v236
    %264 = vst [vmem:[#allocation5 + $0x80] sm:$0xff] %v152
    %265 = vst [vmem:[#allocation5 + $0x88] sm:$0xff] %v181
    %266 = vst [vmem:[#allocation5 + $0x90] sm:$0xff] %v210
    %267 = vst [vmem:[#allocation5 + $0x98] sm:$0xff] %v239
    %268 = vst [vmem:[#allocation5 + $0xa0] sm:$0xff] %v154
    %269 = vst [vmem:[#allocation5 + $0xa8] sm:$0xff] %v183
    %270 = vst [vmem:[#allocation5 + $0xb0] sm:$0xff] %v212
    %271 = vst [vmem:[#allocation5 + $0xb8] sm:$0xff] %v241
    %272 = vst [vmem:[#allocation5 + $0xc0] sm:$0xff] %v157
    %273 = vst [vmem:[#allocation5 + $0xc8] sm:$0xff] %v186
    %274 = vst [vmem:[#allocation5 + $0xd0] sm:$0xff] %v215
    %275 = vst [vmem:[#allocation5 + $0xd8] sm:$0xff] %v244
    %276 = vst [vmem:[#allocation5 + $0xe0] sm:$0xff] %v159
    %277 = vst [vmem:[#allocation5 + $0xe8] sm:$0xff] %v188
    %278 = vst [vmem:[#allocation5 + $0xf0] sm:$0xff] %v217
    %279 = vst [vmem:[#allocation5 + $0xf8] sm:$0xff] %v246
    %280 = vst [vmem:[#allocation2] sm:$0xff] 0.0
    %281 = vst [vmem:[#allocation3] sm:$0xff] 0.0
    %v282 = vld [vmem:[#allocation2] sm:$0xff]
    %v283 = vld [vmem:[#allocation5] sm:$0xff]
    %v284 = vld [vmem:[#allocation5 + $0x8] sm:$0xff]
    %v285 = vld [vmem:[#allocation5 + $0x10] sm:$0xff]
    %v286 = vld [vmem:[#allocation5 + $0x18] sm:$0xff]
    %v287 = vpack.c.bf16 %v282, %v282
    %v288 = vld [vmem:[#allocation6] sm:$0xff]
    %v289 = vld [vmem:[#allocation6 + $0x8] sm:$0xff]
    %v290 = vld [vmem:[#allocation6 + $0x10] sm:$0xff]
    %v291 = vld [vmem:[#allocation6 + $0x18] sm:$0xff]
    %v292 = vld [vmem:[#allocation6 + $0x20] sm:$0xff]
    %v293 = vld [vmem:[#allocation6 + $0x28] sm:$0xff]
    %v294 = vld [vmem:[#allocation6 + $0x30] sm:$0xff]
    %v295 = vld [vmem:[#allocation6 + $0x38] sm:$0xff]
    %v296 = vld [vmem:[#allocation6 + $0x40] sm:$0xff]
    %v297 = vld [vmem:[#allocation6 + $0x48] sm:$0xff]
    %v298 = vld [vmem:[#allocation6 + $0x50] sm:$0xff]
    %v299 = vld [vmem:[#allocation6 + $0x58] sm:$0xff]
    %v300 = vld [vmem:[#allocation6 + $0x60] sm:$0xff]
    %v301 = vld [vmem:[#allocation6 + $0x68] sm:$0xff]
    %v302 = vld [vmem:[#allocation6 + $0x70] sm:$0xff]
    %v303 = vld [vmem:[#allocation6 + $0x78] sm:$0xff]
    %v304 = vld [vmem:[#allocation6 + $0x80] sm:$0xff]
    %v305 = vld [vmem:[#allocation6 + $0x88] sm:$0xff]
    %v306 = vld [vmem:[#allocation6 + $0x90] sm:$0xff]
    %v307 = vld [vmem:[#allocation6 + $0x98] sm:$0xff]
    %v308 = vld [vmem:[#allocation6 + $0xa0] sm:$0xff]
    %v309 = vld [vmem:[#allocation6 + $0xa8] sm:$0xff]
    %v310 = vld [vmem:[#allocation6 + $0xb0] sm:$0xff]
    %v311 = vld [vmem:[#allocation6 + $0xb8] sm:$0xff]
    %v312 = vld [vmem:[#allocation6 + $0xc0] sm:$0xff]
    %v313 = vld [vmem:[#allocation6 + $0xc8] sm:$0xff]
    %v314 = vld [vmem:[#allocation6 + $0xd0] sm:$0xff]
    %v315 = vld [vmem:[#allocation6 + $0xd8] sm:$0xff]
    %v316 = vld [vmem:[#allocation6 + $0xe0] sm:$0xff]
    %v317 = vld [vmem:[#allocation6 + $0xe8] sm:$0xff]
    %v318 = vld [vmem:[#allocation6 + $0xf0] sm:$0xff]
    %v319 = vld [vmem:[#allocation6 + $0xf8] sm:$0xff]
    %v352 = vunpack.c.l.b16 %v288
    %v353 = vunpack.c.h.b16 %v288
    %v354 = vunpack.c.l.b16 %v289
    %v355 = vunpack.c.h.b16 %v289
    %v356 = vunpack.c.l.b16 %v290
    %v357 = vunpack.c.h.b16 %v290
    %v358 = vunpack.c.l.b16 %v291
    %v359 = vunpack.c.h.b16 %v291
    %v360 = vunpack.c.l.b16 %v292
    %v361 = vunpack.c.h.b16 %v292
    %v362 = vunpack.c.l.b16 %v293
    %v363 = vunpack.c.h.b16 %v293
    %v364 = vunpack.c.l.b16 %v294
    %v365 = vunpack.c.h.b16 %v294
    %v366 = vunpack.c.l.b16 %v295
    %v367 = vunpack.c.h.b16 %v295
    %v368 = vunpack.c.l.b16 %v296
    %v369 = vunpack.c.h.b16 %v296
    %v370 = vunpack.c.l.b16 %v297
    %v371 = vunpack.c.h.b16 %v297
    %v372 = vunpack.c.l.b16 %v298
    %v373 = vunpack.c.h.b16 %v298
    %v374 = vunpack.c.l.b16 %v299
    %v375 = vunpack.c.h.b16 %v299
    %v376 = vunpack.c.l.b16 %v300
    %v377 = vunpack.c.h.b16 %v300
    %v378 = vunpack.c.l.b16 %v301
    %v379 = vunpack.c.h.b16 %v301
    %v380 = vunpack.c.l.b16 %v302
    %v381 = vunpack.c.h.b16 %v302
    %v382 = vunpack.c.l.b16 %v303
    %v383 = vunpack.c.h.b16 %v303
    %v384 = vunpack.c.l.b16 %v304
    %v385 = vunpack.c.h.b16 %v304
    %v386 = vunpack.c.l.b16 %v305
    %v387 = vunpack.c.h.b16 %v305
    %v388 = vunpack.c.l.b16 %v306
    %v389 = vunpack.c.h.b16 %v306
    %v390 = vunpack.c.l.b16 %v307
    %v391 = vunpack.c.h.b16 %v307
    %v392 = vunpack.c.l.b16 %v308
    %v393 = vunpack.c.h.b16 %v308
    %v394 = vunpack.c.l.b16 %v309
    %v395 = vunpack.c.h.b16 %v309
    %v396 = vunpack.c.l.b16 %v310
    %v397 = vunpack.c.h.b16 %v310
    %v398 = vunpack.c.l.b16 %v311
    %v399 = vunpack.c.h.b16 %v311
    %v400 = vunpack.c.l.b16 %v312
    %v401 = vunpack.c.h.b16 %v312
    %v402 = vunpack.c.l.b16 %v313
    %v403 = vunpack.c.h.b16 %v313
    %v404 = vunpack.c.l.b16 %v314
    %v405 = vunpack.c.h.b16 %v314
    %v406 = vunpack.c.l.b16 %v315
    %v407 = vunpack.c.h.b16 %v315
    %v408 = vunpack.c.l.b16 %v316
    %v409 = vunpack.c.h.b16 %v316
    %v410 = vunpack.c.l.b16 %v317
    %v411 = vunpack.c.h.b16 %v317
    %v412 = vunpack.c.l.b16 %v318
    %v413 = vunpack.c.h.b16 %v318
    %v414 = vunpack.c.l.b16 %v319
    %v415 = vunpack.c.h.b16 %v319
    %v416 = vpack.c.b16 %v356, %v352
    %v417 = vpack.c.b16 %v357, %v353
    %v418 = vpack.c.b16 %v358, %v354
    %v419 = vpack.c.b16 %v359, %v355
    %v420 = vpack.c.b16 %v364, %v360
    %v421 = vpack.c.b16 %v365, %v361
    %v422 = vpack.c.b16 %v366, %v362
    %v423 = vpack.c.b16 %v367, %v363
    %v424 = vpack.c.b16 %v372, %v368
    %v425 = vpack.c.b16 %v373, %v369
    %v426 = vpack.c.b16 %v374, %v370
    %v427 = vpack.c.b16 %v375, %v371
    %v428 = vpack.c.b16 %v380, %v376
    %v429 = vpack.c.b16 %v381, %v377
    %v430 = vpack.c.b16 %v382, %v378
    %v431 = vpack.c.b16 %v383, %v379
    %v432 = vpack.c.b16 %v388, %v384
    %v433 = vpack.c.b16 %v389, %v385
    %v434 = vpack.c.b16 %v390, %v386
    %v435 = vpack.c.b16 %v391, %v387
    %v436 = vpack.c.b16 %v396, %v392
    %v437 = vpack.c.b16 %v397, %v393
    %v438 = vpack.c.b16 %v398, %v394
    %v439 = vpack.c.b16 %v399, %v395
    %v440 = vpack.c.b16 %v404, %v400
    %v441 = vpack.c.b16 %v405, %v401
    %v442 = vpack.c.b16 %v406, %v402
    %v443 = vpack.c.b16 %v407, %v403
    %v444 = vpack.c.b16 %v412, %v408
    %v445 = vpack.c.b16 %v413, %v409
    %v446 = vpack.c.b16 %v414, %v410
    %v447 = vpack.c.b16 %v415, %v411
    %480 = vmatpush.bf16.msra.mxu0 %v444
    %481 = vmatpush.bf16.msra.mxu0 %v440
    %482 = vmatpush.bf16.msra.mxu0 %v436
    %483 = vmatpush.bf16.msra.mxu0 %v432
    %484 = vmatpush.bf16.msra.mxu0 %v428
    %485 = vmatpush.bf16.msra.mxu0 %v424
    %486 = vmatpush.bf16.msra.mxu0 %v420
    %487 = vmatpush.bf16.msra.mxu0 %v416
    %488 = vmatmul.bf16.gmra.mxu0 %v287
    %v489 = vpop.f32.mrf.mxu0
    %v490 = vadd.f32 0.0, %v489
    %v491 = vpop.f32.mrf.mxu0
    %492 = vdwg.mxu0
    %493 = vmatpush.bf16.msra.mxu0 %v445
    %494 = vmatpush.bf16.msra.mxu0 %v441
    %495 = vmatpush.bf16.msra.mxu0 %v437
    %496 = vmatpush.bf16.msra.mxu0 %v433
    %497 = vmatpush.bf16.msra.mxu0 %v429
    %498 = vmatpush.bf16.msra.mxu0 %v425
    %499 = vmatpush.bf16.msra.mxu0 %v421
    %500 = vmatpush.bf16.msra.mxu0 %v417
    %501 = vmatmul.bf16.gmra.mxu0 %v287
    %v502 = vpop.f32.mrf.mxu0
    %v503 = vadd.f32 0.0, %v502
    %v504 = vpop.f32.mrf.mxu0
    %505 = vdwg.mxu0
    %506 = vmatpush.bf16.msra.mxu0 %v446
    %507 = vmatpush.bf16.msra.mxu0 %v442
    %508 = vmatpush.bf16.msra.mxu0 %v438
    %509 = vmatpush.bf16.msra.mxu0 %v434
    %510 = vmatpush.bf16.msra.mxu0 %v430
    %511 = vmatpush.bf16.msra.mxu0 %v426
    %512 = vmatpush.bf16.msra.mxu0 %v422
    %513 = vmatpush.bf16.msra.mxu0 %v418
    %514 = vmatmul.bf16.gmra.mxu0 %v287
    %v515 = vpop.f32.mrf.mxu0
    %v516 = vadd.f32 0.0, %v515
    %v517 = vpop.f32.mrf.mxu0
    %518 = vdwg.mxu0
    %519 = vmatpush.bf16.msra.mxu0 %v447
    %520 = vmatpush.bf16.msra.mxu0 %v443
    %521 = vmatpush.bf16.msra.mxu0 %v439
    %522 = vmatpush.bf16.msra.mxu0 %v435
    %523 = vmatpush.bf16.msra.mxu0 %v431
    %524 = vmatpush.bf16.msra.mxu0 %v427
    %525 = vmatpush.bf16.msra.mxu0 %v423
    %526 = vmatpush.bf16.msra.mxu0 %v419
    %527 = vmatmul.bf16.gmra.mxu0 %v287
    %v528 = vpop.f32.mrf.mxu0
    %v529 = vadd.f32 0.0, %v528
    %v530 = vpop.f32.mrf.mxu0
    %531 = vdwg.mxu0
    %v532 = vadd.f32 %v283, %v490
    %v533 = vadd.f32 %v284, %v503
    %v534 = vadd.f32 %v285, %v516
    %v535 = vadd.f32 %v286, %v529
    %v536 = vmul.f32 %v532, 0.5
    %v537 = vtanh.pop %v536
    %v538 = vadd.f32 %v537, 1.0
    %v539 = vmul.f32 %v538, 0.5
    %v540 = vmul.f32 %v533, 0.5
    %v541 = vtanh.pop %v540
    %v542 = vadd.f32 %v541, 1.0
    %v543 = vmul.f32 %v542, 0.5
    %v544 = vtanh.pop %v534
    %v545 = vmul.f32 %v535, 0.5
    %v546 = vtanh.pop %v545
    %v547 = vadd.f32 %v546, 1.0
    %v548 = vmul.f32 %v547, 0.5
    %v549 = vld [vmem:[#allocation3] sm:$0xff]
    %v550 = vmul.f32 %v543, %v549
    %v551 = vmul.f32 %v539, %v544
    %v552 = vadd.f32 %v550, %v551
    %v553 = vtanh.pop %v552
    %v554 = vmul.f32 %v548, %v553
    %555 = vst [vmem:[#allocation3] sm:$0xff] %v552
    %556 = vst [vmem:[#allocation2] sm:$0xff] %v554
    %v557 = vpack.c.bf16 %v554, %v554
    %558 = vst [vmem:[#allocation4] sm:$0xf] %v557
    %v559 = vld [vmem:[#allocation2] sm:$0xff]
    %s560 = scalar_lea.vmem [#allocation5], 32
    %v561 = vld [vmem:[%s560] sm:$0xff]
    %v562 = vld [vmem:[%s560 + $0x8] sm:$0xff]
    %v563 = vld [vmem:[%s560 + $0x10] sm:$0xff]
    %v564 = vld [vmem:[%s560 + $0x18] sm:$0xff]
    %v565 = vpack.c.bf16 %v559, %v559
    %v566 = vld [vmem:[#allocation6] sm:$0xff]
    %v567 = vld [vmem:[#allocation6 + $0x8] sm:$0xff]
    %v568 = vld [vmem:[#allocation6 + $0x10] sm:$0xff]
    %v569 = vld [vmem:[#allocation6 + $0x18] sm:$0xff]
    %v570 = vld [vmem:[#allocation6 + $0x20] sm:$0xff]
    %v571 = vld [vmem:[#allocation6 + $0x28] sm:$0xff]
    %v572 = vld [vmem:[#allocation6 + $0x30] sm:$0xff]
    %v573 = vld [vmem:[#allocation6 + $0x38] sm:$0xff]
    %v574 = vld [vmem:[#allocation6 + $0x40] sm:$0xff]
    %v575 = vld [vmem:[#allocation6 + $0x48] sm:$0xff]
    %v576 = vld [vmem:[#allocation6 + $0x50] sm:$0xff]
    %v577 = vld [vmem:[#allocation6 + $0x58] sm:$0xff]
    %v578 = vld [vmem:[#allocation6 + $0x60] sm:$0xff]
    %v579 = vld [vmem:[#allocation6 + $0x68] sm:$0xff]
    %v580 = vld [vmem:[#allocation6 + $0x70] sm:$0xff]
    %v581 = vld [vmem:[#allocation6 + $0x78] sm:$0xff]
    %v582 = vld [vmem:[#allocation6 + $0x80] sm:$0xff]
    %v583 = vld [vmem:[#allocation6 + $0x88] sm:$0xff]
    %v584 = vld [vmem:[#allocation6 + $0x90] sm:$0xff]
    %v585 = vld [vmem:[#allocation6 + $0x98] sm:$0xff]
    %v586 = vld [vmem:[#allocation6 + $0xa0] sm:$0xff]
    %v587 = vld [vmem:[#allocation6 + $0xa8] sm:$0xff]
    %v588 = vld [vmem:[#allocation6 + $0xb0] sm:$0xff]
    %v589 = vld [vmem:[#allocation6 + $0xb8] sm:$0xff]
    %v590 = vld [vmem:[#allocation6 + $0xc0] sm:$0xff]
    %v591 = vld [vmem:[#allocation6 + $0xc8] sm:$0xff]
    %v592 = vld [vmem:[#allocation6 + $0xd0] sm:$0xff]
    %v593 = vld [vmem:[#allocation6 + $0xd8] sm:$0xff]
    %v594 = vld [vmem:[#allocation6 + $0xe0] sm:$0xff]
    %v595 = vld [vmem:[#allocation6 + $0xe8] sm:$0xff]
    %v596 = vld [vmem:[#allocation6 + $0xf0] sm:$0xff]
    %v597 = vld [vmem:[#allocation6 + $0xf8] sm:$0xff]
    %v630 = vunpack.c.l.b16 %v566
    %v631 = vunpack.c.h.b16 %v566
    %v632 = vunpack.c.l.b16 %v567
    %v633 = vunpack.c.h.b16 %v567
    %v634 = vunpack.c.l.b16 %v568
    %v635 = vunpack.c.h.b16 %v568
    %v636 = vunpack.c.l.b16 %v569
    %v637 = vunpack.c.h.b16 %v569
    %v638 = vunpack.c.l.b16 %v570
    %v639 = vunpack.c.h.b16 %v570
    %v640 = vunpack.c.l.b16 %v571
    %v641 = vunpack.c.h.b16 %v571
    %v642 = vunpack.c.l.b16 %v572
    %v643 = vunpack.c.h.b16 %v572
    %v644 = vunpack.c.l.b16 %v573
    %v645 = vunpack.c.h.b16 %v573
    %v646 = vunpack.c.l.b16 %v574
    %v647 = vunpack.c.h.b16 %v574
    %v648 = vunpack.c.l.b16 %v575
    %v649 = vunpack.c.h.b16 %v575
    %v650 = vunpack.c.l.b16 %v576
    %v651 = vunpack.c.h.b16 %v576
    %v652 = vunpack.c.l.b16 %v577
    %v653 = vunpack.c.h.b16 %v577
    %v654 = vunpack.c.l.b16 %v578
    %v655 = vunpack.c.h.b16 %v578
    %v656 = vunpack.c.l.b16 %v579
    %v657 = vunpack.c.h.b16 %v579
    %v658 = vunpack.c.l.b16 %v580
    %v659 = vunpack.c.h.b16 %v580
    %v660 = vunpack.c.l.b16 %v581
    %v661 = vunpack.c.h.b16 %v581
    %v662 = vunpack.c.l.b16 %v582
    %v663 = vunpack.c.h.b16 %v582
    %v664 = vunpack.c.l.b16 %v583
    %v665 = vunpack.c.h.b16 %v583
    %v666 = vunpack.c.l.b16 %v584
    %v667 = vunpack.c.h.b16 %v584
    %v668 = vunpack.c.l.b16 %v585
    %v669 = vunpack.c.h.b16 %v585
    %v670 = vunpack.c.l.b16 %v586
    %v671 = vunpack.c.h.b16 %v586
    %v672 = vunpack.c.l.b16 %v587
    %v673 = vunpack.c.h.b16 %v587
    %v674 = vunpack.c.l.b16 %v588
    %v675 = vunpack.c.h.b16 %v588
    %v676 = vunpack.c.l.b16 %v589
    %v677 = vunpack.c.h.b16 %v589
    %v678 = vunpack.c.l.b16 %v590
    %v679 = vunpack.c.h.b16 %v590
    %v680 = vunpack.c.l.b16 %v591
    %v681 = vunpack.c.h.b16 %v591
    %v682 = vunpack.c.l.b16 %v592
    %v683 = vunpack.c.h.b16 %v592
    %v684 = vunpack.c.l.b16 %v593
    %v685 = vunpack.c.h.b16 %v593
    %v686 = vunpack.c.l.b16 %v594
    %v687 = vunpack.c.h.b16 %v594
    %v688 = vunpack.c.l.b16 %v595
    %v689 = vunpack.c.h.b16 %v595
    %v690 = vunpack.c.l.b16 %v596
    %v691 = vunpack.c.h.b16 %v596
    %v692 = vunpack.c.l.b16 %v597
    %v693 = vunpack.c.h.b16 %v597
    %v694 = vpack.c.b16 %v634, %v630
    %v695 = vpack.c.b16 %v635, %v631
    %v696 = vpack.c.b16 %v636, %v632
    %v697 = vpack.c.b16 %v637, %v633
    %v698 = vpack.c.b16 %v642, %v638
    %v699 = vpack.c.b16 %v643, %v639
    %v700 = vpack.c.b16 %v644, %v640
    %v701 = vpack.c.b16 %v645, %v641
    %v702 = vpack.c.b16 %v650, %v646
    %v703 = vpack.c.b16 %v651, %v647
    %v704 = vpack.c.b16 %v652, %v648
    %v705 = vpack.c.b16 %v653, %v649
    %v706 = vpack.c.b16 %v658, %v654
    %v707 = vpack.c.b16 %v659, %v655
    %v708 = vpack.c.b16 %v660, %v656
    %v709 = vpack.c.b16 %v661, %v657
    %v710 = vpack.c.b16 %v666, %v662
    %v711 = vpack.c.b16 %v667, %v663
    %v712 = vpack.c.b16 %v668, %v664
    %v713 = vpack.c.b16 %v669, %v665
    %v714 = vpack.c.b16 %v674, %v670
    %v715 = vpack.c.b16 %v675, %v671
    %v716 = vpack.c.b16 %v676, %v672
    %v717 = vpack.c.b16 %v677, %v673
    %v718 = vpack.c.b16 %v682, %v678
    %v719 = vpack.c.b16 %v683, %v679
    %v720 = vpack.c.b16 %v684, %v680
    %v721 = vpack.c.b16 %v685, %v681
    %v722 = vpack.c.b16 %v690, %v686
    %v723 = vpack.c.b16 %v691, %v687
    %v724 = vpack.c.b16 %v692, %v688
    %v725 = vpack.c.b16 %v693, %v689
    %758 = vmatpush.bf16.msra.mxu0 %v722
    %759 = vmatpush.bf16.msra.mxu0 %v718
    %760 = vmatpush.bf16.msra.mxu0 %v714
    %761 = vmatpush.bf16.msra.mxu0 %v710
    %762 = vmatpush.bf16.msra.mxu0 %v706
    %763 = vmatpush.bf16.msra.mxu0 %v702
    %764 = vmatpush.bf16.msra.mxu0 %v698
    %765 = vmatpush.bf16.msra.mxu0 %v694
    %766 = vmatmul.bf16.gmra.mxu0 %v565
    %v767 = vpop.f32.mrf.mxu0
    %v768 = vadd.f32 0.0, %v767
    %v769 = vpop.f32.mrf.mxu0
    %770 = vdwg.mxu0
    %771 = vmatpush.bf16.msra.mxu0 %v723
    %772 = vmatpush.bf16.msra.mxu0 %v719
    %773 = vmatpush.bf16.msra.mxu0 %v715
    %774 = vmatpush.bf16.msra.mxu0 %v711
    %775 = vmatpush.bf16.msra.mxu0 %v707
    %776 = vmatpush.bf16.msra.mxu0 %v703
    %777 = vmatpush.bf16.msra.mxu0 %v699
    %778 = vmatpush.bf16.msra.mxu0 %v695
    %779 = vmatmul.bf16.gmra.mxu0 %v565
    %v780 = vpop.f32.mrf.mxu0
    %v781 = vadd.f32 0.0, %v780
    %v782 = vpop.f32.mrf.mxu0
    %783 = vdwg.mxu0
    %784 = vmatpush.bf16.msra.mxu0 %v724
    %785 = vmatpush.bf16.msra.mxu0 %v720
    %786 = vmatpush.bf16.msra.mxu0 %v716
    %787 = vmatpush.bf16.msra.mxu0 %v712
    %788 = vmatpush.bf16.msra.mxu0 %v708
    %789 = vmatpush.bf16.msra.mxu0 %v704
    %790 = vmatpush.bf16.msra.mxu0 %v700
    %791 = vmatpush.bf16.msra.mxu0 %v696
    %792 = vmatmul.bf16.gmra.mxu0 %v565
    %v793 = vpop.f32.mrf.mxu0
    %v794 = vadd.f32 0.0, %v793
    %v795 = vpop.f32.mrf.mxu0
    %796 = vdwg.mxu0
    %797 = vmatpush.bf16.msra.mxu0 %v725
    %798 = vmatpush.bf16.msra.mxu0 %v721
    %799 = vmatpush.bf16.msra.mxu0 %v717
    %800 = vmatpush.bf16.msra.mxu0 %v713
    %801 = vmatpush.bf16.msra.mxu0 %v709
    %802 = vmatpush.bf16.msra.mxu0 %v705
    %803 = vmatpush.bf16.msra.mxu0 %v701
    %804 = vmatpush.bf16.msra.mxu0 %v697
    %805 = vmatmul.bf16.gmra.mxu0 %v565
    %v806 = vpop.f32.mrf.mxu0
    %v807 = vadd.f32 0.0, %v806
    %v808 = vpop.f32.mrf.mxu0
    %809 = vdwg.mxu0
    %v810 = vadd.f32 %v561, %v768
    %v811 = vadd.f32 %v562, %v781
    %v812 = vadd.f32 %v563, %v794
    %v813 = vadd.f32 %v564, %v807
    %v814 = vmul.f32 %v810, 0.5
    %v815 = vtanh.pop %v814
    %v816 = vadd.f32 %v815, 1.0
    %v817 = vmul.f32 %v816, 0.5
    %v818 = vmul.f32 %v811, 0.5
    %v819 = vtanh.pop %v818
    %v820 = vadd.f32 %v819, 1.0
    %v821 = vmul.f32 %v820, 0.5
    %v822 = vtanh.pop %v812
    %v823 = vmul.f32 %v813, 0.5
    %v824 = vtanh.pop %v823
    %v825 = vadd.f32 %v824, 1.0
    %v826 = vmul.f32 %v825, 0.5
    %v827 = vld [vmem:[#allocation3] sm:$0xff]
    %v828 = vmul.f32 %v821, %v827
    %v829 = vmul.f32 %v817, %v822
    %v830 = vadd.f32 %v828, %v829
    %v831 = vtanh.pop %v830
    %v832 = vmul.f32 %v826, %v831
    %833 = vst [vmem:[#allocation3] sm:$0xff] %v830
    %834 = vst [vmem:[#allocation2] sm:$0xff] %v832
    %v835 = vpack.c.bf16 %v832, %v832
    %s836 = scalar_lea.vmem [#allocation4], 4
    %837 = vst [vmem:[%s836] sm:$0xf] %v835
    %v838 = vld [vmem:[#allocation2] sm:$0xff]
    %s839 = scalar_lea.vmem [#allocation5], 64
    %v840 = vld [vmem:[%s839] sm:$0xff]
    %v841 = vld [vmem:[%s839 + $0x8] sm:$0xff]
    %v842 = vld [vmem:[%s839 + $0x10] sm:$0xff]
    %v843 = vld [vmem:[%s839 + $0x18] sm:$0xff]
    %v844 = vpack.c.bf16 %v838, %v838
    %v845 = vld [vmem:[#allocation6] sm:$0xff]
    %v846 = vld [vmem:[#allocation6 + $0x8] sm:$0xff]
    %v847 = vld [vmem:[#allocation6 + $0x10] sm:$0xff]
    %v848 = vld [vmem:[#allocation6 + $0x18] sm:$0xff]
    %v849 = vld [vmem:[#allocation6 + $0x20] sm:$0xff]
    %v850 = vld [vmem:[#allocation6 + $0x28] sm:$0xff]
    %v851 = vld [vmem:[#allocation6 + $0x30] sm:$0xff]
    %v852 = vld [vmem:[#allocation6 + $0x38] sm:$0xff]
    %v853 = vld [vmem:[#allocation6 + $0x40] sm:$0xff]
    %v854 = vld [vmem:[#allocation6 + $0x48] sm:$0xff]
    %v855 = vld [vmem:[#allocation6 + $0x50] sm:$0xff]
    %v856 = vld [vmem:[#allocation6 + $0x58] sm:$0xff]
    %v857 = vld [vmem:[#allocation6 + $0x60] sm:$0xff]
    %v858 = vld [vmem:[#allocation6 + $0x68] sm:$0xff]
    %v859 = vld [vmem:[#allocation6 + $0x70] sm:$0xff]
    %v860 = vld [vmem:[#allocation6 + $0x78] sm:$0xff]
    %v861 = vld [vmem:[#allocation6 + $0x80] sm:$0xff]
    %v862 = vld [vmem:[#allocation6 + $0x88] sm:$0xff]
    %v863 = vld [vmem:[#allocation6 + $0x90] sm:$0xff]
    %v864 = vld [vmem:[#allocation6 + $0x98] sm:$0xff]
    %v865 = vld [vmem:[#allocation6 + $0xa0] sm:$0xff]
    %v866 = vld [vmem:[#allocation6 + $0xa8] sm:$0xff]
    %v867 = vld [vmem:[#allocation6 + $0xb0] sm:$0xff]
    %v868 = vld [vmem:[#allocation6 + $0xb8] sm:$0xff]
    %v869 = vld [vmem:[#allocation6 + $0xc0] sm:$0xff]
    %v870 = vld [vmem:[#allocation6 + $0xc8] sm:$0xff]
    %v871 = vld [vmem:[#allocation6 + $0xd0] sm:$0xff]
    %v872 = vld [vmem:[#allocation6 + $0xd8] sm:$0xff]
    %v873 = vld [vmem:[#allocation6 + $0xe0] sm:$0xff]
    %v874 = vld [vmem:[#allocation6 + $0xe8] sm:$0xff]
    %v875 = vld [vmem:[#allocation6 + $0xf0] sm:$0xff]
    %v876 = vld [vmem:[#allocation6 + $0xf8] sm:$0xff]
    %v909 = vunpack.c.l.b16 %v845
    %v910 = vunpack.c.h.b16 %v845
    %v911 = vunpack.c.l.b16 %v846
    %v912 = vunpack.c.h.b16 %v846
    %v913 = vunpack.c.l.b16 %v847
    %v914 = vunpack.c.h.b16 %v847
    %v915 = vunpack.c.l.b16 %v848
    %v916 = vunpack.c.h.b16 %v848
    %v917 = vunpack.c.l.b16 %v849
    %v918 = vunpack.c.h.b16 %v849
    %v919 = vunpack.c.l.b16 %v850
    %v920 = vunpack.c.h.b16 %v850
    %v921 = vunpack.c.l.b16 %v851
    %v922 = vunpack.c.h.b16 %v851
    %v923 = vunpack.c.l.b16 %v852
    %v924 = vunpack.c.h.b16 %v852
    %v925 = vunpack.c.l.b16 %v853
    %v926 = vunpack.c.h.b16 %v853
    %v927 = vunpack.c.l.b16 %v854
    %v928 = vunpack.c.h.b16 %v854
    %v929 = vunpack.c.l.b16 %v855
    %v930 = vunpack.c.h.b16 %v855
    %v931 = vunpack.c.l.b16 %v856
    %v932 = vunpack.c.h.b16 %v856
    %v933 = vunpack.c.l.b16 %v857
    %v934 = vunpack.c.h.b16 %v857
    %v935 = vunpack.c.l.b16 %v858
    %v936 = vunpack.c.h.b16 %v858
    %v937 = vunpack.c.l.b16 %v859
    %v938 = vunpack.c.h.b16 %v859
    %v939 = vunpack.c.l.b16 %v860
    %v940 = vunpack.c.h.b16 %v860
    %v941 = vunpack.c.l.b16 %v861
    %v942 = vunpack.c.h.b16 %v861
    %v943 = vunpack.c.l.b16 %v862
    %v944 = vunpack.c.h.b16 %v862
    %v945 = vunpack.c.l.b16 %v863
    %v946 = vunpack.c.h.b16 %v863
    %v947 = vunpack.c.l.b16 %v864
    %v948 = vunpack.c.h.b16 %v864
    %v949 = vunpack.c.l.b16 %v865
    %v950 = vunpack.c.h.b16 %v865
    %v951 = vunpack.c.l.b16 %v866
    %v952 = vunpack.c.h.b16 %v866
    %v953 = vunpack.c.l.b16 %v867
    %v954 = vunpack.c.h.b16 %v867
    %v955 = vunpack.c.l.b16 %v868
    %v956 = vunpack.c.h.b16 %v868
    %v957 = vunpack.c.l.b16 %v869
    %v958 = vunpack.c.h.b16 %v869
    %v959 = vunpack.c.l.b16 %v870
    %v960 = vunpack.c.h.b16 %v870
    %v961 = vunpack.c.l.b16 %v871
    %v962 = vunpack.c.h.b16 %v871
    %v963 = vunpack.c.l.b16 %v872
    %v964 = vunpack.c.h.b16 %v872
    %v965 = vunpack.c.l.b16 %v873
    %v966 = vunpack.c.h.b16 %v873
    %v967 = vunpack.c.l.b16 %v874
    %v968 = vunpack.c.h.b16 %v874
    %v969 = vunpack.c.l.b16 %v875
    %v970 = vunpack.c.h.b16 %v875
    %v971 = vunpack.c.l.b16 %v876
    %v972 = vunpack.c.h.b16 %v876
    %v973 = vpack.c.b16 %v913, %v909
    %v974 = vpack.c.b16 %v914, %v910
    %v975 = vpack.c.b16 %v915, %v911
    %v976 = vpack.c.b16 %v916, %v912
    %v977 = vpack.c.b16 %v921, %v917
    %v978 = vpack.c.b16 %v922, %v918
    %v979 = vpack.c.b16 %v923, %v919
    %v980 = vpack.c.b16 %v924, %v920
    %v981 = vpack.c.b16 %v929, %v925
    %v982 = vpack.c.b16 %v930, %v926
    %v983 = vpack.c.b16 %v931, %v927
    %v984 = vpack.c.b16 %v932, %v928
    %v985 = vpack.c.b16 %v937, %v933
    %v986 = vpack.c.b16 %v938, %v934
    %v987 = vpack.c.b16 %v939, %v935
    %v988 = vpack.c.b16 %v940, %v936
    %v989 = vpack.c.b16 %v945, %v941
    %v990 = vpack.c.b16 %v946, %v942
    %v991 = vpack.c.b16 %v947, %v943
    %v992 = vpack.c.b16 %v948, %v944
    %v993 = vpack.c.b16 %v953, %v949
    %v994 = vpack.c.b16 %v954, %v950
    %v995 = vpack.c.b16 %v955, %v951
    %v996 = vpack.c.b16 %v956, %v952
    %v997 = vpack.c.b16 %v961, %v957
    %v998 = vpack.c.b16 %v962, %v958
    %v999 = vpack.c.b16 %v963, %v959
    %v1000 = vpack.c.b16 %v964, %v960
    %v1001 = vpack.c.b16 %v969, %v965
    %v1002 = vpack.c.b16 %v970, %v966
    %v1003 = vpack.c.b16 %v971, %v967
    %v1004 = vpack.c.b16 %v972, %v968
    %1037 = vmatpush.bf16.msra.mxu0 %v1001
    %1038 = vmatpush.bf16.msra.mxu0 %v997
    %1039 = vmatpush.bf16.msra.mxu0 %v993
    %1040 = vmatpush.bf16.msra.mxu0 %v989
    %1041 = vmatpush.bf16.msra.mxu0 %v985
    %1042 = vmatpush.bf16.msra.mxu0 %v981
    %1043 = vmatpush.bf16.msra.mxu0 %v977
    %1044 = vmatpush.bf16.msra.mxu0 %v973
    %1045 = vmatmul.bf16.gmra.mxu0 %v844
    %v1046 = vpop.f32.mrf.mxu0
    %v1047 = vadd.f32 0.0, %v1046
    %v1048 = vpop.f32.mrf.mxu0
    %1049 = vdwg.mxu0
    %1050 = vmatpush.bf16.msra.mxu0 %v1002
    %1051 = vmatpush.bf16.msra.mxu0 %v998
    %1052 = vmatpush.bf16.msra.mxu0 %v994
    %1053 = vmatpush.bf16.msra.mxu0 %v990
    %1054 = vmatpush.bf16.msra.mxu0 %v986
    %1055 = vmatpush.bf16.msra.mxu0 %v982
    %1056 = vmatpush.bf16.msra.mxu0 %v978
    %1057 = vmatpush.bf16.msra.mxu0 %v974
    %1058 = vmatmul.bf16.gmra.mxu0 %v844
    %v1059 = vpop.f32.mrf.mxu0
    %v1060 = vadd.f32 0.0, %v1059
    %v1061 = vpop.f32.mrf.mxu0
    %1062 = vdwg.mxu0
    %1063 = vmatpush.bf16.msra.mxu0 %v1003
    %1064 = vmatpush.bf16.msra.mxu0 %v999
    %1065 = vmatpush.bf16.msra.mxu0 %v995
    %1066 = vmatpush.bf16.msra.mxu0 %v991
    %1067 = vmatpush.bf16.msra.mxu0 %v987
    %1068 = vmatpush.bf16.msra.mxu0 %v983
    %1069 = vmatpush.bf16.msra.mxu0 %v979
    %1070 = vmatpush.bf16.msra.mxu0 %v975
    %1071 = vmatmul.bf16.gmra.mxu0 %v844
    %v1072 = vpop.f32.mrf.mxu0
    %v1073 = vadd.f32 0.0, %v1072
    %v1074 = vpop.f32.mrf.mxu0
    %1075 = vdwg.mxu0
    %1076 = vmatpush.bf16.msra.mxu0 %v1004
    %1077 = vmatpush.bf16.msra.mxu0 %v1000
    %1078 = vmatpush.bf16.msra.mxu0 %v996
    %1079 = vmatpush.bf16.msra.mxu0 %v992
    %1080 = vmatpush.bf16.msra.mxu0 %v988
    %1081 = vmatpush.bf16.msra.mxu0 %v984
    %1082 = vmatpush.bf16.msra.mxu0 %v980
    %1083 = vmatpush.bf16.msra.mxu0 %v976
    %1084 = vmatmul.bf16.gmra.mxu0 %v844
    %v1085 = vpop.f32.mrf.mxu0
    %v1086 = vadd.f32 0.0, %v1085
    %v1087 = vpop.f32.mrf.mxu0
    %1088 = vdwg.mxu0
    %v1089 = vadd.f32 %v840, %v1047
    %v1090 = vadd.f32 %v841, %v1060
    %v1091 = vadd.f32 %v842, %v1073
    %v1092 = vadd.f32 %v843, %v1086
    %v1093 = vmul.f32 %v1089, 0.5
    %v1094 = vtanh.pop %v1093
    %v1095 = vadd.f32 %v1094, 1.0
    %v1096 = vmul.f32 %v1095, 0.5
    %v1097 = vmul.f32 %v1090, 0.5
    %v1098 = vtanh.pop %v1097
    %v1099 = vadd.f32 %v1098, 1.0
    %v1100 = vmul.f32 %v1099, 0.5
    %v1101 = vtanh.pop %v1091
    %v1102 = vmul.f32 %v1092, 0.5
    %v1103 = vtanh.pop %v1102
    %v1104 = vadd.f32 %v1103, 1.0
    %v1105 = vmul.f32 %v1104, 0.5
    %v1106 = vld [vmem:[#allocation3] sm:$0xff]
    %v1107 = vmul.f32 %v1100, %v1106
    %v1108 = vmul.f32 %v1096, %v1101
    %v1109 = vadd.f32 %v1107, %v1108
    %v1110 = vtanh.pop %v1109
    %v1111 = vmul.f32 %v1105, %v1110
    %1112 = vst [vmem:[#allocation3] sm:$0xff] %v1109
    %1113 = vst [vmem:[#allocation2] sm:$0xff] %v1111
    %v1114 = vpack.c.bf16 %v1111, %v1111
    %s1115 = scalar_lea.vmem [#allocation4], 8
    %1116 = vst [vmem:[%s1115] sm:$0xf] %v1114
    %v1117 = vld [vmem:[#allocation2] sm:$0xff]
    %s1118 = scalar_lea.vmem [#allocation5], 96
    %v1119 = vld [vmem:[%s1118] sm:$0xff]
    %v1120 = vld [vmem:[%s1118 + $0x8] sm:$0xff]
    %v1121 = vld [vmem:[%s1118 + $0x10] sm:$0xff]
    %v1122 = vld [vmem:[%s1118 + $0x18] sm:$0xff]
    %v1123 = vpack.c.bf16 %v1117, %v1117
    %v1124 = vld [vmem:[#allocation6] sm:$0xff]
    %v1125 = vld [vmem:[#allocation6 + $0x8] sm:$0xff]
    %v1126 = vld [vmem:[#allocation6 + $0x10] sm:$0xff]
    %v1127 = vld [vmem:[#allocation6 + $0x18] sm:$0xff]
    %v1128 = vld [vmem:[#allocation6 + $0x20] sm:$0xff]
    %v1129 = vld [vmem:[#allocation6 + $0x28] sm:$0xff]
    %v1130 = vld [vmem:[#allocation6 + $0x30] sm:$0xff]
    %v1131 = vld [vmem:[#allocation6 + $0x38] sm:$0xff]
    %v1132 = vld [vmem:[#allocation6 + $0x40] sm:$0xff]
    %v1133 = vld [vmem:[#allocation6 + $0x48] sm:$0xff]
    %v1134 = vld [vmem:[#allocation6 + $0x50] sm:$0xff]
    %v1135 = vld [vmem:[#allocation6 + $0x58] sm:$0xff]
    %v1136 = vld [vmem:[#allocation6 + $0x60] sm:$0xff]
    %v1137 = vld [vmem:[#allocation6 + $0x68] sm:$0xff]
    %v1138 = vld [vmem:[#allocation6 + $0x70] sm:$0xff]
    %v1139 = vld [vmem:[#allocation6 + $0x78] sm:$0xff]
    %v1140 = vld [vmem:[#allocation6 + $0x80] sm:$0xff]
    %v1141 = vld [vmem:[#allocation6 + $0x88] sm:$0xff]
    %v1142 = vld [vmem:[#allocation6 + $0x90] sm:$0xff]
    %v1143 = vld [vmem:[#allocation6 + $0x98] sm:$0xff]
    %v1144 = vld [vmem:[#allocation6 + $0xa0] sm:$0xff]
    %v1145 = vld [vmem:[#allocation6 + $0xa8] sm:$0xff]
    %v1146 = vld [vmem:[#allocation6 + $0xb0] sm:$0xff]
    %v1147 = vld [vmem:[#allocation6 + $0xb8] sm:$0xff]
    %v1148 = vld [vmem:[#allocation6 + $0xc0] sm:$0xff]
    %v1149 = vld [vmem:[#allocation6 + $0xc8] sm:$0xff]
    %v1150 = vld [vmem:[#allocation6 + $0xd0] sm:$0xff]
    %v1151 = vld [vmem:[#allocation6 + $0xd8] sm:$0xff]
    %v1152 = vld [vmem:[#allocation6 + $0xe0] sm:$0xff]
    %v1153 = vld [vmem:[#allocation6 + $0xe8] sm:$0xff]
    %v1154 = vld [vmem:[#allocation6 + $0xf0] sm:$0xff]
    %v1155 = vld [vmem:[#allocation6 + $0xf8] sm:$0xff]
    %v1188 = vunpack.c.l.b16 %v1124
    %v1189 = vunpack.c.h.b16 %v1124
    %v1190 = vunpack.c.l.b16 %v1125
    %v1191 = vunpack.c.h.b16 %v1125
    %v1192 = vunpack.c.l.b16 %v1126
    %v1193 = vunpack.c.h.b16 %v1126
    %v1194 = vunpack.c.l.b16 %v1127
    %v1195 = vunpack.c.h.b16 %v1127
    %v1196 = vunpack.c.l.b16 %v1128
    %v1197 = vunpack.c.h.b16 %v1128
    %v1198 = vunpack.c.l.b16 %v1129
    %v1199 = vunpack.c.h.b16 %v1129
    %v1200 = vunpack.c.l.b16 %v1130
    %v1201 = vunpack.c.h.b16 %v1130
    %v1202 = vunpack.c.l.b16 %v1131
    %v1203 = vunpack.c.h.b16 %v1131
    %v1204 = vunpack.c.l.b16 %v1132
    %v1205 = vunpack.c.h.b16 %v1132
    %v1206 = vunpack.c.l.b16 %v1133
    %v1207 = vunpack.c.h.b16 %v1133
    %v1208 = vunpack.c.l.b16 %v1134
    %v1209 = vunpack.c.h.b16 %v1134
    %v1210 = vunpack.c.l.b16 %v1135
    %v1211 = vunpack.c.h.b16 %v1135
    %v1212 = vunpack.c.l.b16 %v1136
    %v1213 = vunpack.c.h.b16 %v1136
    %v1214 = vunpack.c.l.b16 %v1137
    %v1215 = vunpack.c.h.b16 %v1137
    %v1216 = vunpack.c.l.b16 %v1138
    %v1217 = vunpack.c.h.b16 %v1138
    %v1218 = vunpack.c.l.b16 %v1139
    %v1219 = vunpack.c.h.b16 %v1139
    %v1220 = vunpack.c.l.b16 %v1140
    %v1221 = vunpack.c.h.b16 %v1140
    %v1222 = vunpack.c.l.b16 %v1141
    %v1223 = vunpack.c.h.b16 %v1141
    %v1224 = vunpack.c.l.b16 %v1142
    %v1225 = vunpack.c.h.b16 %v1142
    %v1226 = vunpack.c.l.b16 %v1143
    %v1227 = vunpack.c.h.b16 %v1143
    %v1228 = vunpack.c.l.b16 %v1144
    %v1229 = vunpack.c.h.b16 %v1144
    %v1230 = vunpack.c.l.b16 %v1145
    %v1231 = vunpack.c.h.b16 %v1145
    %v1232 = vunpack.c.l.b16 %v1146
    %v1233 = vunpack.c.h.b16 %v1146
    %v1234 = vunpack.c.l.b16 %v1147
    %v1235 = vunpack.c.h.b16 %v1147
    %v1236 = vunpack.c.l.b16 %v1148
    %v1237 = vunpack.c.h.b16 %v1148
    %v1238 = vunpack.c.l.b16 %v1149
    %v1239 = vunpack.c.h.b16 %v1149
    %v1240 = vunpack.c.l.b16 %v1150
    %v1241 = vunpack.c.h.b16 %v1150
    %v1242 = vunpack.c.l.b16 %v1151
    %v1243 = vunpack.c.h.b16 %v1151
    %v1244 = vunpack.c.l.b16 %v1152
    %v1245 = vunpack.c.h.b16 %v1152
    %v1246 = vunpack.c.l.b16 %v1153
    %v1247 = vunpack.c.h.b16 %v1153
    %v1248 = vunpack.c.l.b16 %v1154
    %v1249 = vunpack.c.h.b16 %v1154
    %v1250 = vunpack.c.l.b16 %v1155
    %v1251 = vunpack.c.h.b16 %v1155
    %v1252 = vpack.c.b16 %v1192, %v1188
    %v1253 = vpack.c.b16 %v1193, %v1189
    %v1254 = vpack.c.b16 %v1194, %v1190
    %v1255 = vpack.c.b16 %v1195, %v1191
    %v1256 = vpack.c.b16 %v1200, %v1196
    %v1257 = vpack.c.b16 %v1201, %v1197
    %v1258 = vpack.c.b16 %v1202, %v1198
    %v1259 = vpack.c.b16 %v1203, %v1199
    %v1260 = vpack.c.b16 %v1208, %v1204
    %v1261 = vpack.c.b16 %v1209, %v1205
    %v1262 = vpack.c.b16 %v1210, %v1206
    %v1263 = vpack.c.b16 %v1211, %v1207
    %v1264 = vpack.c.b16 %v1216, %v1212
    %v1265 = vpack.c.b16 %v1217, %v1213
    %v1266 = vpack.c.b16 %v1218, %v1214
    %v1267 = vpack.c.b16 %v1219, %v1215
    %v1268 = vpack.c.b16 %v1224, %v1220
    %v1269 = vpack.c.b16 %v1225, %v1221
    %v1270 = vpack.c.b16 %v1226, %v1222
    %v1271 = vpack.c.b16 %v1227, %v1223
    %v1272 = vpack.c.b16 %v1232, %v1228
    %v1273 = vpack.c.b16 %v1233, %v1229
    %v1274 = vpack.c.b16 %v1234, %v1230
    %v1275 = vpack.c.b16 %v1235, %v1231
    %v1276 = vpack.c.b16 %v1240, %v1236
    %v1277 = vpack.c.b16 %v1241, %v1237
    %v1278 = vpack.c.b16 %v1242, %v1238
    %v1279 = vpack.c.b16 %v1243, %v1239
    %v1280 = vpack.c.b16 %v1248, %v1244
    %v1281 = vpack.c.b16 %v1249, %v1245
    %v1282 = vpack.c.b16 %v1250, %v1246
    %v1283 = vpack.c.b16 %v1251, %v1247
    %1316 = vmatpush.bf16.msra.mxu0 %v1280
    %1317 = vmatpush.bf16.msra.mxu0 %v1276
    %1318 = vmatpush.bf16.msra.mxu0 %v1272
    %1319 = vmatpush.bf16.msra.mxu0 %v1268
    %1320 = vmatpush.bf16.msra.mxu0 %v1264
    %1321 = vmatpush.bf16.msra.mxu0 %v1260
    %1322 = vmatpush.bf16.msra.mxu0 %v1256
    %1323 = vmatpush.bf16.msra.mxu0 %v1252
    %1324 = vmatmul.bf16.gmra.mxu0 %v1123
    %v1325 = vpop.f32.mrf.mxu0
    %v1326 = vadd.f32 0.0, %v1325
    %v1327 = vpop.f32.mrf.mxu0
    %1328 = vdwg.mxu0
    %1329 = vmatpush.bf16.msra.mxu0 %v1281
    %1330 = vmatpush.bf16.msra.mxu0 %v1277
    %1331 = vmatpush.bf16.msra.mxu0 %v1273
    %1332 = vmatpush.bf16.msra.mxu0 %v1269
    %1333 = vmatpush.bf16.msra.mxu0 %v1265
    %1334 = vmatpush.bf16.msra.mxu0 %v1261
    %1335 = vmatpush.bf16.msra.mxu0 %v1257
    %1336 = vmatpush.bf16.msra.mxu0 %v1253
    %1337 = vmatmul.bf16.gmra.mxu0 %v1123
    %v1338 = vpop.f32.mrf.mxu0
    %v1339 = vadd.f32 0.0, %v1338
    %v1340 = vpop.f32.mrf.mxu0
    %1341 = vdwg.mxu0
    %1342 = vmatpush.bf16.msra.mxu0 %v1282
    %1343 = vmatpush.bf16.msra.mxu0 %v1278
    %1344 = vmatpush.bf16.msra.mxu0 %v1274
    %1345 = vmatpush.bf16.msra.mxu0 %v1270
    %1346 = vmatpush.bf16.msra.mxu0 %v1266
    %1347 = vmatpush.bf16.msra.mxu0 %v1262
    %1348 = vmatpush.bf16.msra.mxu0 %v1258
    %1349 = vmatpush.bf16.msra.mxu0 %v1254
    %1350 = vmatmul.bf16.gmra.mxu0 %v1123
    %v1351 = vpop.f32.mrf.mxu0
    %v1352 = vadd.f32 0.0, %v1351
    %v1353 = vpop.f32.mrf.mxu0
    %1354 = vdwg.mxu0
    %1355 = vmatpush.bf16.msra.mxu0 %v1283
    %1356 = vmatpush.bf16.msra.mxu0 %v1279
    %1357 = vmatpush.bf16.msra.mxu0 %v1275
    %1358 = vmatpush.bf16.msra.mxu0 %v1271
    %1359 = vmatpush.bf16.msra.mxu0 %v1267
    %1360 = vmatpush.bf16.msra.mxu0 %v1263
    %1361 = vmatpush.bf16.msra.mxu0 %v1259
    %1362 = vmatpush.bf16.msra.mxu0 %v1255
    %1363 = vmatmul.bf16.gmra.mxu0 %v1123
    %v1364 = vpop.f32.mrf.mxu0
    %v1365 = vadd.f32 0.0, %v1364
    %v1366 = vpop.f32.mrf.mxu0
    %1367 = vdwg.mxu0
    %v1368 = vadd.f32 %v1119, %v1326
    %v1369 = vadd.f32 %v1120, %v1339
    %v1370 = vadd.f32 %v1121, %v1352
    %v1371 = vadd.f32 %v1122, %v1365
    %v1372 = vmul.f32 %v1368, 0.5
    %v1373 = vtanh.pop %v1372
    %v1374 = vadd.f32 %v1373, 1.0
    %v1375 = vmul.f32 %v1374, 0.5
    %v1376 = vmul.f32 %v1369, 0.5
    %v1377 = vtanh.pop %v1376
    %v1378 = vadd.f32 %v1377, 1.0
    %v1379 = vmul.f32 %v1378, 0.5
    %v1380 = vtanh.pop %v1370
    %v1381 = vmul.f32 %v1371, 0.5
    %v1382 = vtanh.pop %v1381
    %v1383 = vadd.f32 %v1382, 1.0
    %v1384 = vmul.f32 %v1383, 0.5
    %v1385 = vld [vmem:[#allocation3] sm:$0xff]
    %v1386 = vmul.f32 %v1379, %v1385
    %v1387 = vmul.f32 %v1375, %v1380
    %v1388 = vadd.f32 %v1386, %v1387
    %v1389 = vtanh.pop %v1388
    %v1390 = vmul.f32 %v1384, %v1389
    %1391 = vst [vmem:[#allocation3] sm:$0xff] %v1388
    %1392 = vst [vmem:[#allocation2] sm:$0xff] %v1390
    %v1393 = vpack.c.bf16 %v1390, %v1390
    %s1394 = scalar_lea.vmem [#allocation4], 12
    %1395 = vst [vmem:[%s1394] sm:$0xf] %v1393
    %v1396 = vld [vmem:[#allocation2] sm:$0xff]
    %s1397 = scalar_lea.vmem [#allocation5], 128
    %v1398 = vld [vmem:[%s1397] sm:$0xff]
    %v1399 = vld [vmem:[%s1397 + $0x8] sm:$0xff]
    %v1400 = vld [vmem:[%s1397 + $0x10] sm:$0xff]
    %v1401 = vld [vmem:[%s1397 + $0x18] sm:$0xff]
    %v1402 = vpack.c.bf16 %v1396, %v1396
    %v1403 = vld [vmem:[#allocation6] sm:$0xff]
    %v1404 = vld [vmem:[#allocation6 + $0x8] sm:$0xff]
    %v1405 = vld [vmem:[#allocation6 + $0x10] sm:$0xff]
    %v1406 = vld [vmem:[#allocation6 + $0x18] sm:$0xff]
    %v1407 = vld [vmem:[#allocation6 + $0x20] sm:$0xff]
    %v1408 = vld [vmem:[#allocation6 + $0x28] sm:$0xff]
    %v1409 = vld [vmem:[#allocation6 + $0x30] sm:$0xff]
    %v1410 = vld [vmem:[#allocation6 + $0x38] sm:$0xff]
    %v1411 = vld [vmem:[#allocation6 + $0x40] sm:$0xff]
    %v1412 = vld [vmem:[#allocation6 + $0x48] sm:$0xff]
    %v1413 = vld [vmem:[#allocation6 + $0x50] sm:$0xff]
    %v1414 = vld [vmem:[#allocation6 + $0x58] sm:$0xff]
    %v1415 = vld [vmem:[#allocation6 + $0x60] sm:$0xff]
    %v1416 = vld [vmem:[#allocation6 + $0x68] sm:$0xff]
    %v1417 = vld [vmem:[#allocation6 + $0x70] sm:$0xff]
    %v1418 = vld [vmem:[#allocation6 + $0x78] sm:$0xff]
    %v1419 = vld [vmem:[#allocation6 + $0x80] sm:$0xff]
    %v1420 = vld [vmem:[#allocation6 + $0x88] sm:$0xff]
    %v1421 = vld [vmem:[#allocation6 + $0x90] sm:$0xff]
    %v1422 = vld [vmem:[#allocation6 + $0x98] sm:$0xff]
    %v1423 = vld [vmem:[#allocation6 + $0xa0] sm:$0xff]
    %v1424 = vld [vmem:[#allocation6 + $0xa8] sm:$0xff]
    %v1425 = vld [vmem:[#allocation6 + $0xb0] sm:$0xff]
    %v1426 = vld [vmem:[#allocation6 + $0xb8] sm:$0xff]
    %v1427 = vld [vmem:[#allocation6 + $0xc0] sm:$0xff]
    %v1428 = vld [vmem:[#allocation6 + $0xc8] sm:$0xff]
    %v1429 = vld [vmem:[#allocation6 + $0xd0] sm:$0xff]
    %v1430 = vld [vmem:[#allocation6 + $0xd8] sm:$0xff]
    %v1431 = vld [vmem:[#allocation6 + $0xe0] sm:$0xff]
    %v1432 = vld [vmem:[#allocation6 + $0xe8] sm:$0xff]
    %v1433 = vld [vmem:[#allocation6 + $0xf0] sm:$0xff]
    %v1434 = vld [vmem:[#allocation6 + $0xf8] sm:$0xff]
    %v1467 = vunpack.c.l.b16 %v1403
    %v1468 = vunpack.c.h.b16 %v1403
    %v1469 = vunpack.c.l.b16 %v1404
    %v1470 = vunpack.c.h.b16 %v1404
    %v1471 = vunpack.c.l.b16 %v1405
    %v1472 = vunpack.c.h.b16 %v1405
    %v1473 = vunpack.c.l.b16 %v1406
    %v1474 = vunpack.c.h.b16 %v1406
    %v1475 = vunpack.c.l.b16 %v1407
    %v1476 = vunpack.c.h.b16 %v1407
    %v1477 = vunpack.c.l.b16 %v1408
    %v1478 = vunpack.c.h.b16 %v1408
    %v1479 = vunpack.c.l.b16 %v1409
    %v1480 = vunpack.c.h.b16 %v1409
    %v1481 = vunpack.c.l.b16 %v1410
    %v1482 = vunpack.c.h.b16 %v1410
    %v1483 = vunpack.c.l.b16 %v1411
    %v1484 = vunpack.c.h.b16 %v1411
    %v1485 = vunpack.c.l.b16 %v1412
    %v1486 = vunpack.c.h.b16 %v1412
    %v1487 = vunpack.c.l.b16 %v1413
    %v1488 = vunpack.c.h.b16 %v1413
    %v1489 = vunpack.c.l.b16 %v1414
    %v1490 = vunpack.c.h.b16 %v1414
    %v1491 = vunpack.c.l.b16 %v1415
    %v1492 = vunpack.c.h.b16 %v1415
    %v1493 = vunpack.c.l.b16 %v1416
    %v1494 = vunpack.c.h.b16 %v1416
    %v1495 = vunpack.c.l.b16 %v1417
    %v1496 = vunpack.c.h.b16 %v1417
    %v1497 = vunpack.c.l.b16 %v1418
    %v1498 = vunpack.c.h.b16 %v1418
    %v1499 = vunpack.c.l.b16 %v1419
    %v1500 = vunpack.c.h.b16 %v1419
    %v1501 = vunpack.c.l.b16 %v1420
    %v1502 = vunpack.c.h.b16 %v1420
    %v1503 = vunpack.c.l.b16 %v1421
    %v1504 = vunpack.c.h.b16 %v1421
    %v1505 = vunpack.c.l.b16 %v1422
    %v1506 = vunpack.c.h.b16 %v1422
    %v1507 = vunpack.c.l.b16 %v1423
    %v1508 = vunpack.c.h.b16 %v1423
    %v1509 = vunpack.c.l.b16 %v1424
    %v1510 = vunpack.c.h.b16 %v1424
    %v1511 = vunpack.c.l.b16 %v1425
    %v1512 = vunpack.c.h.b16 %v1425
    %v1513 = vunpack.c.l.b16 %v1426
    %v1514 = vunpack.c.h.b16 %v1426
    %v1515 = vunpack.c.l.b16 %v1427
    %v1516 = vunpack.c.h.b16 %v1427
    %v1517 = vunpack.c.l.b16 %v1428
    %v1518 = vunpack.c.h.b16 %v1428
    %v1519 = vunpack.c.l.b16 %v1429
    %v1520 = vunpack.c.h.b16 %v1429
    %v1521 = vunpack.c.l.b16 %v1430
    %v1522 = vunpack.c.h.b16 %v1430
    %v1523 = vunpack.c.l.b16 %v1431
    %v1524 = vunpack.c.h.b16 %v1431
    %v1525 = vunpack.c.l.b16 %v1432
    %v1526 = vunpack.c.h.b16 %v1432
    %v1527 = vunpack.c.l.b16 %v1433
    %v1528 = vunpack.c.h.b16 %v1433
    %v1529 = vunpack.c.l.b16 %v1434
    %v1530 = vunpack.c.h.b16 %v1434
    %v1531 = vpack.c.b16 %v1471, %v1467
    %v1532 = vpack.c.b16 %v1472, %v1468
    %v1533 = vpack.c.b16 %v1473, %v1469
    %v1534 = vpack.c.b16 %v1474, %v1470
    %v1535 = vpack.c.b16 %v1479, %v1475
    %v1536 = vpack.c.b16 %v1480, %v1476
    %v1537 = vpack.c.b16 %v1481, %v1477
    %v1538 = vpack.c.b16 %v1482, %v1478
    %v1539 = vpack.c.b16 %v1487, %v1483
    %v1540 = vpack.c.b16 %v1488, %v1484
    %v1541 = vpack.c.b16 %v1489, %v1485
    %v1542 = vpack.c.b16 %v1490, %v1486
    %v1543 = vpack.c.b16 %v1495, %v1491
    %v1544 = vpack.c.b16 %v1496, %v1492
    %v1545 = vpack.c.b16 %v1497, %v1493
    %v1546 = vpack.c.b16 %v1498, %v1494
    %v1547 = vpack.c.b16 %v1503, %v1499
    %v1548 = vpack.c.b16 %v1504, %v1500
    %v1549 = vpack.c.b16 %v1505, %v1501
    %v1550 = vpack.c.b16 %v1506, %v1502
    %v1551 = vpack.c.b16 %v1511, %v1507
    %v1552 = vpack.c.b16 %v1512, %v1508
    %v1553 = vpack.c.b16 %v1513, %v1509
    %v1554 = vpack.c.b16 %v1514, %v1510
    %v1555 = vpack.c.b16 %v1519, %v1515
    %v1556 = vpack.c.b16 %v1520, %v1516
    %v1557 = vpack.c.b16 %v1521, %v1517
    %v1558 = vpack.c.b16 %v1522, %v1518
    %v1559 = vpack.c.b16 %v1527, %v1523
    %v1560 = vpack.c.b16 %v1528, %v1524
    %v1561 = vpack.c.b16 %v1529, %v1525
    %v1562 = vpack.c.b16 %v1530, %v1526
    %1595 = vmatpush.bf16.msra.mxu0 %v1559
    %1596 = vmatpush.bf16.msra.mxu0 %v1555
    %1597 = vmatpush.bf16.msra.mxu0 %v1551
    %1598 = vmatpush.bf16.msra.mxu0 %v1547
    %1599 = vmatpush.bf16.msra.mxu0 %v1543
    %1600 = vmatpush.bf16.msra.mxu0 %v1539
    %1601 = vmatpush.bf16.msra.mxu0 %v1535
    %1602 = vmatpush.bf16.msra.mxu0 %v1531
    %1603 = vmatmul.bf16.gmra.mxu0 %v1402
    %v1604 = vpop.f32.mrf.mxu0
    %v1605 = vadd.f32 0.0, %v1604
    %v1606 = vpop.f32.mrf.mxu0
    %1607 = vdwg.mxu0
    %1608 = vmatpush.bf16.msra.mxu0 %v1560
    %1609 = vmatpush.bf16.msra.mxu0 %v1556
    %1610 = vmatpush.bf16.msra.mxu0 %v1552
    %1611 = vmatpush.bf16.msra.mxu0 %v1548
    %1612 = vmatpush.bf16.msra.mxu0 %v1544
    %1613 = vmatpush.bf16.msra.mxu0 %v1540
    %1614 = vmatpush.bf16.msra.mxu0 %v1536
    %1615 = vmatpush.bf16.msra.mxu0 %v1532
    %1616 = vmatmul.bf16.gmra.mxu0 %v1402
    %v1617 = vpop.f32.mrf.mxu0
    %v1618 = vadd.f32 0.0, %v1617
    %v1619 = vpop.f32.mrf.mxu0
    %1620 = vdwg.mxu0
    %1621 = vmatpush.bf16.msra.mxu0 %v1561
    %1622 = vmatpush.bf16.msra.mxu0 %v1557
    %1623 = vmatpush.bf16.msra.mxu0 %v1553
    %1624 = vmatpush.bf16.msra.mxu0 %v1549
    %1625 = vmatpush.bf16.msra.mxu0 %v1545
    %1626 = vmatpush.bf16.msra.mxu0 %v1541
    %1627 = vmatpush.bf16.msra.mxu0 %v1537
    %1628 = vmatpush.bf16.msra.mxu0 %v1533
    %1629 = vmatmul.bf16.gmra.mxu0 %v1402
    %v1630 = vpop.f32.mrf.mxu0
    %v1631 = vadd.f32 0.0, %v1630
    %v1632 = vpop.f32.mrf.mxu0
    %1633 = vdwg.mxu0
    %1634 = vmatpush.bf16.msra.mxu0 %v1562
    %1635 = vmatpush.bf16.msra.mxu0 %v1558
    %1636 = vmatpush.bf16.msra.mxu0 %v1554
    %1637 = vmatpush.bf16.msra.mxu0 %v1550
    %1638 = vmatpush.bf16.msra.mxu0 %v1546
    %1639 = vmatpush.bf16.msra.mxu0 %v1542
    %1640 = vmatpush.bf16.msra.mxu0 %v1538
    %1641 = vmatpush.bf16.msra.mxu0 %v1534
    %1642 = vmatmul.bf16.gmra.mxu0 %v1402
    %v1643 = vpop.f32.mrf.mxu0
    %v1644 = vadd.f32 0.0, %v1643
    %v1645 = vpop.f32.mrf.mxu0
    %1646 = vdwg.mxu0
    %v1647 = vadd.f32 %v1398, %v1605
    %v1648 = vadd.f32 %v1399, %v1618
    %v1649 = vadd.f32 %v1400, %v1631
    %v1650 = vadd.f32 %v1401, %v1644
    %v1651 = vmul.f32 %v1647, 0.5
    %v1652 = vtanh.pop %v1651
    %v1653 = vadd.f32 %v1652, 1.0
    %v1654 = vmul.f32 %v1653, 0.5
    %v1655 = vmul.f32 %v1648, 0.5
    %v1656 = vtanh.pop %v1655
    %v1657 = vadd.f32 %v1656, 1.0
    %v1658 = vmul.f32 %v1657, 0.5
    %v1659 = vtanh.pop %v1649
    %v1660 = vmul.f32 %v1650, 0.5
    %v1661 = vtanh.pop %v1660
    %v1662 = vadd.f32 %v1661, 1.0
    %v1663 = vmul.f32 %v1662, 0.5
    %v1664 = vld [vmem:[#allocation3] sm:$0xff]
    %v1665 = vmul.f32 %v1658, %v1664
    %v1666 = vmul.f32 %v1654, %v1659
    %v1667 = vadd.f32 %v1665, %v1666
    %v1668 = vtanh.pop %v1667
    %v1669 = vmul.f32 %v1663, %v1668
    %1670 = vst [vmem:[#allocation3] sm:$0xff] %v1667
    %1671 = vst [vmem:[#allocation2] sm:$0xff] %v1669
    %v1672 = vpack.c.bf16 %v1669, %v1669
    %s1673 = scalar_lea.vmem [#allocation4], 16
    %1674 = vst [vmem:[%s1673] sm:$0xf] %v1672
    %v1675 = vld [vmem:[#allocation2] sm:$0xff]
    %s1676 = scalar_lea.vmem [#allocation5], 160
    %v1677 = vld [vmem:[%s1676] sm:$0xff]
    %v1678 = vld [vmem:[%s1676 + $0x8] sm:$0xff]
    %v1679 = vld [vmem:[%s1676 + $0x10] sm:$0xff]
    %v1680 = vld [vmem:[%s1676 + $0x18] sm:$0xff]
    %v1681 = vpack.c.bf16 %v1675, %v1675
    %v1682 = vld [vmem:[#allocation6] sm:$0xff]
    %v1683 = vld [vmem:[#allocation6 + $0x8] sm:$0xff]
    %v1684 = vld [vmem:[#allocation6 + $0x10] sm:$0xff]
    %v1685 = vld [vmem:[#allocation6 + $0x18] sm:$0xff]
    %v1686 = vld [vmem:[#allocation6 + $0x20] sm:$0xff]
    %v1687 = vld [vmem:[#allocation6 + $0x28] sm:$0xff]
    %v1688 = vld [vmem:[#allocation6 + $0x30] sm:$0xff]
    %v1689 = vld [vmem:[#allocation6 + $0x38] sm:$0xff]
    %v1690 = vld [vmem:[#allocation6 + $0x40] sm:$0xff]
    %v1691 = vld [vmem:[#allocation6 + $0x48] sm:$0xff]
    %v1692 = vld [vmem:[#allocation6 + $0x50] sm:$0xff]
    %v1693 = vld [vmem:[#allocation6 + $0x58] sm:$0xff]
    %v1694 = vld [vmem:[#allocation6 + $0x60] sm:$0xff]
    %v1695 = vld [vmem:[#allocation6 + $0x68] sm:$0xff]
    %v1696 = vld [vmem:[#allocation6 + $0x70] sm:$0xff]
    %v1697 = vld [vmem:[#allocation6 + $0x78] sm:$0xff]
    %v1698 = vld [vmem:[#allocation6 + $0x80] sm:$0xff]
    %v1699 = vld [vmem:[#allocation6 + $0x88] sm:$0xff]
    %v1700 = vld [vmem:[#allocation6 + $0x90] sm:$0xff]
    %v1701 = vld [vmem:[#allocation6 + $0x98] sm:$0xff]
    %v1702 = vld [vmem:[#allocation6 + $0xa0] sm:$0xff]
    %v1703 = vld [vmem:[#allocation6 + $0xa8] sm:$0xff]
    %v1704 = vld [vmem:[#allocation6 + $0xb0] sm:$0xff]
    %v1705 = vld [vmem:[#allocation6 + $0xb8] sm:$0xff]
    %v1706 = vld [vmem:[#allocation6 + $0xc0] sm:$0xff]
    %v1707 = vld [vmem:[#allocation6 + $0xc8] sm:$0xff]
    %v1708 = vld [vmem:[#allocation6 + $0xd0] sm:$0xff]
    %v1709 = vld [vmem:[#allocation6 + $0xd8] sm:$0xff]
    %v1710 = vld [vmem:[#allocation6 + $0xe0] sm:$0xff]
    %v1711 = vld [vmem:[#allocation6 + $0xe8] sm:$0xff]
    %v1712 = vld [vmem:[#allocation6 + $0xf0] sm:$0xff]
    %v1713 = vld [vmem:[#allocation6 + $0xf8] sm:$0xff]
    %v1746 = vunpack.c.l.b16 %v1682
    %v1747 = vunpack.c.h.b16 %v1682
    %v1748 = vunpack.c.l.b16 %v1683
    %v1749 = vunpack.c.h.b16 %v1683
    %v1750 = vunpack.c.l.b16 %v1684
    %v1751 = vunpack.c.h.b16 %v1684
    %v1752 = vunpack.c.l.b16 %v1685
    %v1753 = vunpack.c.h.b16 %v1685
    %v1754 = vunpack.c.l.b16 %v1686
    %v1755 = vunpack.c.h.b16 %v1686
    %v1756 = vunpack.c.l.b16 %v1687
    %v1757 = vunpack.c.h.b16 %v1687
    %v1758 = vunpack.c.l.b16 %v1688
    %v1759 = vunpack.c.h.b16 %v1688
    %v1760 = vunpack.c.l.b16 %v1689
    %v1761 = vunpack.c.h.b16 %v1689
    %v1762 = vunpack.c.l.b16 %v1690
    %v1763 = vunpack.c.h.b16 %v1690
    %v1764 = vunpack.c.l.b16 %v1691
    %v1765 = vunpack.c.h.b16 %v1691
    %v1766 = vunpack.c.l.b16 %v1692
    %v1767 = vunpack.c.h.b16 %v1692
    %v1768 = vunpack.c.l.b16 %v1693
    %v1769 = vunpack.c.h.b16 %v1693
    %v1770 = vunpack.c.l.b16 %v1694
    %v1771 = vunpack.c.h.b16 %v1694
    %v1772 = vunpack.c.l.b16 %v1695
    %v1773 = vunpack.c.h.b16 %v1695
    %v1774 = vunpack.c.l.b16 %v1696
    %v1775 = vunpack.c.h.b16 %v1696
    %v1776 = vunpack.c.l.b16 %v1697
    %v1777 = vunpack.c.h.b16 %v1697
    %v1778 = vunpack.c.l.b16 %v1698
    %v1779 = vunpack.c.h.b16 %v1698
    %v1780 = vunpack.c.l.b16 %v1699
    %v1781 = vunpack.c.h.b16 %v1699
    %v1782 = vunpack.c.l.b16 %v1700
    %v1783 = vunpack.c.h.b16 %v1700
    %v1784 = vunpack.c.l.b16 %v1701
    %v1785 = vunpack.c.h.b16 %v1701
    %v1786 = vunpack.c.l.b16 %v1702
    %v1787 = vunpack.c.h.b16 %v1702
    %v1788 = vunpack.c.l.b16 %v1703
    %v1789 = vunpack.c.h.b16 %v1703
    %v1790 = vunpack.c.l.b16 %v1704
    %v1791 = vunpack.c.h.b16 %v1704
    %v1792 = vunpack.c.l.b16 %v1705
    %v1793 = vunpack.c.h.b16 %v1705
    %v1794 = vunpack.c.l.b16 %v1706
    %v1795 = vunpack.c.h.b16 %v1706
    %v1796 = vunpack.c.l.b16 %v1707
    %v1797 = vunpack.c.h.b16 %v1707
    %v1798 = vunpack.c.l.b16 %v1708
    %v1799 = vunpack.c.h.b16 %v1708
    %v1800 = vunpack.c.l.b16 %v1709
    %v1801 = vunpack.c.h.b16 %v1709
    %v1802 = vunpack.c.l.b16 %v1710
    %v1803 = vunpack.c.h.b16 %v1710
    %v1804 = vunpack.c.l.b16 %v1711
    %v1805 = vunpack.c.h.b16 %v1711
    %v1806 = vunpack.c.l.b16 %v1712
    %v1807 = vunpack.c.h.b16 %v1712
    %v1808 = vunpack.c.l.b16 %v1713
    %v1809 = vunpack.c.h.b16 %v1713
    %v1810 = vpack.c.b16 %v1750, %v1746
    %v1811 = vpack.c.b16 %v1751, %v1747
    %v1812 = vpack.c.b16 %v1752, %v1748
    %v1813 = vpack.c.b16 %v1753, %v1749
    %v1814 = vpack.c.b16 %v1758, %v1754
    %v1815 = vpack.c.b16 %v1759, %v1755
    %v1816 = vpack.c.b16 %v1760, %v1756
    %v1817 = vpack.c.b16 %v1761, %v1757
    %v1818 = vpack.c.b16 %v1766, %v1762
    %v1819 = vpack.c.b16 %v1767, %v1763
    %v1820 = vpack.c.b16 %v1768, %v1764
    %v1821 = vpack.c.b16 %v1769, %v1765
    %v1822 = vpack.c.b16 %v1774, %v1770
    %v1823 = vpack.c.b16 %v1775, %v1771
    %v1824 = vpack.c.b16 %v1776, %v1772
    %v1825 = vpack.c.b16 %v1777, %v1773
    %v1826 = vpack.c.b16 %v1782, %v1778
    %v1827 = vpack.c.b16 %v1783, %v1779
    %v1828 = vpack.c.b16 %v1784, %v1780
    %v1829 = vpack.c.b16 %v1785, %v1781
    %v1830 = vpack.c.b16 %v1790, %v1786
    %v1831 = vpack.c.b16 %v1791, %v1787
    %v1832 = vpack.c.b16 %v1792, %v1788
    %v1833 = vpack.c.b16 %v1793, %v1789
    %v1834 = vpack.c.b16 %v1798, %v1794
    %v1835 = vpack.c.b16 %v1799, %v1795
    %v1836 = vpack.c.b16 %v1800, %v1796
    %v1837 = vpack.c.b16 %v1801, %v1797
    %v1838 = vpack.c.b16 %v1806, %v1802
    %v1839 = vpack.c.b16 %v1807, %v1803
    %v1840 = vpack.c.b16 %v1808, %v1804
    %v1841 = vpack.c.b16 %v1809, %v1805
    %1874 = vmatpush.bf16.msra.mxu0 %v1838
    %1875 = vmatpush.bf16.msra.mxu0 %v1834
    %1876 = vmatpush.bf16.msra.mxu0 %v1830
    %1877 = vmatpush.bf16.msra.mxu0 %v1826
    %1878 = vmatpush.bf16.msra.mxu0 %v1822
    %1879 = vmatpush.bf16.msra.mxu0 %v1818
    %1880 = vmatpush.bf16.msra.mxu0 %v1814
    %1881 = vmatpush.bf16.msra.mxu0 %v1810
    %1882 = vmatmul.bf16.gmra.mxu0 %v1681
    %v1883 = vpop.f32.mrf.mxu0
    %v1884 = vadd.f32 0.0, %v1883
    %v1885 = vpop.f32.mrf.mxu0
    %1886 = vdwg.mxu0
    %1887 = vmatpush.bf16.msra.mxu0 %v1839
    %1888 = vmatpush.bf16.msra.mxu0 %v1835
    %1889 = vmatpush.bf16.msra.mxu0 %v1831
    %1890 = vmatpush.bf16.msra.mxu0 %v1827
    %1891 = vmatpush.bf16.msra.mxu0 %v1823
    %1892 = vmatpush.bf16.msra.mxu0 %v1819
    %1893 = vmatpush.bf16.msra.mxu0 %v1815
    %1894 = vmatpush.bf16.msra.mxu0 %v1811
    %1895 = vmatmul.bf16.gmra.mxu0 %v1681
    %v1896 = vpop.f32.mrf.mxu0
    %v1897 = vadd.f32 0.0, %v1896
    %v1898 = vpop.f32.mrf.mxu0
    %1899 = vdwg.mxu0
    %1900 = vmatpush.bf16.msra.mxu0 %v1840
    %1901 = vmatpush.bf16.msra.mxu0 %v1836
    %1902 = vmatpush.bf16.msra.mxu0 %v1832
    %1903 = vmatpush.bf16.msra.mxu0 %v1828
    %1904 = vmatpush.bf16.msra.mxu0 %v1824
    %1905 = vmatpush.bf16.msra.mxu0 %v1820
    %1906 = vmatpush.bf16.msra.mxu0 %v1816
    %1907 = vmatpush.bf16.msra.mxu0 %v1812
    %1908 = vmatmul.bf16.gmra.mxu0 %v1681
    %v1909 = vpop.f32.mrf.mxu0
    %v1910 = vadd.f32 0.0, %v1909
    %v1911 = vpop.f32.mrf.mxu0
    %1912 = vdwg.mxu0
    %1913 = vmatpush.bf16.msra.mxu0 %v1841
    %1914 = vmatpush.bf16.msra.mxu0 %v1837
    %1915 = vmatpush.bf16.msra.mxu0 %v1833
    %1916 = vmatpush.bf16.msra.mxu0 %v1829
    %1917 = vmatpush.bf16.msra.mxu0 %v1825
    %1918 = vmatpush.bf16.msra.mxu0 %v1821
    %1919 = vmatpush.bf16.msra.mxu0 %v1817
    %1920 = vmatpush.bf16.msra.mxu0 %v1813
    %1921 = vmatmul.bf16.gmra.mxu0 %v1681
    %v1922 = vpop.f32.mrf.mxu0
    %v1923 = vadd.f32 0.0, %v1922
    %v1924 = vpop.f32.mrf.mxu0
    %1925 = vdwg.mxu0
    %v1926 = vadd.f32 %v1677, %v1884
    %v1927 = vadd.f32 %v1678, %v1897
    %v1928 = vadd.f32 %v1679, %v1910
    %v1929 = vadd.f32 %v1680, %v1923
    %v1930 = vmul.f32 %v1926, 0.5
    %v1931 = vtanh.pop %v1930
    %v1932 = vadd.f32 %v1931, 1.0
    %v1933 = vmul.f32 %v1932, 0.5
    %v1934 = vmul.f32 %v1927, 0.5
    %v1935 = vtanh.pop %v1934
    %v1936 = vadd.f32 %v1935, 1.0
    %v1937 = vmul.f32 %v1936, 0.5
    %v1938 = vtanh.pop %v1928
    %v1939 = vmul.f32 %v1929, 0.5
    %v1940 = vtanh.pop %v1939
    %v1941 = vadd.f32 %v1940, 1.0
    %v1942 = vmul.f32 %v1941, 0.5
    %v1943 = vld [vmem:[#allocation3] sm:$0xff]
    %v1944 = vmul.f32 %v1937, %v1943
    %v1945 = vmul.f32 %v1933, %v1938
    %v1946 = vadd.f32 %v1944, %v1945
    %v1947 = vtanh.pop %v1946
    %v1948 = vmul.f32 %v1942, %v1947
    %1949 = vst [vmem:[#allocation3] sm:$0xff] %v1946
    %1950 = vst [vmem:[#allocation2] sm:$0xff] %v1948
    %v1951 = vpack.c.bf16 %v1948, %v1948
    %s1952 = scalar_lea.vmem [#allocation4], 20
    %1953 = vst [vmem:[%s1952] sm:$0xf] %v1951
    %v1954 = vld [vmem:[#allocation2] sm:$0xff]
    %s1955 = scalar_lea.vmem [#allocation5], 192
    %v1956 = vld [vmem:[%s1955] sm:$0xff]
    %v1957 = vld [vmem:[%s1955 + $0x8] sm:$0xff]
    %v1958 = vld [vmem:[%s1955 + $0x10] sm:$0xff]
    %v1959 = vld [vmem:[%s1955 + $0x18] sm:$0xff]
    %v1960 = vpack.c.bf16 %v1954, %v1954
    %v1961 = vld [vmem:[#allocation6] sm:$0xff]
    %v1962 = vld [vmem:[#allocation6 + $0x8] sm:$0xff]
    %v1963 = vld [vmem:[#allocation6 + $0x10] sm:$0xff]
    %v1964 = vld [vmem:[#allocation6 + $0x18] sm:$0xff]
    %v1965 = vld [vmem:[#allocation6 + $0x20] sm:$0xff]
    %v1966 = vld [vmem:[#allocation6 + $0x28] sm:$0xff]
    %v1967 = vld [vmem:[#allocation6 + $0x30] sm:$0xff]
    %v1968 = vld [vmem:[#allocation6 + $0x38] sm:$0xff]
    %v1969 = vld [vmem:[#allocation6 + $0x40] sm:$0xff]
    %v1970 = vld [vmem:[#allocation6 + $0x48] sm:$0xff]
    %v1971 = vld [vmem:[#allocation6 + $0x50] sm:$0xff]
    %v1972 = vld [vmem:[#allocation6 + $0x58] sm:$0xff]
    %v1973 = vld [vmem:[#allocation6 + $0x60] sm:$0xff]
    %v1974 = vld [vmem:[#allocation6 + $0x68] sm:$0xff]
    %v1975 = vld [vmem:[#allocation6 + $0x70] sm:$0xff]
    %v1976 = vld [vmem:[#allocation6 + $0x78] sm:$0xff]
    %v1977 = vld [vmem:[#allocation6 + $0x80] sm:$0xff]
    %v1978 = vld [vmem:[#allocation6 + $0x88] sm:$0xff]
    %v1979 = vld [vmem:[#allocation6 + $0x90] sm:$0xff]
    %v1980 = vld [vmem:[#allocation6 + $0x98] sm:$0xff]
    %v1981 = vld [vmem:[#allocation6 + $0xa0] sm:$0xff]
    %v1982 = vld [vmem:[#allocation6 + $0xa8] sm:$0xff]
    %v1983 = vld [vmem:[#allocation6 + $0xb0] sm:$0xff]
    %v1984 = vld [vmem:[#allocation6 + $0xb8] sm:$0xff]
    %v1985 = vld [vmem:[#allocation6 + $0xc0] sm:$0xff]
    %v1986 = vld [vmem:[#allocation6 + $0xc8] sm:$0xff]
    %v1987 = vld [vmem:[#allocation6 + $0xd0] sm:$0xff]
    %v1988 = vld [vmem:[#allocation6 + $0xd8] sm:$0xff]
    %v1989 = vld [vmem:[#allocation6 + $0xe0] sm:$0xff]
    %v1990 = vld [vmem:[#allocation6 + $0xe8] sm:$0xff]
    %v1991 = vld [vmem:[#allocation6 + $0xf0] sm:$0xff]
    %v1992 = vld [vmem:[#allocation6 + $0xf8] sm:$0xff]
    %v2025 = vunpack.c.l.b16 %v1961
    %v2026 = vunpack.c.h.b16 %v1961
    %v2027 = vunpack.c.l.b16 %v1962
    %v2028 = vunpack.c.h.b16 %v1962
    %v2029 = vunpack.c.l.b16 %v1963
    %v2030 = vunpack.c.h.b16 %v1963
    %v2031 = vunpack.c.l.b16 %v1964
    %v2032 = vunpack.c.h.b16 %v1964
    %v2033 = vunpack.c.l.b16 %v1965
    %v2034 = vunpack.c.h.b16 %v1965
    %v2035 = vunpack.c.l.b16 %v1966
    %v2036 = vunpack.c.h.b16 %v1966
    %v2037 = vunpack.c.l.b16 %v1967
    %v2038 = vunpack.c.h.b16 %v1967
    %v2039 = vunpack.c.l.b16 %v1968
    %v2040 = vunpack.c.h.b16 %v1968
    %v2041 = vunpack.c.l.b16 %v1969
    %v2042 = vunpack.c.h.b16 %v1969
    %v2043 = vunpack.c.l.b16 %v1970
    %v2044 = vunpack.c.h.b16 %v1970
    %v2045 = vunpack.c.l.b16 %v1971
    %v2046 = vunpack.c.h.b16 %v1971
    %v2047 = vunpack.c.l.b16 %v1972
    %v2048 = vunpack.c.h.b16 %v1972
    %v2049 = vunpack.c.l.b16 %v1973
    %v2050 = vunpack.c.h.b16 %v1973
    %v2051 = vunpack.c.l.b16 %v1974
    %v2052 = vunpack.c.h.b16 %v1974
    %v2053 = vunpack.c.l.b16 %v1975
    %v2054 = vunpack.c.h.b16 %v1975
    %v2055 = vunpack.c.l.b16 %v1976
    %v2056 = vunpack.c.h.b16 %v1976
    %v2057 = vunpack.c.l.b16 %v1977
    %v2058 = vunpack.c.h.b16 %v1977
    %v2059 = vunpack.c.l.b16 %v1978
    %v2060 = vunpack.c.h.b16 %v1978
    %v2061 = vunpack.c.l.b16 %v1979
    %v2062 = vunpack.c.h.b16 %v1979
    %v2063 = vunpack.c.l.b16 %v1980
    %v2064 = vunpack.c.h.b16 %v1980
    %v2065 = vunpack.c.l.b16 %v1981
    %v2066 = vunpack.c.h.b16 %v1981
    %v2067 = vunpack.c.l.b16 %v1982
    %v2068 = vunpack.c.h.b16 %v1982
    %v2069 = vunpack.c.l.b16 %v1983
    %v2070 = vunpack.c.h.b16 %v1983
    %v2071 = vunpack.c.l.b16 %v1984
    %v2072 = vunpack.c.h.b16 %v1984
    %v2073 = vunpack.c.l.b16 %v1985
    %v2074 = vunpack.c.h.b16 %v1985
    %v2075 = vunpack.c.l.b16 %v1986
    %v2076 = vunpack.c.h.b16 %v1986
    %v2077 = vunpack.c.l.b16 %v1987
    %v2078 = vunpack.c.h.b16 %v1987
    %v2079 = vunpack.c.l.b16 %v1988
    %v2080 = vunpack.c.h.b16 %v1988
    %v2081 = vunpack.c.l.b16 %v1989
    %v2082 = vunpack.c.h.b16 %v1989
    %v2083 = vunpack.c.l.b16 %v1990
    %v2084 = vunpack.c.h.b16 %v1990
    %v2085 = vunpack.c.l.b16 %v1991
    %v2086 = vunpack.c.h.b16 %v1991
    %v2087 = vunpack.c.l.b16 %v1992
    %v2088 = vunpack.c.h.b16 %v1992
    %v2089 = vpack.c.b16 %v2029, %v2025
    %v2090 = vpack.c.b16 %v2030, %v2026
    %v2091 = vpack.c.b16 %v2031, %v2027
    %v2092 = vpack.c.b16 %v2032, %v2028
    %v2093 = vpack.c.b16 %v2037, %v2033
    %v2094 = vpack.c.b16 %v2038, %v2034
    %v2095 = vpack.c.b16 %v2039, %v2035
    %v2096 = vpack.c.b16 %v2040, %v2036
    %v2097 = vpack.c.b16 %v2045, %v2041
    %v2098 = vpack.c.b16 %v2046, %v2042
    %v2099 = vpack.c.b16 %v2047, %v2043
    %v2100 = vpack.c.b16 %v2048, %v2044
    %v2101 = vpack.c.b16 %v2053, %v2049
    %v2102 = vpack.c.b16 %v2054, %v2050
    %v2103 = vpack.c.b16 %v2055, %v2051
    %v2104 = vpack.c.b16 %v2056, %v2052
    %v2105 = vpack.c.b16 %v2061, %v2057
    %v2106 = vpack.c.b16 %v2062, %v2058
    %v2107 = vpack.c.b16 %v2063, %v2059
    %v2108 = vpack.c.b16 %v2064, %v2060
    %v2109 = vpack.c.b16 %v2069, %v2065
    %v2110 = vpack.c.b16 %v2070, %v2066
    %v2111 = vpack.c.b16 %v2071, %v2067
    %v2112 = vpack.c.b16 %v2072, %v2068
    %v2113 = vpack.c.b16 %v2077, %v2073
    %v2114 = vpack.c.b16 %v2078, %v2074
    %v2115 = vpack.c.b16 %v2079, %v2075
    %v2116 = vpack.c.b16 %v2080, %v2076
    %v2117 = vpack.c.b16 %v2085, %v2081
    %v2118 = vpack.c.b16 %v2086, %v2082
    %v2119 = vpack.c.b16 %v2087, %v2083
    %v2120 = vpack.c.b16 %v2088, %v2084
    %2153 = vmatpush.bf16.msra.mxu0 %v2117
    %2154 = vmatpush.bf16.msra.mxu0 %v2113
    %2155 = vmatpush.bf16.msra.mxu0 %v2109
    %2156 = vmatpush.bf16.msra.mxu0 %v2105
    %2157 = vmatpush.bf16.msra.mxu0 %v2101
    %2158 = vmatpush.bf16.msra.mxu0 %v2097
    %2159 = vmatpush.bf16.msra.mxu0 %v2093
    %2160 = vmatpush.bf16.msra.mxu0 %v2089
    %2161 = vmatmul.bf16.gmra.mxu0 %v1960
    %v2162 = vpop.f32.mrf.mxu0
    %v2163 = vadd.f32 0.0, %v2162
    %v2164 = vpop.f32.mrf.mxu0
    %2165 = vdwg.mxu0
    %2166 = vmatpush.bf16.msra.mxu0 %v2118
    %2167 = vmatpush.bf16.msra.mxu0 %v2114
    %2168 = vmatpush.bf16.msra.mxu0 %v2110
    %2169 = vmatpush.bf16.msra.mxu0 %v2106
    %2170 = vmatpush.bf16.msra.mxu0 %v2102
    %2171 = vmatpush.bf16.msra.mxu0 %v2098
    %2172 = vmatpush.bf16.msra.mxu0 %v2094
    %2173 = vmatpush.bf16.msra.mxu0 %v2090
    %2174 = vmatmul.bf16.gmra.mxu0 %v1960
    %v2175 = vpop.f32.mrf.mxu0
    %v2176 = vadd.f32 0.0, %v2175
    %v2177 = vpop.f32.mrf.mxu0
    %2178 = vdwg.mxu0
    %2179 = vmatpush.bf16.msra.mxu0 %v2119
    %2180 = vmatpush.bf16.msra.mxu0 %v2115
    %2181 = vmatpush.bf16.msra.mxu0 %v2111
    %2182 = vmatpush.bf16.msra.mxu0 %v2107
    %2183 = vmatpush.bf16.msra.mxu0 %v2103
    %2184 = vmatpush.bf16.msra.mxu0 %v2099
    %2185 = vmatpush.bf16.msra.mxu0 %v2095
    %2186 = vmatpush.bf16.msra.mxu0 %v2091
    %2187 = vmatmul.bf16.gmra.mxu0 %v1960
    %v2188 = vpop.f32.mrf.mxu0
    %v2189 = vadd.f32 0.0, %v2188
    %v2190 = vpop.f32.mrf.mxu0
    %2191 = vdwg.mxu0
    %2192 = vmatpush.bf16.msra.mxu0 %v2120
    %2193 = vmatpush.bf16.msra.mxu0 %v2116
    %2194 = vmatpush.bf16.msra.mxu0 %v2112
    %2195 = vmatpush.bf16.msra.mxu0 %v2108
    %2196 = vmatpush.bf16.msra.mxu0 %v2104
    %2197 = vmatpush.bf16.msra.mxu0 %v2100
    %2198 = vmatpush.bf16.msra.mxu0 %v2096
    %2199 = vmatpush.bf16.msra.mxu0 %v2092
    %2200 = vmatmul.bf16.gmra.mxu0 %v1960
    %v2201 = vpop.f32.mrf.mxu0
    %v2202 = vadd.f32 0.0, %v2201
    %v2203 = vpop.f32.mrf.mxu0
    %2204 = vdwg.mxu0
    %v2205 = vadd.f32 %v1956, %v2163
    %v2206 = vadd.f32 %v1957, %v2176
    %v2207 = vadd.f32 %v1958, %v2189
    %v2208 = vadd.f32 %v1959, %v2202
    %v2209 = vmul.f32 %v2205, 0.5
    %v2210 = vtanh.pop %v2209
    %v2211 = vadd.f32 %v2210, 1.0
    %v2212 = vmul.f32 %v2211, 0.5
    %v2213 = vmul.f32 %v2206, 0.5
    %v2214 = vtanh.pop %v2213
    %v2215 = vadd.f32 %v2214, 1.0
    %v2216 = vmul.f32 %v2215, 0.5
    %v2217 = vtanh.pop %v2207
    %v2218 = vmul.f32 %v2208, 0.5
    %v2219 = vtanh.pop %v2218
    %v2220 = vadd.f32 %v2219, 1.0
    %v2221 = vmul.f32 %v2220, 0.5
    %v2222 = vld [vmem:[#allocation3] sm:$0xff]
    %v2223 = vmul.f32 %v2216, %v2222
    %v2224 = vmul.f32 %v2212, %v2217
    %v2225 = vadd.f32 %v2223, %v2224
    %v2226 = vtanh.pop %v2225
    %v2227 = vmul.f32 %v2221, %v2226
    %2228 = vst [vmem:[#allocation3] sm:$0xff] %v2225
    %2229 = vst [vmem:[#allocation2] sm:$0xff] %v2227
    %v2230 = vpack.c.bf16 %v2227, %v2227
    %s2231 = scalar_lea.vmem [#allocation4], 24
    %2232 = vst [vmem:[%s2231] sm:$0xf] %v2230
    %v2233 = vld [vmem:[#allocation2] sm:$0xff]
    %s2234 = scalar_lea.vmem [#allocation5], 224
    %v2235 = vld [vmem:[%s2234] sm:$0xff]
    %v2236 = vld [vmem:[%s2234 + $0x8] sm:$0xff]
    %v2237 = vld [vmem:[%s2234 + $0x10] sm:$0xff]
    %v2238 = vld [vmem:[%s2234 + $0x18] sm:$0xff]
    %v2239 = vpack.c.bf16 %v2233, %v2233
    %v2240 = vld [vmem:[#allocation6] sm:$0xff]
    %v2241 = vld [vmem:[#allocation6 + $0x8] sm:$0xff]
    %v2242 = vld [vmem:[#allocation6 + $0x10] sm:$0xff]
    %v2243 = vld [vmem:[#allocation6 + $0x18] sm:$0xff]
    %v2244 = vld [vmem:[#allocation6 + $0x20] sm:$0xff]
    %v2245 = vld [vmem:[#allocation6 + $0x28] sm:$0xff]
    %v2246 = vld [vmem:[#allocation6 + $0x30] sm:$0xff]
    %v2247 = vld [vmem:[#allocation6 + $0x38] sm:$0xff]
    %v2248 = vld [vmem:[#allocation6 + $0x40] sm:$0xff]
    %v2249 = vld [vmem:[#allocation6 + $0x48] sm:$0xff]
    %v2250 = vld [vmem:[#allocation6 + $0x50] sm:$0xff]
    %v2251 = vld [vmem:[#allocation6 + $0x58] sm:$0xff]
    %v2252 = vld [vmem:[#allocation6 + $0x60] sm:$0xff]
    %v2253 = vld [vmem:[#allocation6 + $0x68] sm:$0xff]
    %v2254 = vld [vmem:[#allocation6 + $0x70] sm:$0xff]
    %v2255 = vld [vmem:[#allocation6 + $0x78] sm:$0xff]
    %v2256 = vld [vmem:[#allocation6 + $0x80] sm:$0xff]
    %v2257 = vld [vmem:[#allocation6 + $0x88] sm:$0xff]
    %v2258 = vld [vmem:[#allocation6 + $0x90] sm:$0xff]
    %v2259 = vld [vmem:[#allocation6 + $0x98] sm:$0xff]
    %v2260 = vld [vmem:[#allocation6 + $0xa0] sm:$0xff]
    %v2261 = vld [vmem:[#allocation6 + $0xa8] sm:$0xff]
    %v2262 = vld [vmem:[#allocation6 + $0xb0] sm:$0xff]
    %v2263 = vld [vmem:[#allocation6 + $0xb8] sm:$0xff]
    %v2264 = vld [vmem:[#allocation6 + $0xc0] sm:$0xff]
    %v2265 = vld [vmem:[#allocation6 + $0xc8] sm:$0xff]
    %v2266 = vld [vmem:[#allocation6 + $0xd0] sm:$0xff]
    %v2267 = vld [vmem:[#allocation6 + $0xd8] sm:$0xff]
    %v2268 = vld [vmem:[#allocation6 + $0xe0] sm:$0xff]
    %v2269 = vld [vmem:[#allocation6 + $0xe8] sm:$0xff]
    %v2270 = vld [vmem:[#allocation6 + $0xf0] sm:$0xff]
    %v2271 = vld [vmem:[#allocation6 + $0xf8] sm:$0xff]
    %v2304 = vunpack.c.l.b16 %v2240
    %v2305 = vunpack.c.h.b16 %v2240
    %v2306 = vunpack.c.l.b16 %v2241
    %v2307 = vunpack.c.h.b16 %v2241
    %v2308 = vunpack.c.l.b16 %v2242
    %v2309 = vunpack.c.h.b16 %v2242
    %v2310 = vunpack.c.l.b16 %v2243
    %v2311 = vunpack.c.h.b16 %v2243
    %v2312 = vunpack.c.l.b16 %v2244
    %v2313 = vunpack.c.h.b16 %v2244
    %v2314 = vunpack.c.l.b16 %v2245
    %v2315 = vunpack.c.h.b16 %v2245
    %v2316 = vunpack.c.l.b16 %v2246
    %v2317 = vunpack.c.h.b16 %v2246
    %v2318 = vunpack.c.l.b16 %v2247
    %v2319 = vunpack.c.h.b16 %v2247
    %v2320 = vunpack.c.l.b16 %v2248
    %v2321 = vunpack.c.h.b16 %v2248
    %v2322 = vunpack.c.l.b16 %v2249
    %v2323 = vunpack.c.h.b16 %v2249
    %v2324 = vunpack.c.l.b16 %v2250
    %v2325 = vunpack.c.h.b16 %v2250
    %v2326 = vunpack.c.l.b16 %v2251
    %v2327 = vunpack.c.h.b16 %v2251
    %v2328 = vunpack.c.l.b16 %v2252
    %v2329 = vunpack.c.h.b16 %v2252
    %v2330 = vunpack.c.l.b16 %v2253
    %v2331 = vunpack.c.h.b16 %v2253
    %v2332 = vunpack.c.l.b16 %v2254
    %v2333 = vunpack.c.h.b16 %v2254
    %v2334 = vunpack.c.l.b16 %v2255
    %v2335 = vunpack.c.h.b16 %v2255
    %v2336 = vunpack.c.l.b16 %v2256
    %v2337 = vunpack.c.h.b16 %v2256
    %v2338 = vunpack.c.l.b16 %v2257
    %v2339 = vunpack.c.h.b16 %v2257
    %v2340 = vunpack.c.l.b16 %v2258
    %v2341 = vunpack.c.h.b16 %v2258
    %v2342 = vunpack.c.l.b16 %v2259
    %v2343 = vunpack.c.h.b16 %v2259
    %v2344 = vunpack.c.l.b16 %v2260
    %v2345 = vunpack.c.h.b16 %v2260
    %v2346 = vunpack.c.l.b16 %v2261
    %v2347 = vunpack.c.h.b16 %v2261
    %v2348 = vunpack.c.l.b16 %v2262
    %v2349 = vunpack.c.h.b16 %v2262
    %v2350 = vunpack.c.l.b16 %v2263
    %v2351 = vunpack.c.h.b16 %v2263
    %v2352 = vunpack.c.l.b16 %v2264
    %v2353 = vunpack.c.h.b16 %v2264
    %v2354 = vunpack.c.l.b16 %v2265
    %v2355 = vunpack.c.h.b16 %v2265
    %v2356 = vunpack.c.l.b16 %v2266
    %v2357 = vunpack.c.h.b16 %v2266
    %v2358 = vunpack.c.l.b16 %v2267
    %v2359 = vunpack.c.h.b16 %v2267
    %v2360 = vunpack.c.l.b16 %v2268
    %v2361 = vunpack.c.h.b16 %v2268
    %v2362 = vunpack.c.l.b16 %v2269
    %v2363 = vunpack.c.h.b16 %v2269
    %v2364 = vunpack.c.l.b16 %v2270
    %v2365 = vunpack.c.h.b16 %v2270
    %v2366 = vunpack.c.l.b16 %v2271
    %v2367 = vunpack.c.h.b16 %v2271
    %v2368 = vpack.c.b16 %v2308, %v2304
    %v2369 = vpack.c.b16 %v2309, %v2305
    %v2370 = vpack.c.b16 %v2310, %v2306
    %v2371 = vpack.c.b16 %v2311, %v2307
    %v2372 = vpack.c.b16 %v2316, %v2312
    %v2373 = vpack.c.b16 %v2317, %v2313
    %v2374 = vpack.c.b16 %v2318, %v2314
    %v2375 = vpack.c.b16 %v2319, %v2315
    %v2376 = vpack.c.b16 %v2324, %v2320
    %v2377 = vpack.c.b16 %v2325, %v2321
    %v2378 = vpack.c.b16 %v2326, %v2322
    %v2379 = vpack.c.b16 %v2327, %v2323
    %v2380 = vpack.c.b16 %v2332, %v2328
    %v2381 = vpack.c.b16 %v2333, %v2329
    %v2382 = vpack.c.b16 %v2334, %v2330
    %v2383 = vpack.c.b16 %v2335, %v2331
    %v2384 = vpack.c.b16 %v2340, %v2336
    %v2385 = vpack.c.b16 %v2341, %v2337
    %v2386 = vpack.c.b16 %v2342, %v2338
    %v2387 = vpack.c.b16 %v2343, %v2339
    %v2388 = vpack.c.b16 %v2348, %v2344
    %v2389 = vpack.c.b16 %v2349, %v2345
    %v2390 = vpack.c.b16 %v2350, %v2346
    %v2391 = vpack.c.b16 %v2351, %v2347
    %v2392 = vpack.c.b16 %v2356, %v2352
    %v2393 = vpack.c.b16 %v2357, %v2353
    %v2394 = vpack.c.b16 %v2358, %v2354
    %v2395 = vpack.c.b16 %v2359, %v2355
    %v2396 = vpack.c.b16 %v2364, %v2360
    %v2397 = vpack.c.b16 %v2365, %v2361
    %v2398 = vpack.c.b16 %v2366, %v2362
    %v2399 = vpack.c.b16 %v2367, %v2363
    %2432 = vmatpush.bf16.msra.mxu0 %v2396
    %2433 = vmatpush.bf16.msra.mxu0 %v2392
    %2434 = vmatpush.bf16.msra.mxu0 %v2388
    %2435 = vmatpush.bf16.msra.mxu0 %v2384
    %2436 = vmatpush.bf16.msra.mxu0 %v2380
    %2437 = vmatpush.bf16.msra.mxu0 %v2376
    %2438 = vmatpush.bf16.msra.mxu0 %v2372
    %2439 = vmatpush.bf16.msra.mxu0 %v2368
    %2440 = vmatmul.bf16.gmra.mxu0 %v2239
    %v2441 = vpop.f32.mrf.mxu0
    %v2442 = vadd.f32 0.0, %v2441
    %v2443 = vpop.f32.mrf.mxu0
    %2444 = vdwg.mxu0
    %2445 = vmatpush.bf16.msra.mxu0 %v2397
    %2446 = vmatpush.bf16.msra.mxu0 %v2393
    %2447 = vmatpush.bf16.msra.mxu0 %v2389
    %2448 = vmatpush.bf16.msra.mxu0 %v2385
    %2449 = vmatpush.bf16.msra.mxu0 %v2381
    %2450 = vmatpush.bf16.msra.mxu0 %v2377
    %2451 = vmatpush.bf16.msra.mxu0 %v2373
    %2452 = vmatpush.bf16.msra.mxu0 %v2369
    %2453 = vmatmul.bf16.gmra.mxu0 %v2239
    %v2454 = vpop.f32.mrf.mxu0
    %v2455 = vadd.f32 0.0, %v2454
    %v2456 = vpop.f32.mrf.mxu0
    %2457 = vdwg.mxu0
    %2458 = vmatpush.bf16.msra.mxu0 %v2398
    %2459 = vmatpush.bf16.msra.mxu0 %v2394
    %2460 = vmatpush.bf16.msra.mxu0 %v2390
    %2461 = vmatpush.bf16.msra.mxu0 %v2386
    %2462 = vmatpush.bf16.msra.mxu0 %v2382
    %2463 = vmatpush.bf16.msra.mxu0 %v2378
    %2464 = vmatpush.bf16.msra.mxu0 %v2374
    %2465 = vmatpush.bf16.msra.mxu0 %v2370
    %2466 = vmatmul.bf16.gmra.mxu0 %v2239
    %v2467 = vpop.f32.mrf.mxu0
    %v2468 = vadd.f32 0.0, %v2467
    %v2469 = vpop.f32.mrf.mxu0
    %2470 = vdwg.mxu0
    %2471 = vmatpush.bf16.msra.mxu0 %v2399
    %2472 = vmatpush.bf16.msra.mxu0 %v2395
    %2473 = vmatpush.bf16.msra.mxu0 %v2391
    %2474 = vmatpush.bf16.msra.mxu0 %v2387
    %2475 = vmatpush.bf16.msra.mxu0 %v2383
    %2476 = vmatpush.bf16.msra.mxu0 %v2379
    %2477 = vmatpush.bf16.msra.mxu0 %v2375
    %2478 = vmatpush.bf16.msra.mxu0 %v2371
    %2479 = vmatmul.bf16.gmra.mxu0 %v2239
    %v2480 = vpop.f32.mrf.mxu0
    %v2481 = vadd.f32 0.0, %v2480
    %v2482 = vpop.f32.mrf.mxu0
    %2483 = vdwg.mxu0
    %v2484 = vadd.f32 %v2235, %v2442
    %v2485 = vadd.f32 %v2236, %v2455
    %v2486 = vadd.f32 %v2237, %v2468
    %v2487 = vadd.f32 %v2238, %v2481
    %v2488 = vmul.f32 %v2484, 0.5
    %v2489 = vtanh.pop %v2488
    %v2490 = vadd.f32 %v2489, 1.0
    %v2491 = vmul.f32 %v2490, 0.5
    %v2492 = vmul.f32 %v2485, 0.5
    %v2493 = vtanh.pop %v2492
    %v2494 = vadd.f32 %v2493, 1.0
    %v2495 = vmul.f32 %v2494, 0.5
    %v2496 = vtanh.pop %v2486
    %v2497 = vmul.f32 %v2487, 0.5
    %v2498 = vtanh.pop %v2497
    %v2499 = vadd.f32 %v2498, 1.0
    %v2500 = vmul.f32 %v2499, 0.5
    %v2501 = vld [vmem:[#allocation3] sm:$0xff]
    %v2502 = vmul.f32 %v2495, %v2501
    %v2503 = vmul.f32 %v2491, %v2496
    %v2504 = vadd.f32 %v2502, %v2503
    %v2505 = vtanh.pop %v2504
    %v2506 = vmul.f32 %v2500, %v2505
    %2507 = vst [vmem:[#allocation3] sm:$0xff] %v2504
    %2508 = vst [vmem:[#allocation2] sm:$0xff] %v2506
    %v2509 = vpack.c.bf16 %v2506, %v2506
    %s2510 = scalar_lea.vmem [#allocation4], 28
    %2511 = vst [vmem:[%s2510] sm:$0xf] %v2509
    %v2512 = vld [vmem:[#allocation4] sm:$0xf]
    %v2513 = vld [vmem:[#allocation4 + $0x4] sm:$0xf]
    %v2514 = vld [vmem:[#allocation4 + $0x8] sm:$0xf]
    %v2515 = vld [vmem:[#allocation4 + $0xc] sm:$0xf]
    %v2516 = vld [vmem:[#allocation4 + $0x10] sm:$0xf]
    %v2517 = vld [vmem:[#allocation4 + $0x14] sm:$0xf]
    %v2518 = vld [vmem:[#allocation4 + $0x18] sm:$0xf]
    %v2519 = vld [vmem:[#allocation4 + $0x1c] sm:$0xf]
    %v2520 = vld [vmem:[#allocation9] sm:$0xff]
    %v2521 = vld [vmem:[#allocation9 + $0x8] sm:$0xff]
    %v2522 = vld [vmem:[#allocation9 + $0x10] sm:$0xff]
    %v2523 = vld [vmem:[#allocation9 + $0x18] sm:$0xff]
    %v2524 = vld [vmem:[#allocation9 + $0x20] sm:$0xff]
    %v2525 = vld [vmem:[#allocation9 + $0x28] sm:$0xff]
    %v2526 = vld [vmem:[#allocation9 + $0x30] sm:$0xff]
    %v2527 = vld [vmem:[#allocation9 + $0x38] sm:$0xff]
    %v2528 = vld [vmem:[#allocation9 + $0x40] sm:$0xff]
    %v2529 = vld [vmem:[#allocation9 + $0x48] sm:$0xff]
    %v2530 = vld [vmem:[#allocation9 + $0x50] sm:$0xff]
    %v2531 = vld [vmem:[#allocation9 + $0x58] sm:$0xff]
    %v2532 = vld [vmem:[#allocation9 + $0x60] sm:$0xff]
    %v2533 = vld [vmem:[#allocation9 + $0x68] sm:$0xff]
    %v2534 = vld [vmem:[#allocation9 + $0x70] sm:$0xff]
    %v2535 = vld [vmem:[#allocation9 + $0x78] sm:$0xff]
    %v2536 = vld [vmem:[#allocation9 + $0x80] sm:$0xff]
    %v2537 = vld [vmem:[#allocation9 + $0x88] sm:$0xff]
    %v2538 = vld [vmem:[#allocation9 + $0x90] sm:$0xff]
    %v2539 = vld [vmem:[#allocation9 + $0x98] sm:$0xff]
    %v2540 = vld [vmem:[#allocation9 + $0xa0] sm:$0xff]
    %v2541 = vld [vmem:[#allocation9 + $0xa8] sm:$0xff]
    %v2542 = vld [vmem:[#allocation9 + $0xb0] sm:$0xff]
    %v2543 = vld [vmem:[#allocation9 + $0xb8] sm:$0xff]
    %v2544 = vld [vmem:[#allocation9 + $0xc0] sm:$0xff]
    %v2545 = vld [vmem:[#allocation9 + $0xc8] sm:$0xff]
    %v2546 = vld [vmem:[#allocation9 + $0xd0] sm:$0xff]
    %v2547 = vld [vmem:[#allocation9 + $0xd8] sm:$0xff]
    %v2548 = vld [vmem:[#allocation9 + $0xe0] sm:$0xff]
    %v2549 = vld [vmem:[#allocation9 + $0xe8] sm:$0xff]
    %v2550 = vld [vmem:[#allocation9 + $0xf0] sm:$0xff]
    %v2551 = vld [vmem:[#allocation9 + $0xf8] sm:$0xff]
    %v2552 = vld [vmem:[%s6] sm:$0xf]
    %v2554 = vperm.slane %v2552, 0
    %v2555 = vperm.slane %v2552, 1
    %v2556 = vperm.slane %v2552, 2
    %v2557 = vperm.slane %v2552, 3
    %v2570 = vunpack.c.l.b16 %v2512
    %v2571 = vunpack.c.l.b16 %v2513
    %v2572 = vunpack.c.l.b16 %v2514
    %v2573 = vunpack.c.l.b16 %v2515
    %v2574 = vunpack.c.l.b16 %v2516
    %v2575 = vunpack.c.l.b16 %v2517
    %v2576 = vunpack.c.l.b16 %v2518
    %v2577 = vunpack.c.l.b16 %v2519
    %v2578 = vpack.c.b16 %v2571, %v2570
    %v2579 = vpack.c.b16 %v2573, %v2572
    %v2580 = vpack.c.b16 %v2575, %v2574
    %v2581 = vpack.c.b16 %v2577, %v2576
    %v2618 = vunpack.c.l.b16 %v2520
    %v2619 = vunpack.c.h.b16 %v2520
    %v2620 = vunpack.c.l.b16 %v2521
    %v2621 = vunpack.c.h.b16 %v2521
    %v2622 = vunpack.c.l.b16 %v2522
    %v2623 = vunpack.c.h.b16 %v2522
    %v2624 = vunpack.c.l.b16 %v2523
    %v2625 = vunpack.c.h.b16 %v2523
    %v2626 = vunpack.c.l.b16 %v2524
    %v2627 = vunpack.c.h.b16 %v2524
    %v2628 = vunpack.c.l.b16 %v2525
    %v2629 = vunpack.c.h.b16 %v2525
    %v2630 = vunpack.c.l.b16 %v2526
    %v2631 = vunpack.c.h.b16 %v2526
    %v2632 = vunpack.c.l.b16 %v2527
    %v2633 = vunpack.c.h.b16 %v2527
    %v2634 = vunpack.c.l.b16 %v2528
    %v2635 = vunpack.c.h.b16 %v2528
    %v2636 = vunpack.c.l.b16 %v2529
    %v2637 = vunpack.c.h.b16 %v2529
    %v2638 = vunpack.c.l.b16 %v2530
    %v2639 = vunpack.c.h.b16 %v2530
    %v2640 = vunpack.c.l.b16 %v2531
    %v2641 = vunpack.c.h.b16 %v2531
    %v2642 = vunpack.c.l.b16 %v2532
    %v2643 = vunpack.c.h.b16 %v2532
    %v2644 = vunpack.c.l.b16 %v2533
    %v2645 = vunpack.c.h.b16 %v2533
    %v2646 = vunpack.c.l.b16 %v2534
    %v2647 = vunpack.c.h.b16 %v2534
    %v2648 = vunpack.c.l.b16 %v2535
    %v2649 = vunpack.c.h.b16 %v2535
    %v2650 = vunpack.c.l.b16 %v2536
    %v2651 = vunpack.c.h.b16 %v2536
    %v2652 = vunpack.c.l.b16 %v2537
    %v2653 = vunpack.c.h.b16 %v2537
    %v2654 = vunpack.c.l.b16 %v2538
    %v2655 = vunpack.c.h.b16 %v2538
    %v2656 = vunpack.c.l.b16 %v2539
    %v2657 = vunpack.c.h.b16 %v2539
    %v2658 = vunpack.c.l.b16 %v2540
    %v2659 = vunpack.c.h.b16 %v2540
    %v2660 = vunpack.c.l.b16 %v2541
    %v2661 = vunpack.c.h.b16 %v2541
    %v2662 = vunpack.c.l.b16 %v2542
    %v2663 = vunpack.c.h.b16 %v2542
    %v2664 = vunpack.c.l.b16 %v2543
    %v2665 = vunpack.c.h.b16 %v2543
    %v2666 = vunpack.c.l.b16 %v2544
    %v2667 = vunpack.c.h.b16 %v2544
    %v2668 = vunpack.c.l.b16 %v2545
    %v2669 = vunpack.c.h.b16 %v2545
    %v2670 = vunpack.c.l.b16 %v2546
    %v2671 = vunpack.c.h.b16 %v2546
    %v2672 = vunpack.c.l.b16 %v2547
    %v2673 = vunpack.c.h.b16 %v2547
    %v2674 = vunpack.c.l.b16 %v2548
    %v2675 = vunpack.c.h.b16 %v2548
    %v2676 = vunpack.c.l.b16 %v2549
    %v2677 = vunpack.c.h.b16 %v2549
    %v2678 = vunpack.c.l.b16 %v2550
    %v2679 = vunpack.c.h.b16 %v2550
    %v2680 = vunpack.c.l.b16 %v2551
    %v2681 = vunpack.c.h.b16 %v2551
    %v2682 = vpack.c.b16 %v2622, %v2618
    %v2683 = vpack.c.b16 %v2623, %v2619
    %v2684 = vpack.c.b16 %v2624, %v2620
    %v2685 = vpack.c.b16 %v2625, %v2621
    %v2686 = vpack.c.b16 %v2630, %v2626
    %v2687 = vpack.c.b16 %v2631, %v2627
    %v2688 = vpack.c.b16 %v2632, %v2628
    %v2689 = vpack.c.b16 %v2633, %v2629
    %v2690 = vpack.c.b16 %v2638, %v2634
    %v2691 = vpack.c.b16 %v2639, %v2635
    %v2692 = vpack.c.b16 %v2640, %v2636
    %v2693 = vpack.c.b16 %v2641, %v2637
    %v2694 = vpack.c.b16 %v2646, %v2642
    %v2695 = vpack.c.b16 %v2647, %v2643
    %v2696 = vpack.c.b16 %v2648, %v2644
    %v2697 = vpack.c.b16 %v2649, %v2645
    %v2698 = vpack.c.b16 %v2654, %v2650
    %v2699 = vpack.c.b16 %v2655, %v2651
    %v2700 = vpack.c.b16 %v2656, %v2652
    %v2701 = vpack.c.b16 %v2657, %v2653
    %v2702 = vpack.c.b16 %v2662, %v2658
    %v2703 = vpack.c.b16 %v2663, %v2659
    %v2704 = vpack.c.b16 %v2664, %v2660
    %v2705 = vpack.c.b16 %v2665, %v2661
    %v2706 = vpack.c.b16 %v2670, %v2666
    %v2707 = vpack.c.b16 %v2671, %v2667
    %v2708 = vpack.c.b16 %v2672, %v2668
    %v2709 = vpack.c.b16 %v2673, %v2669
    %v2710 = vpack.c.b16 %v2678, %v2674
    %v2711 = vpack.c.b16 %v2679, %v2675
    %v2712 = vpack.c.b16 %v2680, %v2676
    %v2713 = vpack.c.b16 %v2681, %v2677
    %2746 = vmatpush.bf16.msra.mxu0 %v2710
    %2747 = vmatpush.bf16.msra.mxu0 %v2706
    %2748 = vmatpush.bf16.msra.mxu0 %v2702
    %2749 = vmatpush.bf16.msra.mxu0 %v2698
    %2750 = vmatpush.bf16.msra.mxu0 %v2694
    %2751 = vmatpush.bf16.msra.mxu0 %v2690
    %2752 = vmatpush.bf16.msra.mxu0 %v2686
    %2753 = vmatpush.bf16.msra.mxu0 %v2682
    %2754 = vmatmul.bf16.gmra.mxu0 %v2578
    %v2755 = vpop.f32.mrf.mxu0
    %v2756 = vadd.f32 %v2554, %v2755
    %v2757 = vpop.f32.mrf.mxu0
    %v2758 = vadd.f32 %v2554, %v2757
    %2759 = vmatmul.bf16.gmra.mxu0 %v2579
    %v2760 = vpop.f32.mrf.mxu0
    %v2761 = vadd.f32 %v2554, %v2760
    %v2762 = vpop.f32.mrf.mxu0
    %v2763 = vadd.f32 %v2554, %v2762
    %2764 = vmatmul.bf16.gmra.mxu0 %v2580
    %v2765 = vpop.f32.mrf.mxu0
    %v2766 = vadd.f32 %v2554, %v2765
    %v2767 = vpop.f32.mrf.mxu0
    %v2768 = vadd.f32 %v2554, %v2767
    %2769 = vmatmul.bf16.gmra.mxu0 %v2581
    %v2770 = vpop.f32.mrf.mxu0
    %v2771 = vadd.f32 %v2554, %v2770
    %v2772 = vpop.f32.mrf.mxu0
    %v2773 = vadd.f32 %v2554, %v2772
    %2774 = vdwg.mxu0
    %2775 = vmatpush.bf16.msra.mxu0 %v2711
    %2776 = vmatpush.bf16.msra.mxu0 %v2707
    %2777 = vmatpush.bf16.msra.mxu0 %v2703
    %2778 = vmatpush.bf16.msra.mxu0 %v2699
    %2779 = vmatpush.bf16.msra.mxu0 %v2695
    %2780 = vmatpush.bf16.msra.mxu0 %v2691
    %2781 = vmatpush.bf16.msra.mxu0 %v2687
    %2782 = vmatpush.bf16.msra.mxu0 %v2683
    %2783 = vmatmul.bf16.gmra.mxu0 %v2578
    %v2784 = vpop.f32.mrf.mxu0
    %v2785 = vadd.f32 %v2555, %v2784
    %v2786 = vpop.f32.mrf.mxu0
    %v2787 = vadd.f32 %v2555, %v2786
    %2788 = vmatmul.bf16.gmra.mxu0 %v2579
    %v2789 = vpop.f32.mrf.mxu0
    %v2790 = vadd.f32 %v2555, %v2789
    %v2791 = vpop.f32.mrf.mxu0
    %v2792 = vadd.f32 %v2555, %v2791
    %2793 = vmatmul.bf16.gmra.mxu0 %v2580
    %v2794 = vpop.f32.mrf.mxu0
    %v2795 = vadd.f32 %v2555, %v2794
    %v2796 = vpop.f32.mrf.mxu0
    %v2797 = vadd.f32 %v2555, %v2796
    %2798 = vmatmul.bf16.gmra.mxu0 %v2581
    %v2799 = vpop.f32.mrf.mxu0
    %v2800 = vadd.f32 %v2555, %v2799
    %v2801 = vpop.f32.mrf.mxu0
    %v2802 = vadd.f32 %v2555, %v2801
    %2803 = vdwg.mxu0
    %2804 = vmatpush.bf16.msra.mxu0 %v2712
    %2805 = vmatpush.bf16.msra.mxu0 %v2708
    %2806 = vmatpush.bf16.msra.mxu0 %v2704
    %2807 = vmatpush.bf16.msra.mxu0 %v2700
    %2808 = vmatpush.bf16.msra.mxu0 %v2696
    %2809 = vmatpush.bf16.msra.mxu0 %v2692
    %2810 = vmatpush.bf16.msra.mxu0 %v2688
    %2811 = vmatpush.bf16.msra.mxu0 %v2684
    %2812 = vmatmul.bf16.gmra.mxu0 %v2578
    %v2813 = vpop.f32.mrf.mxu0
    %v2814 = vadd.f32 %v2556, %v2813
    %v2815 = vpop.f32.mrf.mxu0
    %v2816 = vadd.f32 %v2556, %v2815
    %2817 = vmatmul.bf16.gmra.mxu0 %v2579
    %v2818 = vpop.f32.mrf.mxu0
    %v2819 = vadd.f32 %v2556, %v2818
    %v2820 = vpop.f32.mrf.mxu0
    %v2821 = vadd.f32 %v2556, %v2820
    %2822 = vmatmul.bf16.gmra.mxu0 %v2580
    %v2823 = vpop.f32.mrf.mxu0
    %v2824 = vadd.f32 %v2556, %v2823
    %v2825 = vpop.f32.mrf.mxu0
    %v2826 = vadd.f32 %v2556, %v2825
    %2827 = vmatmul.bf16.gmra.mxu0 %v2581
    %v2828 = vpop.f32.mrf.mxu0
    %v2829 = vadd.f32 %v2556, %v2828
    %v2830 = vpop.f32.mrf.mxu0
    %v2831 = vadd.f32 %v2556, %v2830
    %2832 = vdwg.mxu0
    %2833 = vmatpush.bf16.msra.mxu0 %v2713
    %2834 = vmatpush.bf16.msra.mxu0 %v2709
    %2835 = vmatpush.bf16.msra.mxu0 %v2705
    %2836 = vmatpush.bf16.msra.mxu0 %v2701
    %2837 = vmatpush.bf16.msra.mxu0 %v2697
    %2838 = vmatpush.bf16.msra.mxu0 %v2693
    %2839 = vmatpush.bf16.msra.mxu0 %v2689
    %2840 = vmatpush.bf16.msra.mxu0 %v2685
    %2841 = vmatmul.bf16.gmra.mxu0 %v2578
    %v2842 = vpop.f32.mrf.mxu0
    %v2843 = vadd.f32 %v2557, %v2842
    %v2844 = vpop.f32.mrf.mxu0
    %v2845 = vadd.f32 %v2557, %v2844
    %2846 = vmatmul.bf16.gmra.mxu0 %v2579
    %v2847 = vpop.f32.mrf.mxu0
    %v2848 = vadd.f32 %v2557, %v2847
    %v2849 = vpop.f32.mrf.mxu0
    %v2850 = vadd.f32 %v2557, %v2849
    %2851 = vmatmul.bf16.gmra.mxu0 %v2580
    %v2852 = vpop.f32.mrf.mxu0
    %v2853 = vadd.f32 %v2557, %v2852
    %v2854 = vpop.f32.mrf.mxu0
    %v2855 = vadd.f32 %v2557, %v2854
    %2856 = vmatmul.bf16.gmra.mxu0 %v2581
    %v2857 = vpop.f32.mrf.mxu0
    %v2858 = vadd.f32 %v2557, %v2857
    %v2859 = vpop.f32.mrf.mxu0
    %v2860 = vadd.f32 %v2557, %v2859
    %2861 = vdwg.mxu0
    %2862 = vst [vmem:[#allocation5] sm:$0xff] %v2756
    %2863 = vst [vmem:[#allocation5 + $0x8] sm:$0xff] %v2785
    %2864 = vst [vmem:[#allocation5 + $0x10] sm:$0xff] %v2814
    %2865 = vst [vmem:[#allocation5 + $0x18] sm:$0xff] %v2843
    %2866 = vst [vmem:[#allocation5 + $0x20] sm:$0xff] %v2758
    %2867 = vst [vmem:[#allocation5 + $0x28] sm:$0xff] %v2787
    %2868 = vst [vmem:[#allocation5 + $0x30] sm:$0xff] %v2816
    %2869 = vst [vmem:[#allocation5 + $0x38] sm:$0xff] %v2845
    %2870 = vst [vmem:[#allocation5 + $0x40] sm:$0xff] %v2761
    %2871 = vst [vmem:[#allocation5 + $0x48] sm:$0xff] %v2790
    %2872 = vst [vmem:[#allocation5 + $0x50] sm:$0xff] %v2819
    %2873 = vst [vmem:[#allocation5 + $0x58] sm:$0xff] %v2848
    %2874 = vst [vmem:[#allocation5 + $0x60] sm:$0xff] %v2763
    %2875 = vst [vmem:[#allocation5 + $0x68] sm:$0xff] %v2792
    %2876 = vst [vmem:[#allocation5 + $0x70] sm:$0xff] %v2821
    %2877 = vst [vmem:[#allocation5 + $0x78] sm:$0xff] %v2850
    %2878 = vst [vmem:[#allocation5 + $0x80] sm:$0xff] %v2766
    %2879 = vst [vmem:[#allocation5 + $0x88] sm:$0xff] %v2795
    %2880 = vst [vmem:[#allocation5 + $0x90] sm:$0xff] %v2824
    %2881 = vst [vmem:[#allocation5 + $0x98] sm:$0xff] %v2853
    %2882 = vst [vmem:[#allocation5 + $0xa0] sm:$0xff] %v2768
    %2883 = vst [vmem:[#allocation5 + $0xa8] sm:$0xff] %v2797
    %2884 = vst [vmem:[#allocation5 + $0xb0] sm:$0xff] %v2826
    %2885 = vst [vmem:[#allocation5 + $0xb8] sm:$0xff] %v2855
    %2886 = vst [vmem:[#allocation5 + $0xc0] sm:$0xff] %v2771
    %2887 = vst [vmem:[#allocation5 + $0xc8] sm:$0xff] %v2800
    %2888 = vst [vmem:[#allocation5 + $0xd0] sm:$0xff] %v2829
    %2889 = vst [vmem:[#allocation5 + $0xd8] sm:$0xff] %v2858
    %2890 = vst [vmem:[#allocation5 + $0xe0] sm:$0xff] %v2773
    %2891 = vst [vmem:[#allocation5 + $0xe8] sm:$0xff] %v2802
    %2892 = vst [vmem:[#allocation5 + $0xf0] sm:$0xff] %v2831
    %2893 = vst [vmem:[#allocation5 + $0xf8] sm:$0xff] %v2860
    %2894 = vst [vmem:[#allocation2] sm:$0xff] 0.0
    %2895 = vst [vmem:[#allocation3] sm:$0xff] 0.0
    %v2896 = vld [vmem:[#allocation2] sm:$0xff]
    %v2897 = vld [vmem:[#allocation5] sm:$0xff]
    %v2898 = vld [vmem:[#allocation5 + $0x8] sm:$0xff]
    %v2899 = vld [vmem:[#allocation5 + $0x10] sm:$0xff]
    %v2900 = vld [vmem:[#allocation5 + $0x18] sm:$0xff]
    %v2901 = vpack.c.bf16 %v2896, %v2896
    %v2902 = vld [vmem:[#allocation11] sm:$0xff]
    %v2903 = vld [vmem:[#allocation11 + $0x8] sm:$0xff]
    %v2904 = vld [vmem:[#allocation11 + $0x10] sm:$0xff]
    %v2905 = vld [vmem:[#allocation11 + $0x18] sm:$0xff]
    %v2906 = vld [vmem:[#allocation11 + $0x20] sm:$0xff]
    %v2907 = vld [vmem:[#allocation11 + $0x28] sm:$0xff]
    %v2908 = vld [vmem:[#allocation11 + $0x30] sm:$0xff]
    %v2909 = vld [vmem:[#allocation11 + $0x38] sm:$0xff]
    %v2910 = vld [vmem:[#allocation11 + $0x40] sm:$0xff]
    %v2911 = vld [vmem:[#allocation11 + $0x48] sm:$0xff]
    %v2912 = vld [vmem:[#allocation11 + $0x50] sm:$0xff]
    %v2913 = vld [vmem:[#allocation11 + $0x58] sm:$0xff]
    %v2914 = vld [vmem:[#allocation11 + $0x60] sm:$0xff]
    %v2915 = vld [vmem:[#allocation11 + $0x68] sm:$0xff]
    %v2916 = vld [vmem:[#allocation11 + $0x70] sm:$0xff]
    %v2917 = vld [vmem:[#allocation11 + $0x78] sm:$0xff]
    %v2918 = vld [vmem:[#allocation11 + $0x80] sm:$0xff]
    %v2919 = vld [vmem:[#allocation11 + $0x88] sm:$0xff]
    %v2920 = vld [vmem:[#allocation11 + $0x90] sm:$0xff]
    %v2921 = vld [vmem:[#allocation11 + $0x98] sm:$0xff]
    %v2922 = vld [vmem:[#allocation11 + $0xa0] sm:$0xff]
    %v2923 = vld [vmem:[#allocation11 + $0xa8] sm:$0xff]
    %v2924 = vld [vmem:[#allocation11 + $0xb0] sm:$0xff]
    %v2925 = vld [vmem:[#allocation11 + $0xb8] sm:$0xff]
    %v2926 = vld [vmem:[#allocation11 + $0xc0] sm:$0xff]
    %v2927 = vld [vmem:[#allocation11 + $0xc8] sm:$0xff]
    %v2928 = vld [vmem:[#allocation11 + $0xd0] sm:$0xff]
    %v2929 = vld [vmem:[#allocation11 + $0xd8] sm:$0xff]
    %v2930 = vld [vmem:[#allocation11 + $0xe0] sm:$0xff]
    %v2931 = vld [vmem:[#allocation11 + $0xe8] sm:$0xff]
    %v2932 = vld [vmem:[#allocation11 + $0xf0] sm:$0xff]
    %v2933 = vld [vmem:[#allocation11 + $0xf8] sm:$0xff]
    %v2966 = vunpack.c.l.b16 %v2902
    %v2967 = vunpack.c.h.b16 %v2902
    %v2968 = vunpack.c.l.b16 %v2903
    %v2969 = vunpack.c.h.b16 %v2903
    %v2970 = vunpack.c.l.b16 %v2904
    %v2971 = vunpack.c.h.b16 %v2904
    %v2972 = vunpack.c.l.b16 %v2905
    %v2973 = vunpack.c.h.b16 %v2905
    %v2974 = vunpack.c.l.b16 %v2906
    %v2975 = vunpack.c.h.b16 %v2906
    %v2976 = vunpack.c.l.b16 %v2907
    %v2977 = vunpack.c.h.b16 %v2907
    %v2978 = vunpack.c.l.b16 %v2908
    %v2979 = vunpack.c.h.b16 %v2908
    %v2980 = vunpack.c.l.b16 %v2909
    %v2981 = vunpack.c.h.b16 %v2909
    %v2982 = vunpack.c.l.b16 %v2910
    %v2983 = vunpack.c.h.b16 %v2910
    %v2984 = vunpack.c.l.b16 %v2911
    %v2985 = vunpack.c.h.b16 %v2911
    %v2986 = vunpack.c.l.b16 %v2912
    %v2987 = vunpack.c.h.b16 %v2912
    %v2988 = vunpack.c.l.b16 %v2913
    %v2989 = vunpack.c.h.b16 %v2913
    %v2990 = vunpack.c.l.b16 %v2914
    %v2991 = vunpack.c.h.b16 %v2914
    %v2992 = vunpack.c.l.b16 %v2915
    %v2993 = vunpack.c.h.b16 %v2915
    %v2994 = vunpack.c.l.b16 %v2916
    %v2995 = vunpack.c.h.b16 %v2916
    %v2996 = vunpack.c.l.b16 %v2917
    %v2997 = vunpack.c.h.b16 %v2917
    %v2998 = vunpack.c.l.b16 %v2918
    %v2999 = vunpack.c.h.b16 %v2918
    %v3000 = vunpack.c.l.b16 %v2919
    %v3001 = vunpack.c.h.b16 %v2919
    %v3002 = vunpack.c.l.b16 %v2920
    %v3003 = vunpack.c.h.b16 %v2920
    %v3004 = vunpack.c.l.b16 %v2921
    %v3005 = vunpack.c.h.b16 %v2921
    %v3006 = vunpack.c.l.b16 %v2922
    %v3007 = vunpack.c.h.b16 %v2922
    %v3008 = vunpack.c.l.b16 %v2923
    %v3009 = vunpack.c.h.b16 %v2923
    %v3010 = vunpack.c.l.b16 %v2924
    %v3011 = vunpack.c.h.b16 %v2924
    %v3012 = vunpack.c.l.b16 %v2925
    %v3013 = vunpack.c.h.b16 %v2925
    %v3014 = vunpack.c.l.b16 %v2926
    %v3015 = vunpack.c.h.b16 %v2926
    %v3016 = vunpack.c.l.b16 %v2927
    %v3017 = vunpack.c.h.b16 %v2927
    %v3018 = vunpack.c.l.b16 %v2928
    %v3019 = vunpack.c.h.b16 %v2928
    %v3020 = vunpack.c.l.b16 %v2929
    %v3021 = vunpack.c.h.b16 %v2929
    %v3022 = vunpack.c.l.b16 %v2930
    %v3023 = vunpack.c.h.b16 %v2930
    %v3024 = vunpack.c.l.b16 %v2931
    %v3025 = vunpack.c.h.b16 %v2931
    %v3026 = vunpack.c.l.b16 %v2932
    %v3027 = vunpack.c.h.b16 %v2932
    %v3028 = vunpack.c.l.b16 %v2933
    %v3029 = vunpack.c.h.b16 %v2933
    %v3030 = vpack.c.b16 %v2970, %v2966
    %v3031 = vpack.c.b16 %v2971, %v2967
    %v3032 = vpack.c.b16 %v2972, %v2968
    %v3033 = vpack.c.b16 %v2973, %v2969
    %v3034 = vpack.c.b16 %v2978, %v2974
    %v3035 = vpack.c.b16 %v2979, %v2975
    %v3036 = vpack.c.b16 %v2980, %v2976
    %v3037 = vpack.c.b16 %v2981, %v2977
    %v3038 = vpack.c.b16 %v2986, %v2982
    %v3039 = vpack.c.b16 %v2987, %v2983
    %v3040 = vpack.c.b16 %v2988, %v2984
    %v3041 = vpack.c.b16 %v2989, %v2985
    %v3042 = vpack.c.b16 %v2994, %v2990
    %v3043 = vpack.c.b16 %v2995, %v2991
    %v3044 = vpack.c.b16 %v2996, %v2992
    %v3045 = vpack.c.b16 %v2997, %v2993
    %v3046 = vpack.c.b16 %v3002, %v2998
    %v3047 = vpack.c.b16 %v3003, %v2999
    %v3048 = vpack.c.b16 %v3004, %v3000
    %v3049 = vpack.c.b16 %v3005, %v3001
    %v3050 = vpack.c.b16 %v3010, %v3006
    %v3051 = vpack.c.b16 %v3011, %v3007
    %v3052 = vpack.c.b16 %v3012, %v3008
    %v3053 = vpack.c.b16 %v3013, %v3009
    %v3054 = vpack.c.b16 %v3018, %v3014
    %v3055 = vpack.c.b16 %v3019, %v3015
    %v3056 = vpack.c.b16 %v3020, %v3016
    %v3057 = vpack.c.b16 %v3021, %v3017
    %v3058 = vpack.c.b16 %v3026, %v3022
    %v3059 = vpack.c.b16 %v3027, %v3023
    %v3060 = vpack.c.b16 %v3028, %v3024
    %v3061 = vpack.c.b16 %v3029, %v3025
    %3094 = vmatpush.bf16.msra.mxu0 %v3058
    %3095 = vmatpush.bf16.msra.mxu0 %v3054
    %3096 = vmatpush.bf16.msra.mxu0 %v3050
    %3097 = vmatpush.bf16.msra.mxu0 %v3046
    %3098 = vmatpush.bf16.msra.mxu0 %v3042
    %3099 = vmatpush.bf16.msra.mxu0 %v3038
    %3100 = vmatpush.bf16.msra.mxu0 %v3034
    %3101 = vmatpush.bf16.msra.mxu0 %v3030
    %3102 = vmatmul.bf16.gmra.mxu0 %v2901
    %v3103 = vpop.f32.mrf.mxu0
    %v3104 = vadd.f32 0.0, %v3103
    %v3105 = vpop.f32.mrf.mxu0
    %3106 = vdwg.mxu0
    %3107 = vmatpush.bf16.msra.mxu0 %v3059
    %3108 = vmatpush.bf16.msra.mxu0 %v3055
    %3109 = vmatpush.bf16.msra.mxu0 %v3051
    %3110 = vmatpush.bf16.msra.mxu0 %v3047
    %3111 = vmatpush.bf16.msra.mxu0 %v3043
    %3112 = vmatpush.bf16.msra.mxu0 %v3039
    %3113 = vmatpush.bf16.msra.mxu0 %v3035
    %3114 = vmatpush.bf16.msra.mxu0 %v3031
    %3115 = vmatmul.bf16.gmra.mxu0 %v2901
    %v3116 = vpop.f32.mrf.mxu0
    %v3117 = vadd.f32 0.0, %v3116
    %v3118 = vpop.f32.mrf.mxu0
    %3119 = vdwg.mxu0
    %3120 = vmatpush.bf16.msra.mxu0 %v3060
    %3121 = vmatpush.bf16.msra.mxu0 %v3056
    %3122 = vmatpush.bf16.msra.mxu0 %v3052
    %3123 = vmatpush.bf16.msra.mxu0 %v3048
    %3124 = vmatpush.bf16.msra.mxu0 %v3044
    %3125 = vmatpush.bf16.msra.mxu0 %v3040
    %3126 = vmatpush.bf16.msra.mxu0 %v3036
    %3127 = vmatpush.bf16.msra.mxu0 %v3032
    %3128 = vmatmul.bf16.gmra.mxu0 %v2901
    %v3129 = vpop.f32.mrf.mxu0
    %v3130 = vadd.f32 0.0, %v3129
    %v3131 = vpop.f32.mrf.mxu0
    %3132 = vdwg.mxu0
    %3133 = vmatpush.bf16.msra.mxu0 %v3061
    %3134 = vmatpush.bf16.msra.mxu0 %v3057
    %3135 = vmatpush.bf16.msra.mxu0 %v3053
    %3136 = vmatpush.bf16.msra.mxu0 %v3049
    %3137 = vmatpush.bf16.msra.mxu0 %v3045
    %3138 = vmatpush.bf16.msra.mxu0 %v3041
    %3139 = vmatpush.bf16.msra.mxu0 %v3037
    %3140 = vmatpush.bf16.msra.mxu0 %v3033
    %3141 = vmatmul.bf16.gmra.mxu0 %v2901
    %v3142 = vpop.f32.mrf.mxu0
    %v3143 = vadd.f32 0.0, %v3142
    %v3144 = vpop.f32.mrf.mxu0
    %3145 = vdwg.mxu0
    %v3146 = vadd.f32 %v2897, %v3104
    %v3147 = vadd.f32 %v2898, %v3117
    %v3148 = vadd.f32 %v2899, %v3130
    %v3149 = vadd.f32 %v2900, %v3143
    %v3150 = vmul.f32 %v3146, 0.5
    %v3151 = vtanh.pop %v3150
    %v3152 = vadd.f32 %v3151, 1.0
    %v3153 = vmul.f32 %v3152, 0.5
    %v3154 = vmul.f32 %v3147, 0.5
    %v3155 = vtanh.pop %v3154
    %v3156 = vadd.f32 %v3155, 1.0
    %v3157 = vmul.f32 %v3156, 0.5
    %v3158 = vtanh.pop %v3148
    %v3159 = vmul.f32 %v3149, 0.5
    %v3160 = vtanh.pop %v3159
    %v3161 = vadd.f32 %v3160, 1.0
    %v3162 = vmul.f32 %v3161, 0.5
    %v3163 = vld [vmem:[#allocation3] sm:$0xff]
    %v3164 = vmul.f32 %v3157, %v3163
    %v3165 = vmul.f32 %v3153, %v3158
    %v3166 = vadd.f32 %v3164, %v3165
    %v3167 = vtanh.pop %v3166
    %v3168 = vmul.f32 %v3162, %v3167
    %3169 = vst [vmem:[#allocation3] sm:$0xff] %v3166
    %3170 = vst [vmem:[#allocation2] sm:$0xff] %v3168
    %v3171 = vld [vmem:[#allocation2] sm:$0xff]
    %v3172 = vld [vmem:[%s560] sm:$0xff]
    %v3173 = vld [vmem:[%s560 + $0x8] sm:$0xff]
    %v3174 = vld [vmem:[%s560 + $0x10] sm:$0xff]
    %v3175 = vld [vmem:[%s560 + $0x18] sm:$0xff]
    %v3176 = vpack.c.bf16 %v3171, %v3171
    %v3177 = vld [vmem:[#allocation11] sm:$0xff]
    %v3178 = vld [vmem:[#allocation11 + $0x8] sm:$0xff]
    %v3179 = vld [vmem:[#allocation11 + $0x10] sm:$0xff]
    %v3180 = vld [vmem:[#allocation11 + $0x18] sm:$0xff]
    %v3181 = vld [vmem:[#allocation11 + $0x20] sm:$0xff]
    %v3182 = vld [vmem:[#allocation11 + $0x28] sm:$0xff]
    %v3183 = vld [vmem:[#allocation11 + $0x30] sm:$0xff]
    %v3184 = vld [vmem:[#allocation11 + $0x38] sm:$0xff]
    %v3185 = vld [vmem:[#allocation11 + $0x40] sm:$0xff]
    %v3186 = vld [vmem:[#allocation11 + $0x48] sm:$0xff]
    %v3187 = vld [vmem:[#allocation11 + $0x50] sm:$0xff]
    %v3188 = vld [vmem:[#allocation11 + $0x58] sm:$0xff]
    %v3189 = vld [vmem:[#allocation11 + $0x60] sm:$0xff]
    %v3190 = vld [vmem:[#allocation11 + $0x68] sm:$0xff]
    %v3191 = vld [vmem:[#allocation11 + $0x70] sm:$0xff]
    %v3192 = vld [vmem:[#allocation11 + $0x78] sm:$0xff]
    %v3193 = vld [vmem:[#allocation11 + $0x80] sm:$0xff]
    %v3194 = vld [vmem:[#allocation11 + $0x88] sm:$0xff]
    %v3195 = vld [vmem:[#allocation11 + $0x90] sm:$0xff]
    %v3196 = vld [vmem:[#allocation11 + $0x98] sm:$0xff]
    %v3197 = vld [vmem:[#allocation11 + $0xa0] sm:$0xff]
    %v3198 = vld [vmem:[#allocation11 + $0xa8] sm:$0xff]
    %v3199 = vld [vmem:[#allocation11 + $0xb0] sm:$0xff]
    %v3200 = vld [vmem:[#allocation11 + $0xb8] sm:$0xff]
    %v3201 = vld [vmem:[#allocation11 + $0xc0] sm:$0xff]
    %v3202 = vld [vmem:[#allocation11 + $0xc8] sm:$0xff]
    %v3203 = vld [vmem:[#allocation11 + $0xd0] sm:$0xff]
    %v3204 = vld [vmem:[#allocation11 + $0xd8] sm:$0xff]
    %v3205 = vld [vmem:[#allocation11 + $0xe0] sm:$0xff]
    %v3206 = vld [vmem:[#allocation11 + $0xe8] sm:$0xff]
    %v3207 = vld [vmem:[#allocation11 + $0xf0] sm:$0xff]
    %v3208 = vld [vmem:[#allocation11 + $0xf8] sm:$0xff]
    %v3241 = vunpack.c.l.b16 %v3177
    %v3242 = vunpack.c.h.b16 %v3177
    %v3243 = vunpack.c.l.b16 %v3178
    %v3244 = vunpack.c.h.b16 %v3178
    %v3245 = vunpack.c.l.b16 %v3179
    %v3246 = vunpack.c.h.b16 %v3179
    %v3247 = vunpack.c.l.b16 %v3180
    %v3248 = vunpack.c.h.b16 %v3180
    %v3249 = vunpack.c.l.b16 %v3181
    %v3250 = vunpack.c.h.b16 %v3181
    %v3251 = vunpack.c.l.b16 %v3182
    %v3252 = vunpack.c.h.b16 %v3182
    %v3253 = vunpack.c.l.b16 %v3183
    %v3254 = vunpack.c.h.b16 %v3183
    %v3255 = vunpack.c.l.b16 %v3184
    %v3256 = vunpack.c.h.b16 %v3184
    %v3257 = vunpack.c.l.b16 %v3185
    %v3258 = vunpack.c.h.b16 %v3185
    %v3259 = vunpack.c.l.b16 %v3186
    %v3260 = vunpack.c.h.b16 %v3186
    %v3261 = vunpack.c.l.b16 %v3187
    %v3262 = vunpack.c.h.b16 %v3187
    %v3263 = vunpack.c.l.b16 %v3188
    %v3264 = vunpack.c.h.b16 %v3188
    %v3265 = vunpack.c.l.b16 %v3189
    %v3266 = vunpack.c.h.b16 %v3189
    %v3267 = vunpack.c.l.b16 %v3190
    %v3268 = vunpack.c.h.b16 %v3190
    %v3269 = vunpack.c.l.b16 %v3191
    %v3270 = vunpack.c.h.b16 %v3191
    %v3271 = vunpack.c.l.b16 %v3192
    %v3272 = vunpack.c.h.b16 %v3192
    %v3273 = vunpack.c.l.b16 %v3193
    %v3274 = vunpack.c.h.b16 %v3193
    %v3275 = vunpack.c.l.b16 %v3194
    %v3276 = vunpack.c.h.b16 %v3194
    %v3277 = vunpack.c.l.b16 %v3195
    %v3278 = vunpack.c.h.b16 %v3195
    %v3279 = vunpack.c.l.b16 %v3196
    %v3280 = vunpack.c.h.b16 %v3196
    %v3281 = vunpack.c.l.b16 %v3197
    %v3282 = vunpack.c.h.b16 %v3197
    %v3283 = vunpack.c.l.b16 %v3198
    %v3284 = vunpack.c.h.b16 %v3198
    %v3285 = vunpack.c.l.b16 %v3199
    %v3286 = vunpack.c.h.b16 %v3199
    %v3287 = vunpack.c.l.b16 %v3200
    %v3288 = vunpack.c.h.b16 %v3200
    %v3289 = vunpack.c.l.b16 %v3201
    %v3290 = vunpack.c.h.b16 %v3201
    %v3291 = vunpack.c.l.b16 %v3202
    %v3292 = vunpack.c.h.b16 %v3202
    %v3293 = vunpack.c.l.b16 %v3203
    %v3294 = vunpack.c.h.b16 %v3203
    %v3295 = vunpack.c.l.b16 %v3204
    %v3296 = vunpack.c.h.b16 %v3204
    %v3297 = vunpack.c.l.b16 %v3205
    %v3298 = vunpack.c.h.b16 %v3205
    %v3299 = vunpack.c.l.b16 %v3206
    %v3300 = vunpack.c.h.b16 %v3206
    %v3301 = vunpack.c.l.b16 %v3207
    %v3302 = vunpack.c.h.b16 %v3207
    %v3303 = vunpack.c.l.b16 %v3208
    %v3304 = vunpack.c.h.b16 %v3208
    %v3305 = vpack.c.b16 %v3245, %v3241
    %v3306 = vpack.c.b16 %v3246, %v3242
    %v3307 = vpack.c.b16 %v3247, %v3243
    %v3308 = vpack.c.b16 %v3248, %v3244
    %v3309 = vpack.c.b16 %v3253, %v3249
    %v3310 = vpack.c.b16 %v3254, %v3250
    %v3311 = vpack.c.b16 %v3255, %v3251
    %v3312 = vpack.c.b16 %v3256, %v3252
    %v3313 = vpack.c.b16 %v3261, %v3257
    %v3314 = vpack.c.b16 %v3262, %v3258
    %v3315 = vpack.c.b16 %v3263, %v3259
    %v3316 = vpack.c.b16 %v3264, %v3260
    %v3317 = vpack.c.b16 %v3269, %v3265
    %v3318 = vpack.c.b16 %v3270, %v3266
    %v3319 = vpack.c.b16 %v3271, %v3267
    %v3320 = vpack.c.b16 %v3272, %v3268
    %v3321 = vpack.c.b16 %v3277, %v3273
    %v3322 = vpack.c.b16 %v3278, %v3274
    %v3323 = vpack.c.b16 %v3279, %v3275
    %v3324 = vpack.c.b16 %v3280, %v3276
    %v3325 = vpack.c.b16 %v3285, %v3281
    %v3326 = vpack.c.b16 %v3286, %v3282
    %v3327 = vpack.c.b16 %v3287, %v3283
    %v3328 = vpack.c.b16 %v3288, %v3284
    %v3329 = vpack.c.b16 %v3293, %v3289
    %v3330 = vpack.c.b16 %v3294, %v3290
    %v3331 = vpack.c.b16 %v3295, %v3291
    %v3332 = vpack.c.b16 %v3296, %v3292
    %v3333 = vpack.c.b16 %v3301, %v3297
    %v3334 = vpack.c.b16 %v3302, %v3298
    %v3335 = vpack.c.b16 %v3303, %v3299
    %v3336 = vpack.c.b16 %v3304, %v3300
    %3369 = vmatpush.bf16.msra.mxu0 %v3333
    %3370 = vmatpush.bf16.msra.mxu0 %v3329
    %3371 = vmatpush.bf16.msra.mxu0 %v3325
    %3372 = vmatpush.bf16.msra.mxu0 %v3321
    %3373 = vmatpush.bf16.msra.mxu0 %v3317
    %3374 = vmatpush.bf16.msra.mxu0 %v3313
    %3375 = vmatpush.bf16.msra.mxu0 %v3309
    %3376 = vmatpush.bf16.msra.mxu0 %v3305
    %3377 = vmatmul.bf16.gmra.mxu0 %v3176
    %v3378 = vpop.f32.mrf.mxu0
    %v3379 = vadd.f32 0.0, %v3378
    %v3380 = vpop.f32.mrf.mxu0
    %3381 = vdwg.mxu0
    %3382 = vmatpush.bf16.msra.mxu0 %v3334
    %3383 = vmatpush.bf16.msra.mxu0 %v3330
    %3384 = vmatpush.bf16.msra.mxu0 %v3326
    %3385 = vmatpush.bf16.msra.mxu0 %v3322
    %3386 = vmatpush.bf16.msra.mxu0 %v3318
    %3387 = vmatpush.bf16.msra.mxu0 %v3314
    %3388 = vmatpush.bf16.msra.mxu0 %v3310
    %3389 = vmatpush.bf16.msra.mxu0 %v3306
    %3390 = vmatmul.bf16.gmra.mxu0 %v3176
    %v3391 = vpop.f32.mrf.mxu0
    %v3392 = vadd.f32 0.0, %v3391
    %v3393 = vpop.f32.mrf.mxu0
    %3394 = vdwg.mxu0
    %3395 = vmatpush.bf16.msra.mxu0 %v3335
    %3396 = vmatpush.bf16.msra.mxu0 %v3331
    %3397 = vmatpush.bf16.msra.mxu0 %v3327
    %3398 = vmatpush.bf16.msra.mxu0 %v3323
    %3399 = vmatpush.bf16.msra.mxu0 %v3319
    %3400 = vmatpush.bf16.msra.mxu0 %v3315
    %3401 = vmatpush.bf16.msra.mxu0 %v3311
    %3402 = vmatpush.bf16.msra.mxu0 %v3307
    %3403 = vmatmul.bf16.gmra.mxu0 %v3176
    %v3404 = vpop.f32.mrf.mxu0
    %v3405 = vadd.f32 0.0, %v3404
    %v3406 = vpop.f32.mrf.mxu0
    %3407 = vdwg.mxu0
    %3408 = vmatpush.bf16.msra.mxu0 %v3336
    %3409 = vmatpush.bf16.msra.mxu0 %v3332
    %3410 = vmatpush.bf16.msra.mxu0 %v3328
    %3411 = vmatpush.bf16.msra.mxu0 %v3324
    %3412 = vmatpush.bf16.msra.mxu0 %v3320
    %3413 = vmatpush.bf16.msra.mxu0 %v3316
    %3414 = vmatpush.bf16.msra.mxu0 %v3312
    %3415 = vmatpush.bf16.msra.mxu0 %v3308
    %3416 = vmatmul.bf16.gmra.mxu0 %v3176
    %v3417 = vpop.f32.mrf.mxu0
    %v3418 = vadd.f32 0.0, %v3417
    %v3419 = vpop.f32.mrf.mxu0
    %3420 = vdwg.mxu0
    %v3421 = vadd.f32 %v3172, %v3379
    %v3422 = vadd.f32 %v3173, %v3392
    %v3423 = vadd.f32 %v3174, %v3405
    %v3424 = vadd.f32 %v3175, %v3418
    %v3425 = vmul.f32 %v3421, 0.5
    %v3426 = vtanh.pop %v3425
    %v3427 = vadd.f32 %v3426, 1.0
    %v3428 = vmul.f32 %v3427, 0.5
    %v3429 = vmul.f32 %v3422, 0.5
    %v3430 = vtanh.pop %v3429
    %v3431 = vadd.f32 %v3430, 1.0
    %v3432 = vmul.f32 %v3431, 0.5
    %v3433 = vtanh.pop %v3423
    %v3434 = vmul.f32 %v3424, 0.5
    %v3435 = vtanh.pop %v3434
    %v3436 = vadd.f32 %v3435, 1.0
    %v3437 = vmul.f32 %v3436, 0.5
    %v3438 = vld [vmem:[#allocation3] sm:$0xff]
    %v3439 = vmul.f32 %v3432, %v3438
    %v3440 = vmul.f32 %v3428, %v3433
    %v3441 = vadd.f32 %v3439, %v3440
    %v3442 = vtanh.pop %v3441
    %v3443 = vmul.f32 %v3437, %v3442
    %3444 = vst [vmem:[#allocation3] sm:$0xff] %v3441
    %3445 = vst [vmem:[#allocation2] sm:$0xff] %v3443
    %v3446 = vld [vmem:[#allocation2] sm:$0xff]
    %v3447 = vld [vmem:[%s839] sm:$0xff]
    %v3448 = vld [vmem:[%s839 + $0x8] sm:$0xff]
    %v3449 = vld [vmem:[%s839 + $0x10] sm:$0xff]
    %v3450 = vld [vmem:[%s839 + $0x18] sm:$0xff]
    %v3451 = vpack.c.bf16 %v3446, %v3446
    %v3452 = vld [vmem:[#allocation11] sm:$0xff]
    %v3453 = vld [vmem:[#allocation11 + $0x8] sm:$0xff]
    %v3454 = vld [vmem:[#allocation11 + $0x10] sm:$0xff]
    %v3455 = vld [vmem:[#allocation11 + $0x18] sm:$0xff]
    %v3456 = vld [vmem:[#allocation11 + $0x20] sm:$0xff]
    %v3457 = vld [vmem:[#allocation11 + $0x28] sm:$0xff]
    %v3458 = vld [vmem:[#allocation11 + $0x30] sm:$0xff]
    %v3459 = vld [vmem:[#allocation11 + $0x38] sm:$0xff]
    %v3460 = vld [vmem:[#allocation11 + $0x40] sm:$0xff]
    %v3461 = vld [vmem:[#allocation11 + $0x48] sm:$0xff]
    %v3462 = vld [vmem:[#allocation11 + $0x50] sm:$0xff]
    %v3463 = vld [vmem:[#allocation11 + $0x58] sm:$0xff]
    %v3464 = vld [vmem:[#allocation11 + $0x60] sm:$0xff]
    %v3465 = vld [vmem:[#allocation11 + $0x68] sm:$0xff]
    %v3466 = vld [vmem:[#allocation11 + $0x70] sm:$0xff]
    %v3467 = vld [vmem:[#allocation11 + $0x78] sm:$0xff]
    %v3468 = vld [vmem:[#allocation11 + $0x80] sm:$0xff]
    %v3469 = vld [vmem:[#allocation11 + $0x88] sm:$0xff]
    %v3470 = vld [vmem:[#allocation11 + $0x90] sm:$0xff]
    %v3471 = vld [vmem:[#allocation11 + $0x98] sm:$0xff]
    %v3472 = vld [vmem:[#allocation11 + $0xa0] sm:$0xff]
    %v3473 = vld [vmem:[#allocation11 + $0xa8] sm:$0xff]
    %v3474 = vld [vmem:[#allocation11 + $0xb0] sm:$0xff]
    %v3475 = vld [vmem:[#allocation11 + $0xb8] sm:$0xff]
    %v3476 = vld [vmem:[#allocation11 + $0xc0] sm:$0xff]
    %v3477 = vld [vmem:[#allocation11 + $0xc8] sm:$0xff]
    %v3478 = vld [vmem:[#allocation11 + $0xd0] sm:$0xff]
    %v3479 = vld [vmem:[#allocation11 + $0xd8] sm:$0xff]
    %v3480 = vld [vmem:[#allocation11 + $0xe0] sm:$0xff]
    %v3481 = vld [vmem:[#allocation11 + $0xe8] sm:$0xff]
    %v3482 = vld [vmem:[#allocation11 + $0xf0] sm:$0xff]
    %v3483 = vld [vmem:[#allocation11 + $0xf8] sm:$0xff]
    %v3516 = vunpack.c.l.b16 %v3452
    %v3517 = vunpack.c.h.b16 %v3452
    %v3518 = vunpack.c.l.b16 %v3453
    %v3519 = vunpack.c.h.b16 %v3453
    %v3520 = vunpack.c.l.b16 %v3454
    %v3521 = vunpack.c.h.b16 %v3454
    %v3522 = vunpack.c.l.b16 %v3455
    %v3523 = vunpack.c.h.b16 %v3455
    %v3524 = vunpack.c.l.b16 %v3456
    %v3525 = vunpack.c.h.b16 %v3456
    %v3526 = vunpack.c.l.b16 %v3457
    %v3527 = vunpack.c.h.b16 %v3457
    %v3528 = vunpack.c.l.b16 %v3458
    %v3529 = vunpack.c.h.b16 %v3458
    %v3530 = vunpack.c.l.b16 %v3459
    %v3531 = vunpack.c.h.b16 %v3459
    %v3532 = vunpack.c.l.b16 %v3460
    %v3533 = vunpack.c.h.b16 %v3460
    %v3534 = vunpack.c.l.b16 %v3461
    %v3535 = vunpack.c.h.b16 %v3461
    %v3536 = vunpack.c.l.b16 %v3462
    %v3537 = vunpack.c.h.b16 %v3462
    %v3538 = vunpack.c.l.b16 %v3463
    %v3539 = vunpack.c.h.b16 %v3463
    %v3540 = vunpack.c.l.b16 %v3464
    %v3541 = vunpack.c.h.b16 %v3464
    %v3542 = vunpack.c.l.b16 %v3465
    %v3543 = vunpack.c.h.b16 %v3465
    %v3544 = vunpack.c.l.b16 %v3466
    %v3545 = vunpack.c.h.b16 %v3466
    %v3546 = vunpack.c.l.b16 %v3467
    %v3547 = vunpack.c.h.b16 %v3467
    %v3548 = vunpack.c.l.b16 %v3468
    %v3549 = vunpack.c.h.b16 %v3468
    %v3550 = vunpack.c.l.b16 %v3469
    %v3551 = vunpack.c.h.b16 %v3469
    %v3552 = vunpack.c.l.b16 %v3470
    %v3553 = vunpack.c.h.b16 %v3470
    %v3554 = vunpack.c.l.b16 %v3471
    %v3555 = vunpack.c.h.b16 %v3471
    %v3556 = vunpack.c.l.b16 %v3472
    %v3557 = vunpack.c.h.b16 %v3472
    %v3558 = vunpack.c.l.b16 %v3473
    %v3559 = vunpack.c.h.b16 %v3473
    %v3560 = vunpack.c.l.b16 %v3474
    %v3561 = vunpack.c.h.b16 %v3474
    %v3562 = vunpack.c.l.b16 %v3475
    %v3563 = vunpack.c.h.b16 %v3475
    %v3564 = vunpack.c.l.b16 %v3476
    %v3565 = vunpack.c.h.b16 %v3476
    %v3566 = vunpack.c.l.b16 %v3477
    %v3567 = vunpack.c.h.b16 %v3477
    %v3568 = vunpack.c.l.b16 %v3478
    %v3569 = vunpack.c.h.b16 %v3478
    %v3570 = vunpack.c.l.b16 %v3479
    %v3571 = vunpack.c.h.b16 %v3479
    %v3572 = vunpack.c.l.b16 %v3480
    %v3573 = vunpack.c.h.b16 %v3480
    %v3574 = vunpack.c.l.b16 %v3481
    %v3575 = vunpack.c.h.b16 %v3481
    %v3576 = vunpack.c.l.b16 %v3482
    %v3577 = vunpack.c.h.b16 %v3482
    %v3578 = vunpack.c.l.b16 %v3483
    %v3579 = vunpack.c.h.b16 %v3483
    %v3580 = vpack.c.b16 %v3520, %v3516
    %v3581 = vpack.c.b16 %v3521, %v3517
    %v3582 = vpack.c.b16 %v3522, %v3518
    %v3583 = vpack.c.b16 %v3523, %v3519
    %v3584 = vpack.c.b16 %v3528, %v3524
    %v3585 = vpack.c.b16 %v3529, %v3525
    %v3586 = vpack.c.b16 %v3530, %v3526
    %v3587 = vpack.c.b16 %v3531, %v3527
    %v3588 = vpack.c.b16 %v3536, %v3532
    %v3589 = vpack.c.b16 %v3537, %v3533
    %v3590 = vpack.c.b16 %v3538, %v3534
    %v3591 = vpack.c.b16 %v3539, %v3535
    %v3592 = vpack.c.b16 %v3544, %v3540
    %v3593 = vpack.c.b16 %v3545, %v3541
    %v3594 = vpack.c.b16 %v3546, %v3542
    %v3595 = vpack.c.b16 %v3547, %v3543
    %v3596 = vpack.c.b16 %v3552, %v3548
    %v3597 = vpack.c.b16 %v3553, %v3549
    %v3598 = vpack.c.b16 %v3554, %v3550
    %v3599 = vpack.c.b16 %v3555, %v3551
    %v3600 = vpack.c.b16 %v3560, %v3556
    %v3601 = vpack.c.b16 %v3561, %v3557
    %v3602 = vpack.c.b16 %v3562, %v3558
    %v3603 = vpack.c.b16 %v3563, %v3559
    %v3604 = vpack.c.b16 %v3568, %v3564
    %v3605 = vpack.c.b16 %v3569, %v3565
    %v3606 = vpack.c.b16 %v3570, %v3566
    %v3607 = vpack.c.b16 %v3571, %v3567
    %v3608 = vpack.c.b16 %v3576, %v3572
    %v3609 = vpack.c.b16 %v3577, %v3573
    %v3610 = vpack.c.b16 %v3578, %v3574
    %v3611 = vpack.c.b16 %v3579, %v3575
    %3644 = vmatpush.bf16.msra.mxu0 %v3608
    %3645 = vmatpush.bf16.msra.mxu0 %v3604
    %3646 = vmatpush.bf16.msra.mxu0 %v3600
    %3647 = vmatpush.bf16.msra.mxu0 %v3596
    %3648 = vmatpush.bf16.msra.mxu0 %v3592
    %3649 = vmatpush.bf16.msra.mxu0 %v3588
    %3650 = vmatpush.bf16.msra.mxu0 %v3584
    %3651 = vmatpush.bf16.msra.mxu0 %v3580
    %3652 = vmatmul.bf16.gmra.mxu0 %v3451
    %v3653 = vpop.f32.mrf.mxu0
    %v3654 = vadd.f32 0.0, %v3653
    %v3655 = vpop.f32.mrf.mxu0
    %3656 = vdwg.mxu0
    %3657 = vmatpush.bf16.msra.mxu0 %v3609
    %3658 = vmatpush.bf16.msra.mxu0 %v3605
    %3659 = vmatpush.bf16.msra.mxu0 %v3601
    %3660 = vmatpush.bf16.msra.mxu0 %v3597
    %3661 = vmatpush.bf16.msra.mxu0 %v3593
    %3662 = vmatpush.bf16.msra.mxu0 %v3589
    %3663 = vmatpush.bf16.msra.mxu0 %v3585
    %3664 = vmatpush.bf16.msra.mxu0 %v3581
    %3665 = vmatmul.bf16.gmra.mxu0 %v3451
    %v3666 = vpop.f32.mrf.mxu0
    %v3667 = vadd.f32 0.0, %v3666
    %v3668 = vpop.f32.mrf.mxu0
    %3669 = vdwg.mxu0
    %3670 = vmatpush.bf16.msra.mxu0 %v3610
    %3671 = vmatpush.bf16.msra.mxu0 %v3606
    %3672 = vmatpush.bf16.msra.mxu0 %v3602
    %3673 = vmatpush.bf16.msra.mxu0 %v3598
    %3674 = vmatpush.bf16.msra.mxu0 %v3594
    %3675 = vmatpush.bf16.msra.mxu0 %v3590
    %3676 = vmatpush.bf16.msra.mxu0 %v3586
    %3677 = vmatpush.bf16.msra.mxu0 %v3582
    %3678 = vmatmul.bf16.gmra.mxu0 %v3451
    %v3679 = vpop.f32.mrf.mxu0
    %v3680 = vadd.f32 0.0, %v3679
    %v3681 = vpop.f32.mrf.mxu0
    %3682 = vdwg.mxu0
    %3683 = vmatpush.bf16.msra.mxu0 %v3611
    %3684 = vmatpush.bf16.msra.mxu0 %v3607
    %3685 = vmatpush.bf16.msra.mxu0 %v3603
    %3686 = vmatpush.bf16.msra.mxu0 %v3599
    %3687 = vmatpush.bf16.msra.mxu0 %v3595
    %3688 = vmatpush.bf16.msra.mxu0 %v3591
    %3689 = vmatpush.bf16.msra.mxu0 %v3587
    %3690 = vmatpush.bf16.msra.mxu0 %v3583
    %3691 = vmatmul.bf16.gmra.mxu0 %v3451
    %v3692 = vpop.f32.mrf.mxu0
    %v3693 = vadd.f32 0.0, %v3692
    %v3694 = vpop.f32.mrf.mxu0
    %3695 = vdwg.mxu0
    %v3696 = vadd.f32 %v3447, %v3654
    %v3697 = vadd.f32 %v3448, %v3667
    %v3698 = vadd.f32 %v3449, %v3680
    %v3699 = vadd.f32 %v3450, %v3693
    %v3700 = vmul.f32 %v3696, 0.5
    %v3701 = vtanh.pop %v3700
    %v3702 = vadd.f32 %v3701, 1.0
    %v3703 = vmul.f32 %v3702, 0.5
    %v3704 = vmul.f32 %v3697, 0.5
    %v3705 = vtanh.pop %v3704
    %v3706 = vadd.f32 %v3705, 1.0
    %v3707 = vmul.f32 %v3706, 0.5
    %v3708 = vtanh.pop %v3698
    %v3709 = vmul.f32 %v3699, 0.5
    %v3710 = vtanh.pop %v3709
    %v3711 = vadd.f32 %v3710, 1.0
    %v3712 = vmul.f32 %v3711, 0.5
    %v3713 = vld [vmem:[#allocation3] sm:$0xff]
    %v3714 = vmul.f32 %v3707, %v3713
    %v3715 = vmul.f32 %v3703, %v3708
    %v3716 = vadd.f32 %v3714, %v3715
    %v3717 = vtanh.pop %v3716
    %v3718 = vmul.f32 %v3712, %v3717
    %3719 = vst [vmem:[#allocation3] sm:$0xff] %v3716
    %3720 = vst [vmem:[#allocation2] sm:$0xff] %v3718
    %v3721 = vld [vmem:[#allocation2] sm:$0xff]
    %v3722 = vld [vmem:[%s1118] sm:$0xff]
    %v3723 = vld [vmem:[%s1118 + $0x8] sm:$0xff]
    %v3724 = vld [vmem:[%s1118 + $0x10] sm:$0xff]
    %v3725 = vld [vmem:[%s1118 + $0x18] sm:$0xff]
    %v3726 = vpack.c.bf16 %v3721, %v3721
    %v3727 = vld [vmem:[#allocation11] sm:$0xff]
    %v3728 = vld [vmem:[#allocation11 + $0x8] sm:$0xff]
    %v3729 = vld [vmem:[#allocation11 + $0x10] sm:$0xff]
    %v3730 = vld [vmem:[#allocation11 + $0x18] sm:$0xff]
    %v3731 = vld [vmem:[#allocation11 + $0x20] sm:$0xff]
    %v3732 = vld [vmem:[#allocation11 + $0x28] sm:$0xff]
    %v3733 = vld [vmem:[#allocation11 + $0x30] sm:$0xff]
    %v3734 = vld [vmem:[#allocation11 + $0x38] sm:$0xff]
    %v3735 = vld [vmem:[#allocation11 + $0x40] sm:$0xff]
    %v3736 = vld [vmem:[#allocation11 + $0x48] sm:$0xff]
    %v3737 = vld [vmem:[#allocation11 + $0x50] sm:$0xff]
    %v3738 = vld [vmem:[#allocation11 + $0x58] sm:$0xff]
    %v3739 = vld [vmem:[#allocation11 + $0x60] sm:$0xff]
    %v3740 = vld [vmem:[#allocation11 + $0x68] sm:$0xff]
    %v3741 = vld [vmem:[#allocation11 + $0x70] sm:$0xff]
    %v3742 = vld [vmem:[#allocation11 + $0x78] sm:$0xff]
    %v3743 = vld [vmem:[#allocation11 + $0x80] sm:$0xff]
    %v3744 = vld [vmem:[#allocation11 + $0x88] sm:$0xff]
    %v3745 = vld [vmem:[#allocation11 + $0x90] sm:$0xff]
    %v3746 = vld [vmem:[#allocation11 + $0x98] sm:$0xff]
    %v3747 = vld [vmem:[#allocation11 + $0xa0] sm:$0xff]
    %v3748 = vld [vmem:[#allocation11 + $0xa8] sm:$0xff]
    %v3749 = vld [vmem:[#allocation11 + $0xb0] sm:$0xff]
    %v3750 = vld [vmem:[#allocation11 + $0xb8] sm:$0xff]
    %v3751 = vld [vmem:[#allocation11 + $0xc0] sm:$0xff]
    %v3752 = vld [vmem:[#allocation11 + $0xc8] sm:$0xff]
    %v3753 = vld [vmem:[#allocation11 + $0xd0] sm:$0xff]
    %v3754 = vld [vmem:[#allocation11 + $0xd8] sm:$0xff]
    %v3755 = vld [vmem:[#allocation11 + $0xe0] sm:$0xff]
    %v3756 = vld [vmem:[#allocation11 + $0xe8] sm:$0xff]
    %v3757 = vld [vmem:[#allocation11 + $0xf0] sm:$0xff]
    %v3758 = vld [vmem:[#allocation11 + $0xf8] sm:$0xff]
    %v3791 = vunpack.c.l.b16 %v3727
    %v3792 = vunpack.c.h.b16 %v3727
    %v3793 = vunpack.c.l.b16 %v3728
    %v3794 = vunpack.c.h.b16 %v3728
    %v3795 = vunpack.c.l.b16 %v3729
    %v3796 = vunpack.c.h.b16 %v3729
    %v3797 = vunpack.c.l.b16 %v3730
    %v3798 = vunpack.c.h.b16 %v3730
    %v3799 = vunpack.c.l.b16 %v3731
    %v3800 = vunpack.c.h.b16 %v3731
    %v3801 = vunpack.c.l.b16 %v3732
    %v3802 = vunpack.c.h.b16 %v3732
    %v3803 = vunpack.c.l.b16 %v3733
    %v3804 = vunpack.c.h.b16 %v3733
    %v3805 = vunpack.c.l.b16 %v3734
    %v3806 = vunpack.c.h.b16 %v3734
    %v3807 = vunpack.c.l.b16 %v3735
    %v3808 = vunpack.c.h.b16 %v3735
    %v3809 = vunpack.c.l.b16 %v3736
    %v3810 = vunpack.c.h.b16 %v3736
    %v3811 = vunpack.c.l.b16 %v3737
    %v3812 = vunpack.c.h.b16 %v3737
    %v3813 = vunpack.c.l.b16 %v3738
    %v3814 = vunpack.c.h.b16 %v3738
    %v3815 = vunpack.c.l.b16 %v3739
    %v3816 = vunpack.c.h.b16 %v3739
    %v3817 = vunpack.c.l.b16 %v3740
    %v3818 = vunpack.c.h.b16 %v3740
    %v3819 = vunpack.c.l.b16 %v3741
    %v3820 = vunpack.c.h.b16 %v3741
    %v3821 = vunpack.c.l.b16 %v3742
    %v3822 = vunpack.c.h.b16 %v3742
    %v3823 = vunpack.c.l.b16 %v3743
    %v3824 = vunpack.c.h.b16 %v3743
    %v3825 = vunpack.c.l.b16 %v3744
    %v3826 = vunpack.c.h.b16 %v3744
    %v3827 = vunpack.c.l.b16 %v3745
    %v3828 = vunpack.c.h.b16 %v3745
    %v3829 = vunpack.c.l.b16 %v3746
    %v3830 = vunpack.c.h.b16 %v3746
    %v3831 = vunpack.c.l.b16 %v3747
    %v3832 = vunpack.c.h.b16 %v3747
    %v3833 = vunpack.c.l.b16 %v3748
    %v3834 = vunpack.c.h.b16 %v3748
    %v3835 = vunpack.c.l.b16 %v3749
    %v3836 = vunpack.c.h.b16 %v3749
    %v3837 = vunpack.c.l.b16 %v3750
    %v3838 = vunpack.c.h.b16 %v3750
    %v3839 = vunpack.c.l.b16 %v3751
    %v3840 = vunpack.c.h.b16 %v3751
    %v3841 = vunpack.c.l.b16 %v3752
    %v3842 = vunpack.c.h.b16 %v3752
    %v3843 = vunpack.c.l.b16 %v3753
    %v3844 = vunpack.c.h.b16 %v3753
    %v3845 = vunpack.c.l.b16 %v3754
    %v3846 = vunpack.c.h.b16 %v3754
    %v3847 = vunpack.c.l.b16 %v3755
    %v3848 = vunpack.c.h.b16 %v3755
    %v3849 = vunpack.c.l.b16 %v3756
    %v3850 = vunpack.c.h.b16 %v3756
    %v3851 = vunpack.c.l.b16 %v3757
    %v3852 = vunpack.c.h.b16 %v3757
    %v3853 = vunpack.c.l.b16 %v3758
    %v3854 = vunpack.c.h.b16 %v3758
    %v3855 = vpack.c.b16 %v3795, %v3791
    %v3856 = vpack.c.b16 %v3796, %v3792
    %v3857 = vpack.c.b16 %v3797, %v3793
    %v3858 = vpack.c.b16 %v3798, %v3794
    %v3859 = vpack.c.b16 %v3803, %v3799
    %v3860 = vpack.c.b16 %v3804, %v3800
    %v3861 = vpack.c.b16 %v3805, %v3801
    %v3862 = vpack.c.b16 %v3806, %v3802
    %v3863 = vpack.c.b16 %v3811, %v3807
    %v3864 = vpack.c.b16 %v3812, %v3808
    %v3865 = vpack.c.b16 %v3813, %v3809
    %v3866 = vpack.c.b16 %v3814, %v3810
    %v3867 = vpack.c.b16 %v3819, %v3815
    %v3868 = vpack.c.b16 %v3820, %v3816
    %v3869 = vpack.c.b16 %v3821, %v3817
    %v3870 = vpack.c.b16 %v3822, %v3818
    %v3871 = vpack.c.b16 %v3827, %v3823
    %v3872 = vpack.c.b16 %v3828, %v3824
    %v3873 = vpack.c.b16 %v3829, %v3825
    %v3874 = vpack.c.b16 %v3830, %v3826
    %v3875 = vpack.c.b16 %v3835, %v3831
    %v3876 = vpack.c.b16 %v3836, %v3832
    %v3877 = vpack.c.b16 %v3837, %v3833
    %v3878 = vpack.c.b16 %v3838, %v3834
    %v3879 = vpack.c.b16 %v3843, %v3839
    %v3880 = vpack.c.b16 %v3844, %v3840
    %v3881 = vpack.c.b16 %v3845, %v3841
    %v3882 = vpack.c.b16 %v3846, %v3842
    %v3883 = vpack.c.b16 %v3851, %v3847
    %v3884 = vpack.c.b16 %v3852, %v3848
    %v3885 = vpack.c.b16 %v3853, %v3849
    %v3886 = vpack.c.b16 %v3854, %v3850
    %3919 = vmatpush.bf16.msra.mxu0 %v3883
    %3920 = vmatpush.bf16.msra.mxu0 %v3879
    %3921 = vmatpush.bf16.msra.mxu0 %v3875
    %3922 = vmatpush.bf16.msra.mxu0 %v3871
    %3923 = vmatpush.bf16.msra.mxu0 %v3867
    %3924 = vmatpush.bf16.msra.mxu0 %v3863
    %3925 = vmatpush.bf16.msra.mxu0 %v3859
    %3926 = vmatpush.bf16.msra.mxu0 %v3855
    %3927 = vmatmul.bf16.gmra.mxu0 %v3726
    %v3928 = vpop.f32.mrf.mxu0
    %v3929 = vadd.f32 0.0, %v3928
    %v3930 = vpop.f32.mrf.mxu0
    %3931 = vdwg.mxu0
    %3932 = vmatpush.bf16.msra.mxu0 %v3884
    %3933 = vmatpush.bf16.msra.mxu0 %v3880
    %3934 = vmatpush.bf16.msra.mxu0 %v3876
    %3935 = vmatpush.bf16.msra.mxu0 %v3872
    %3936 = vmatpush.bf16.msra.mxu0 %v3868
    %3937 = vmatpush.bf16.msra.mxu0 %v3864
    %3938 = vmatpush.bf16.msra.mxu0 %v3860
    %3939 = vmatpush.bf16.msra.mxu0 %v3856
    %3940 = vmatmul.bf16.gmra.mxu0 %v3726
    %v3941 = vpop.f32.mrf.mxu0
    %v3942 = vadd.f32 0.0, %v3941
    %v3943 = vpop.f32.mrf.mxu0
    %3944 = vdwg.mxu0
    %3945 = vmatpush.bf16.msra.mxu0 %v3885
    %3946 = vmatpush.bf16.msra.mxu0 %v3881
    %3947 = vmatpush.bf16.msra.mxu0 %v3877
    %3948 = vmatpush.bf16.msra.mxu0 %v3873
    %3949 = vmatpush.bf16.msra.mxu0 %v3869
    %3950 = vmatpush.bf16.msra.mxu0 %v3865
    %3951 = vmatpush.bf16.msra.mxu0 %v3861
    %3952 = vmatpush.bf16.msra.mxu0 %v3857
    %3953 = vmatmul.bf16.gmra.mxu0 %v3726
    %v3954 = vpop.f32.mrf.mxu0
    %v3955 = vadd.f32 0.0, %v3954
    %v3956 = vpop.f32.mrf.mxu0
    %3957 = vdwg.mxu0
    %3958 = vmatpush.bf16.msra.mxu0 %v3886
    %3959 = vmatpush.bf16.msra.mxu0 %v3882
    %3960 = vmatpush.bf16.msra.mxu0 %v3878
    %3961 = vmatpush.bf16.msra.mxu0 %v3874
    %3962 = vmatpush.bf16.msra.mxu0 %v3870
    %3963 = vmatpush.bf16.msra.mxu0 %v3866
    %3964 = vmatpush.bf16.msra.mxu0 %v3862
    %3965 = vmatpush.bf16.msra.mxu0 %v3858
    %3966 = vmatmul.bf16.gmra.mxu0 %v3726
    %v3967 = vpop.f32.mrf.mxu0
    %v3968 = vadd.f32 0.0, %v3967
    %v3969 = vpop.f32.mrf.mxu0
    %3970 = vdwg.mxu0
    %v3971 = vadd.f32 %v3722, %v3929
    %v3972 = vadd.f32 %v3723, %v3942
    %v3973 = vadd.f32 %v3724, %v3955
    %v3974 = vadd.f32 %v3725, %v3968
    %v3975 = vmul.f32 %v3971, 0.5
    %v3976 = vtanh.pop %v3975
    %v3977 = vadd.f32 %v3976, 1.0
    %v3978 = vmul.f32 %v3977, 0.5
    %v3979 = vmul.f32 %v3972, 0.5
    %v3980 = vtanh.pop %v3979
    %v3981 = vadd.f32 %v3980, 1.0
    %v3982 = vmul.f32 %v3981, 0.5
    %v3983 = vtanh.pop %v3973
    %v3984 = vmul.f32 %v3974, 0.5
    %v3985 = vtanh.pop %v3984
    %v3986 = vadd.f32 %v3985, 1.0
    %v3987 = vmul.f32 %v3986, 0.5
    %v3988 = vld [vmem:[#allocation3] sm:$0xff]
    %v3989 = vmul.f32 %v3982, %v3988
    %v3990 = vmul.f32 %v3978, %v3983
    %v3991 = vadd.f32 %v3989, %v3990
    %v3992 = vtanh.pop %v3991
    %v3993 = vmul.f32 %v3987, %v3992
    %3994 = vst [vmem:[#allocation3] sm:$0xff] %v3991
    %3995 = vst [vmem:[#allocation2] sm:$0xff] %v3993
    %v3996 = vld [vmem:[#allocation2] sm:$0xff]
    %v3997 = vld [vmem:[%s1397] sm:$0xff]
    %v3998 = vld [vmem:[%s1397 + $0x8] sm:$0xff]
    %v3999 = vld [vmem:[%s1397 + $0x10] sm:$0xff]
    %v4000 = vld [vmem:[%s1397 + $0x18] sm:$0xff]
    %v4001 = vpack.c.bf16 %v3996, %v3996
    %v4002 = vld [vmem:[#allocation11] sm:$0xff]
    %v4003 = vld [vmem:[#allocation11 + $0x8] sm:$0xff]
    %v4004 = vld [vmem:[#allocation11 + $0x10] sm:$0xff]
    %v4005 = vld [vmem:[#allocation11 + $0x18] sm:$0xff]
    %v4006 = vld [vmem:[#allocation11 + $0x20] sm:$0xff]
    %v4007 = vld [vmem:[#allocation11 + $0x28] sm:$0xff]
    %v4008 = vld [vmem:[#allocation11 + $0x30] sm:$0xff]
    %v4009 = vld [vmem:[#allocation11 + $0x38] sm:$0xff]
    %v4010 = vld [vmem:[#allocation11 + $0x40] sm:$0xff]
    %v4011 = vld [vmem:[#allocation11 + $0x48] sm:$0xff]
    %v4012 = vld [vmem:[#allocation11 + $0x50] sm:$0xff]
    %v4013 = vld [vmem:[#allocation11 + $0x58] sm:$0xff]
    %v4014 = vld [vmem:[#allocation11 + $0x60] sm:$0xff]
    %v4015 = vld [vmem:[#allocation11 + $0x68] sm:$0xff]
    %v4016 = vld [vmem:[#allocation11 + $0x70] sm:$0xff]
    %v4017 = vld [vmem:[#allocation11 + $0x78] sm:$0xff]
    %v4018 = vld [vmem:[#allocation11 + $0x80] sm:$0xff]
    %v4019 = vld [vmem:[#allocation11 + $0x88] sm:$0xff]
    %v4020 = vld [vmem:[#allocation11 + $0x90] sm:$0xff]
    %v4021 = vld [vmem:[#allocation11 + $0x98] sm:$0xff]
    %v4022 = vld [vmem:[#allocation11 + $0xa0] sm:$0xff]
    %v4023 = vld [vmem:[#allocation11 + $0xa8] sm:$0xff]
    %v4024 = vld [vmem:[#allocation11 + $0xb0] sm:$0xff]
    %v4025 = vld [vmem:[#allocation11 + $0xb8] sm:$0xff]
    %v4026 = vld [vmem:[#allocation11 + $0xc0] sm:$0xff]
    %v4027 = vld [vmem:[#allocation11 + $0xc8] sm:$0xff]
    %v4028 = vld [vmem:[#allocation11 + $0xd0] sm:$0xff]
    %v4029 = vld [vmem:[#allocation11 + $0xd8] sm:$0xff]
    %v4030 = vld [vmem:[#allocation11 + $0xe0] sm:$0xff]
    %v4031 = vld [vmem:[#allocation11 + $0xe8] sm:$0xff]
    %v4032 = vld [vmem:[#allocation11 + $0xf0] sm:$0xff]
    %v4033 = vld [vmem:[#allocation11 + $0xf8] sm:$0xff]
    %v4066 = vunpack.c.l.b16 %v4002
    %v4067 = vunpack.c.h.b16 %v4002
    %v4068 = vunpack.c.l.b16 %v4003
    %v4069 = vunpack.c.h.b16 %v4003
    %v4070 = vunpack.c.l.b16 %v4004
    %v4071 = vunpack.c.h.b16 %v4004
    %v4072 = vunpack.c.l.b16 %v4005
    %v4073 = vunpack.c.h.b16 %v4005
    %v4074 = vunpack.c.l.b16 %v4006
    %v4075 = vunpack.c.h.b16 %v4006
    %v4076 = vunpack.c.l.b16 %v4007
    %v4077 = vunpack.c.h.b16 %v4007
    %v4078 = vunpack.c.l.b16 %v4008
    %v4079 = vunpack.c.h.b16 %v4008
    %v4080 = vunpack.c.l.b16 %v4009
    %v4081 = vunpack.c.h.b16 %v4009
    %v4082 = vunpack.c.l.b16 %v4010
    %v4083 = vunpack.c.h.b16 %v4010
    %v4084 = vunpack.c.l.b16 %v4011
    %v4085 = vunpack.c.h.b16 %v4011
    %v4086 = vunpack.c.l.b16 %v4012
    %v4087 = vunpack.c.h.b16 %v4012
    %v4088 = vunpack.c.l.b16 %v4013
    %v4089 = vunpack.c.h.b16 %v4013
    %v4090 = vunpack.c.l.b16 %v4014
    %v4091 = vunpack.c.h.b16 %v4014
    %v4092 = vunpack.c.l.b16 %v4015
    %v4093 = vunpack.c.h.b16 %v4015
    %v4094 = vunpack.c.l.b16 %v4016
    %v4095 = vunpack.c.h.b16 %v4016
    %v4096 = vunpack.c.l.b16 %v4017
    %v4097 = vunpack.c.h.b16 %v4017
    %v4098 = vunpack.c.l.b16 %v4018
    %v4099 = vunpack.c.h.b16 %v4018
    %v4100 = vunpack.c.l.b16 %v4019
    %v4101 = vunpack.c.h.b16 %v4019
    %v4102 = vunpack.c.l.b16 %v4020
    %v4103 = vunpack.c.h.b16 %v4020
    %v4104 = vunpack.c.l.b16 %v4021
    %v4105 = vunpack.c.h.b16 %v4021
    %v4106 = vunpack.c.l.b16 %v4022
    %v4107 = vunpack.c.h.b16 %v4022
    %v4108 = vunpack.c.l.b16 %v4023
    %v4109 = vunpack.c.h.b16 %v4023
    %v4110 = vunpack.c.l.b16 %v4024
    %v4111 = vunpack.c.h.b16 %v4024
    %v4112 = vunpack.c.l.b16 %v4025
    %v4113 = vunpack.c.h.b16 %v4025
    %v4114 = vunpack.c.l.b16 %v4026
    %v4115 = vunpack.c.h.b16 %v4026
    %v4116 = vunpack.c.l.b16 %v4027
    %v4117 = vunpack.c.h.b16 %v4027
    %v4118 = vunpack.c.l.b16 %v4028
    %v4119 = vunpack.c.h.b16 %v4028
    %v4120 = vunpack.c.l.b16 %v4029
    %v4121 = vunpack.c.h.b16 %v4029
    %v4122 = vunpack.c.l.b16 %v4030
    %v4123 = vunpack.c.h.b16 %v4030
    %v4124 = vunpack.c.l.b16 %v4031
    %v4125 = vunpack.c.h.b16 %v4031
    %v4126 = vunpack.c.l.b16 %v4032
    %v4127 = vunpack.c.h.b16 %v4032
    %v4128 = vunpack.c.l.b16 %v4033
    %v4129 = vunpack.c.h.b16 %v4033
    %v4130 = vpack.c.b16 %v4070, %v4066
    %v4131 = vpack.c.b16 %v4071, %v4067
    %v4132 = vpack.c.b16 %v4072, %v4068
    %v4133 = vpack.c.b16 %v4073, %v4069
    %v4134 = vpack.c.b16 %v4078, %v4074
    %v4135 = vpack.c.b16 %v4079, %v4075
    %v4136 = vpack.c.b16 %v4080, %v4076
    %v4137 = vpack.c.b16 %v4081, %v4077
    %v4138 = vpack.c.b16 %v4086, %v4082
    %v4139 = vpack.c.b16 %v4087, %v4083
    %v4140 = vpack.c.b16 %v4088, %v4084
    %v4141 = vpack.c.b16 %v4089, %v4085
    %v4142 = vpack.c.b16 %v4094, %v4090
    %v4143 = vpack.c.b16 %v4095, %v4091
    %v4144 = vpack.c.b16 %v4096, %v4092
    %v4145 = vpack.c.b16 %v4097, %v4093
    %v4146 = vpack.c.b16 %v4102, %v4098
    %v4147 = vpack.c.b16 %v4103, %v4099
    %v4148 = vpack.c.b16 %v4104, %v4100
    %v4149 = vpack.c.b16 %v4105, %v4101
    %v4150 = vpack.c.b16 %v4110, %v4106
    %v4151 = vpack.c.b16 %v4111, %v4107
    %v4152 = vpack.c.b16 %v4112, %v4108
    %v4153 = vpack.c.b16 %v4113, %v4109
    %v4154 = vpack.c.b16 %v4118, %v4114
    %v4155 = vpack.c.b16 %v4119, %v4115
    %v4156 = vpack.c.b16 %v4120, %v4116
    %v4157 = vpack.c.b16 %v4121, %v4117
    %v4158 = vpack.c.b16 %v4126, %v4122
    %v4159 = vpack.c.b16 %v4127, %v4123
    %v4160 = vpack.c.b16 %v4128, %v4124
    %v4161 = vpack.c.b16 %v4129, %v4125
    %4194 = vmatpush.bf16.msra.mxu0 %v4158
    %4195 = vmatpush.bf16.msra.mxu0 %v4154
    %4196 = vmatpush.bf16.msra.mxu0 %v4150
    %4197 = vmatpush.bf16.msra.mxu0 %v4146
    %4198 = vmatpush.bf16.msra.mxu0 %v4142
    %4199 = vmatpush.bf16.msra.mxu0 %v4138
    %4200 = vmatpush.bf16.msra.mxu0 %v4134
    %4201 = vmatpush.bf16.msra.mxu0 %v4130
    %4202 = vmatmul.bf16.gmra.mxu0 %v4001
    %v4203 = vpop.f32.mrf.mxu0
    %v4204 = vadd.f32 0.0, %v4203
    %v4205 = vpop.f32.mrf.mxu0
    %4206 = vdwg.mxu0
    %4207 = vmatpush.bf16.msra.mxu0 %v4159
    %4208 = vmatpush.bf16.msra.mxu0 %v4155
    %4209 = vmatpush.bf16.msra.mxu0 %v4151
    %4210 = vmatpush.bf16.msra.mxu0 %v4147
    %4211 = vmatpush.bf16.msra.mxu0 %v4143
    %4212 = vmatpush.bf16.msra.mxu0 %v4139
    %4213 = vmatpush.bf16.msra.mxu0 %v4135
    %4214 = vmatpush.bf16.msra.mxu0 %v4131
    %4215 = vmatmul.bf16.gmra.mxu0 %v4001
    %v4216 = vpop.f32.mrf.mxu0
    %v4217 = vadd.f32 0.0, %v4216
    %v4218 = vpop.f32.mrf.mxu0
    %4219 = vdwg.mxu0
    %4220 = vmatpush.bf16.msra.mxu0 %v4160
    %4221 = vmatpush.bf16.msra.mxu0 %v4156
    %4222 = vmatpush.bf16.msra.mxu0 %v4152
    %4223 = vmatpush.bf16.msra.mxu0 %v4148
    %4224 = vmatpush.bf16.msra.mxu0 %v4144
    %4225 = vmatpush.bf16.msra.mxu0 %v4140
    %4226 = vmatpush.bf16.msra.mxu0 %v4136
    %4227 = vmatpush.bf16.msra.mxu0 %v4132
    %4228 = vmatmul.bf16.gmra.mxu0 %v4001
    %v4229 = vpop.f32.mrf.mxu0
    %v4230 = vadd.f32 0.0, %v4229
    %v4231 = vpop.f32.mrf.mxu0
    %4232 = vdwg.mxu0
    %4233 = vmatpush.bf16.msra.mxu0 %v4161
    %4234 = vmatpush.bf16.msra.mxu0 %v4157
    %4235 = vmatpush.bf16.msra.mxu0 %v4153
    %4236 = vmatpush.bf16.msra.mxu0 %v4149
    %4237 = vmatpush.bf16.msra.mxu0 %v4145
    %4238 = vmatpush.bf16.msra.mxu0 %v4141
    %4239 = vmatpush.bf16.msra.mxu0 %v4137
    %4240 = vmatpush.bf16.msra.mxu0 %v4133
    %4241 = vmatmul.bf16.gmra.mxu0 %v4001
    %v4242 = vpop.f32.mrf.mxu0
    %v4243 = vadd.f32 0.0, %v4242
    %v4244 = vpop.f32.mrf.mxu0
    %4245 = vdwg.mxu0
    %v4246 = vadd.f32 %v3997, %v4204
    %v4247 = vadd.f32 %v3998, %v4217
    %v4248 = vadd.f32 %v3999, %v4230
    %v4249 = vadd.f32 %v4000, %v4243
    %v4250 = vmul.f32 %v4246, 0.5
    %v4251 = vtanh.pop %v4250
    %v4252 = vadd.f32 %v4251, 1.0
    %v4253 = vmul.f32 %v4252, 0.5
    %v4254 = vmul.f32 %v4247, 0.5
    %v4255 = vtanh.pop %v4254
    %v4256 = vadd.f32 %v4255, 1.0
    %v4257 = vmul.f32 %v4256, 0.5
    %v4258 = vtanh.pop %v4248
    %v4259 = vmul.f32 %v4249, 0.5
    %v4260 = vtanh.pop %v4259
    %v4261 = vadd.f32 %v4260, 1.0
    %v4262 = vmul.f32 %v4261, 0.5
    %v4263 = vld [vmem:[#allocation3] sm:$0xff]
    %v4264 = vmul.f32 %v4257, %v4263
    %v4265 = vmul.f32 %v4253, %v4258
    %v4266 = vadd.f32 %v4264, %v4265
    %v4267 = vtanh.pop %v4266
    %v4268 = vmul.f32 %v4262, %v4267
    %4269 = vst [vmem:[#allocation3] sm:$0xff] %v4266
    %4270 = vst [vmem:[#allocation2] sm:$0xff] %v4268
    %v4271 = vld [vmem:[#allocation2] sm:$0xff]
    %v4272 = vld [vmem:[%s1676] sm:$0xff]
    %v4273 = vld [vmem:[%s1676 + $0x8] sm:$0xff]
    %v4274 = vld [vmem:[%s1676 + $0x10] sm:$0xff]
    %v4275 = vld [vmem:[%s1676 + $0x18] sm:$0xff]
    %v4276 = vpack.c.bf16 %v4271, %v4271
    %v4277 = vld [vmem:[#allocation11] sm:$0xff]
    %v4278 = vld [vmem:[#allocation11 + $0x8] sm:$0xff]
    %v4279 = vld [vmem:[#allocation11 + $0x10] sm:$0xff]
    %v4280 = vld [vmem:[#allocation11 + $0x18] sm:$0xff]
    %v4281 = vld [vmem:[#allocation11 + $0x20] sm:$0xff]
    %v4282 = vld [vmem:[#allocation11 + $0x28] sm:$0xff]
    %v4283 = vld [vmem:[#allocation11 + $0x30] sm:$0xff]
    %v4284 = vld [vmem:[#allocation11 + $0x38] sm:$0xff]
    %v4285 = vld [vmem:[#allocation11 + $0x40] sm:$0xff]
    %v4286 = vld [vmem:[#allocation11 + $0x48] sm:$0xff]
    %v4287 = vld [vmem:[#allocation11 + $0x50] sm:$0xff]
    %v4288 = vld [vmem:[#allocation11 + $0x58] sm:$0xff]
    %v4289 = vld [vmem:[#allocation11 + $0x60] sm:$0xff]
    %v4290 = vld [vmem:[#allocation11 + $0x68] sm:$0xff]
    %v4291 = vld [vmem:[#allocation11 + $0x70] sm:$0xff]
    %v4292 = vld [vmem:[#allocation11 + $0x78] sm:$0xff]
    %v4293 = vld [vmem:[#allocation11 + $0x80] sm:$0xff]
    %v4294 = vld [vmem:[#allocation11 + $0x88] sm:$0xff]
    %v4295 = vld [vmem:[#allocation11 + $0x90] sm:$0xff]
    %v4296 = vld [vmem:[#allocation11 + $0x98] sm:$0xff]
    %v4297 = vld [vmem:[#allocation11 + $0xa0] sm:$0xff]
    %v4298 = vld [vmem:[#allocation11 + $0xa8] sm:$0xff]
    %v4299 = vld [vmem:[#allocation11 + $0xb0] sm:$0xff]
    %v4300 = vld [vmem:[#allocation11 + $0xb8] sm:$0xff]
    %v4301 = vld [vmem:[#allocation11 + $0xc0] sm:$0xff]
    %v4302 = vld [vmem:[#allocation11 + $0xc8] sm:$0xff]
    %v4303 = vld [vmem:[#allocation11 + $0xd0] sm:$0xff]
    %v4304 = vld [vmem:[#allocation11 + $0xd8] sm:$0xff]
    %v4305 = vld [vmem:[#allocation11 + $0xe0] sm:$0xff]
    %v4306 = vld [vmem:[#allocation11 + $0xe8] sm:$0xff]
    %v4307 = vld [vmem:[#allocation11 + $0xf0] sm:$0xff]
    %v4308 = vld [vmem:[#allocation11 + $0xf8] sm:$0xff]
    %v4341 = vunpack.c.l.b16 %v4277
    %v4342 = vunpack.c.h.b16 %v4277
    %v4343 = vunpack.c.l.b16 %v4278
    %v4344 = vunpack.c.h.b16 %v4278
    %v4345 = vunpack.c.l.b16 %v4279
    %v4346 = vunpack.c.h.b16 %v4279
    %v4347 = vunpack.c.l.b16 %v4280
    %v4348 = vunpack.c.h.b16 %v4280
    %v4349 = vunpack.c.l.b16 %v4281
    %v4350 = vunpack.c.h.b16 %v4281
    %v4351 = vunpack.c.l.b16 %v4282
    %v4352 = vunpack.c.h.b16 %v4282
    %v4353 = vunpack.c.l.b16 %v4283
    %v4354 = vunpack.c.h.b16 %v4283
    %v4355 = vunpack.c.l.b16 %v4284
    %v4356 = vunpack.c.h.b16 %v4284
    %v4357 = vunpack.c.l.b16 %v4285
    %v4358 = vunpack.c.h.b16 %v4285
    %v4359 = vunpack.c.l.b16 %v4286
    %v4360 = vunpack.c.h.b16 %v4286
    %v4361 = vunpack.c.l.b16 %v4287
    %v4362 = vunpack.c.h.b16 %v4287
    %v4363 = vunpack.c.l.b16 %v4288
    %v4364 = vunpack.c.h.b16 %v4288
    %v4365 = vunpack.c.l.b16 %v4289
    %v4366 = vunpack.c.h.b16 %v4289
    %v4367 = vunpack.c.l.b16 %v4290
    %v4368 = vunpack.c.h.b16 %v4290
    %v4369 = vunpack.c.l.b16 %v4291
    %v4370 = vunpack.c.h.b16 %v4291
    %v4371 = vunpack.c.l.b16 %v4292
    %v4372 = vunpack.c.h.b16 %v4292
    %v4373 = vunpack.c.l.b16 %v4293
    %v4374 = vunpack.c.h.b16 %v4293
    %v4375 = vunpack.c.l.b16 %v4294
    %v4376 = vunpack.c.h.b16 %v4294
    %v4377 = vunpack.c.l.b16 %v4295
    %v4378 = vunpack.c.h.b16 %v4295
    %v4379 = vunpack.c.l.b16 %v4296
    %v4380 = vunpack.c.h.b16 %v4296
    %v4381 = vunpack.c.l.b16 %v4297
    %v4382 = vunpack.c.h.b16 %v4297
    %v4383 = vunpack.c.l.b16 %v4298
    %v4384 = vunpack.c.h.b16 %v4298
    %v4385 = vunpack.c.l.b16 %v4299
    %v4386 = vunpack.c.h.b16 %v4299
    %v4387 = vunpack.c.l.b16 %v4300
    %v4388 = vunpack.c.h.b16 %v4300
    %v4389 = vunpack.c.l.b16 %v4301
    %v4390 = vunpack.c.h.b16 %v4301
    %v4391 = vunpack.c.l.b16 %v4302
    %v4392 = vunpack.c.h.b16 %v4302
    %v4393 = vunpack.c.l.b16 %v4303
    %v4394 = vunpack.c.h.b16 %v4303
    %v4395 = vunpack.c.l.b16 %v4304
    %v4396 = vunpack.c.h.b16 %v4304
    %v4397 = vunpack.c.l.b16 %v4305
    %v4398 = vunpack.c.h.b16 %v4305
    %v4399 = vunpack.c.l.b16 %v4306
    %v4400 = vunpack.c.h.b16 %v4306
    %v4401 = vunpack.c.l.b16 %v4307
    %v4402 = vunpack.c.h.b16 %v4307
    %v4403 = vunpack.c.l.b16 %v4308
    %v4404 = vunpack.c.h.b16 %v4308
    %v4405 = vpack.c.b16 %v4345, %v4341
    %v4406 = vpack.c.b16 %v4346, %v4342
    %v4407 = vpack.c.b16 %v4347, %v4343
    %v4408 = vpack.c.b16 %v4348, %v4344
    %v4409 = vpack.c.b16 %v4353, %v4349
    %v4410 = vpack.c.b16 %v4354, %v4350
    %v4411 = vpack.c.b16 %v4355, %v4351
    %v4412 = vpack.c.b16 %v4356, %v4352
    %v4413 = vpack.c.b16 %v4361, %v4357
    %v4414 = vpack.c.b16 %v4362, %v4358
    %v4415 = vpack.c.b16 %v4363, %v4359
    %v4416 = vpack.c.b16 %v4364, %v4360
    %v4417 = vpack.c.b16 %v4369, %v4365
    %v4418 = vpack.c.b16 %v4370, %v4366
    %v4419 = vpack.c.b16 %v4371, %v4367
    %v4420 = vpack.c.b16 %v4372, %v4368
    %v4421 = vpack.c.b16 %v4377, %v4373
    %v4422 = vpack.c.b16 %v4378, %v4374
    %v4423 = vpack.c.b16 %v4379, %v4375
    %v4424 = vpack.c.b16 %v4380, %v4376
    %v4425 = vpack.c.b16 %v4385, %v4381
    %v4426 = vpack.c.b16 %v4386, %v4382
    %v4427 = vpack.c.b16 %v4387, %v4383
    %v4428 = vpack.c.b16 %v4388, %v4384
    %v4429 = vpack.c.b16 %v4393, %v4389
    %v4430 = vpack.c.b16 %v4394, %v4390
    %v4431 = vpack.c.b16 %v4395, %v4391
    %v4432 = vpack.c.b16 %v4396, %v4392
    %v4433 = vpack.c.b16 %v4401, %v4397
    %v4434 = vpack.c.b16 %v4402, %v4398
    %v4435 = vpack.c.b16 %v4403, %v4399
    %v4436 = vpack.c.b16 %v4404, %v4400
    %4469 = vmatpush.bf16.msra.mxu0 %v4433
    %4470 = vmatpush.bf16.msra.mxu0 %v4429
    %4471 = vmatpush.bf16.msra.mxu0 %v4425
    %4472 = vmatpush.bf16.msra.mxu0 %v4421
    %4473 = vmatpush.bf16.msra.mxu0 %v4417
    %4474 = vmatpush.bf16.msra.mxu0 %v4413
    %4475 = vmatpush.bf16.msra.mxu0 %v4409
    %4476 = vmatpush.bf16.msra.mxu0 %v4405
    %4477 = vmatmul.bf16.gmra.mxu0 %v4276
    %v4478 = vpop.f32.mrf.mxu0
    %v4479 = vadd.f32 0.0, %v4478
    %v4480 = vpop.f32.mrf.mxu0
    %4481 = vdwg.mxu0
    %4482 = vmatpush.bf16.msra.mxu0 %v4434
    %4483 = vmatpush.bf16.msra.mxu0 %v4430
    %4484 = vmatpush.bf16.msra.mxu0 %v4426
    %4485 = vmatpush.bf16.msra.mxu0 %v4422
    %4486 = vmatpush.bf16.msra.mxu0 %v4418
    %4487 = vmatpush.bf16.msra.mxu0 %v4414
    %4488 = vmatpush.bf16.msra.mxu0 %v4410
    %4489 = vmatpush.bf16.msra.mxu0 %v4406
    %4490 = vmatmul.bf16.gmra.mxu0 %v4276
    %v4491 = vpop.f32.mrf.mxu0
    %v4492 = vadd.f32 0.0, %v4491
    %v4493 = vpop.f32.mrf.mxu0
    %4494 = vdwg.mxu0
    %4495 = vmatpush.bf16.msra.mxu0 %v4435
    %4496 = vmatpush.bf16.msra.mxu0 %v4431
    %4497 = vmatpush.bf16.msra.mxu0 %v4427
    %4498 = vmatpush.bf16.msra.mxu0 %v4423
    %4499 = vmatpush.bf16.msra.mxu0 %v4419
    %4500 = vmatpush.bf16.msra.mxu0 %v4415
    %4501 = vmatpush.bf16.msra.mxu0 %v4411
    %4502 = vmatpush.bf16.msra.mxu0 %v4407
    %4503 = vmatmul.bf16.gmra.mxu0 %v4276
    %v4504 = vpop.f32.mrf.mxu0
    %v4505 = vadd.f32 0.0, %v4504
    %v4506 = vpop.f32.mrf.mxu0
    %4507 = vdwg.mxu0
    %4508 = vmatpush.bf16.msra.mxu0 %v4436
    %4509 = vmatpush.bf16.msra.mxu0 %v4432
    %4510 = vmatpush.bf16.msra.mxu0 %v4428
    %4511 = vmatpush.bf16.msra.mxu0 %v4424
    %4512 = vmatpush.bf16.msra.mxu0 %v4420
    %4513 = vmatpush.bf16.msra.mxu0 %v4416
    %4514 = vmatpush.bf16.msra.mxu0 %v4412
    %4515 = vmatpush.bf16.msra.mxu0 %v4408
    %4516 = vmatmul.bf16.gmra.mxu0 %v4276
    %v4517 = vpop.f32.mrf.mxu0
    %v4518 = vadd.f32 0.0, %v4517
    %v4519 = vpop.f32.mrf.mxu0
    %4520 = vdwg.mxu0
    %v4521 = vadd.f32 %v4272, %v4479
    %v4522 = vadd.f32 %v4273, %v4492
    %v4523 = vadd.f32 %v4274, %v4505
    %v4524 = vadd.f32 %v4275, %v4518
    %v4525 = vmul.f32 %v4521, 0.5
    %v4526 = vtanh.pop %v4525
    %v4527 = vadd.f32 %v4526, 1.0
    %v4528 = vmul.f32 %v4527, 0.5
    %v4529 = vmul.f32 %v4522, 0.5
    %v4530 = vtanh.pop %v4529
    %v4531 = vadd.f32 %v4530, 1.0
    %v4532 = vmul.f32 %v4531, 0.5
    %v4533 = vtanh.pop %v4523
    %v4534 = vmul.f32 %v4524, 0.5
    %v4535 = vtanh.pop %v4534
    %v4536 = vadd.f32 %v4535, 1.0
    %v4537 = vmul.f32 %v4536, 0.5
    %v4538 = vld [vmem:[#allocation3] sm:$0xff]
    %v4539 = vmul.f32 %v4532, %v4538
    %v4540 = vmul.f32 %v4528, %v4533
    %v4541 = vadd.f32 %v4539, %v4540
    %v4542 = vtanh.pop %v4541
    %v4543 = vmul.f32 %v4537, %v4542
    %4544 = vst [vmem:[#allocation3] sm:$0xff] %v4541
    %4545 = vst [vmem:[#allocation2] sm:$0xff] %v4543
    %v4546 = vld [vmem:[#allocation2] sm:$0xff]
    %v4547 = vld [vmem:[%s1955] sm:$0xff]
    %v4548 = vld [vmem:[%s1955 + $0x8] sm:$0xff]
    %v4549 = vld [vmem:[%s1955 + $0x10] sm:$0xff]
    %v4550 = vld [vmem:[%s1955 + $0x18] sm:$0xff]
    %v4551 = vpack.c.bf16 %v4546, %v4546
    %v4552 = vld [vmem:[#allocation11] sm:$0xff]
    %v4553 = vld [vmem:[#allocation11 + $0x8] sm:$0xff]
    %v4554 = vld [vmem:[#allocation11 + $0x10] sm:$0xff]
    %v4555 = vld [vmem:[#allocation11 + $0x18] sm:$0xff]
    %v4556 = vld [vmem:[#allocation11 + $0x20] sm:$0xff]
    %v4557 = vld [vmem:[#allocation11 + $0x28] sm:$0xff]
    %v4558 = vld [vmem:[#allocation11 + $0x30] sm:$0xff]
    %v4559 = vld [vmem:[#allocation11 + $0x38] sm:$0xff]
    %v4560 = vld [vmem:[#allocation11 + $0x40] sm:$0xff]
    %v4561 = vld [vmem:[#allocation11 + $0x48] sm:$0xff]
    %v4562 = vld [vmem:[#allocation11 + $0x50] sm:$0xff]
    %v4563 = vld [vmem:[#allocation11 + $0x58] sm:$0xff]
    %v4564 = vld [vmem:[#allocation11 + $0x60] sm:$0xff]
    %v4565 = vld [vmem:[#allocation11 + $0x68] sm:$0xff]
    %v4566 = vld [vmem:[#allocation11 + $0x70] sm:$0xff]
    %v4567 = vld [vmem:[#allocation11 + $0x78] sm:$0xff]
    %v4568 = vld [vmem:[#allocation11 + $0x80] sm:$0xff]
    %v4569 = vld [vmem:[#allocation11 + $0x88] sm:$0xff]
    %v4570 = vld [vmem:[#allocation11 + $0x90] sm:$0xff]
    %v4571 = vld [vmem:[#allocation11 + $0x98] sm:$0xff]
    %v4572 = vld [vmem:[#allocation11 + $0xa0] sm:$0xff]
    %v4573 = vld [vmem:[#allocation11 + $0xa8] sm:$0xff]
    %v4574 = vld [vmem:[#allocation11 + $0xb0] sm:$0xff]
    %v4575 = vld [vmem:[#allocation11 + $0xb8] sm:$0xff]
    %v4576 = vld [vmem:[#allocation11 + $0xc0] sm:$0xff]
    %v4577 = vld [vmem:[#allocation11 + $0xc8] sm:$0xff]
    %v4578 = vld [vmem:[#allocation11 + $0xd0] sm:$0xff]
    %v4579 = vld [vmem:[#allocation11 + $0xd8] sm:$0xff]
    %v4580 = vld [vmem:[#allocation11 + $0xe0] sm:$0xff]
    %v4581 = vld [vmem:[#allocation11 + $0xe8] sm:$0xff]
    %v4582 = vld [vmem:[#allocation11 + $0xf0] sm:$0xff]
    %v4583 = vld [vmem:[#allocation11 + $0xf8] sm:$0xff]
    %v4616 = vunpack.c.l.b16 %v4552
    %v4617 = vunpack.c.h.b16 %v4552
    %v4618 = vunpack.c.l.b16 %v4553
    %v4619 = vunpack.c.h.b16 %v4553
    %v4620 = vunpack.c.l.b16 %v4554
    %v4621 = vunpack.c.h.b16 %v4554
    %v4622 = vunpack.c.l.b16 %v4555
    %v4623 = vunpack.c.h.b16 %v4555
    %v4624 = vunpack.c.l.b16 %v4556
    %v4625 = vunpack.c.h.b16 %v4556
    %v4626 = vunpack.c.l.b16 %v4557
    %v4627 = vunpack.c.h.b16 %v4557
    %v4628 = vunpack.c.l.b16 %v4558
    %v4629 = vunpack.c.h.b16 %v4558
    %v4630 = vunpack.c.l.b16 %v4559
    %v4631 = vunpack.c.h.b16 %v4559
    %v4632 = vunpack.c.l.b16 %v4560
    %v4633 = vunpack.c.h.b16 %v4560
    %v4634 = vunpack.c.l.b16 %v4561
    %v4635 = vunpack.c.h.b16 %v4561
    %v4636 = vunpack.c.l.b16 %v4562
    %v4637 = vunpack.c.h.b16 %v4562
    %v4638 = vunpack.c.l.b16 %v4563
    %v4639 = vunpack.c.h.b16 %v4563
    %v4640 = vunpack.c.l.b16 %v4564
    %v4641 = vunpack.c.h.b16 %v4564
    %v4642 = vunpack.c.l.b16 %v4565
    %v4643 = vunpack.c.h.b16 %v4565
    %v4644 = vunpack.c.l.b16 %v4566
    %v4645 = vunpack.c.h.b16 %v4566
    %v4646 = vunpack.c.l.b16 %v4567
    %v4647 = vunpack.c.h.b16 %v4567
    %v4648 = vunpack.c.l.b16 %v4568
    %v4649 = vunpack.c.h.b16 %v4568
    %v4650 = vunpack.c.l.b16 %v4569
    %v4651 = vunpack.c.h.b16 %v4569
    %v4652 = vunpack.c.l.b16 %v4570
    %v4653 = vunpack.c.h.b16 %v4570
    %v4654 = vunpack.c.l.b16 %v4571
    %v4655 = vunpack.c.h.b16 %v4571
    %v4656 = vunpack.c.l.b16 %v4572
    %v4657 = vunpack.c.h.b16 %v4572
    %v4658 = vunpack.c.l.b16 %v4573
    %v4659 = vunpack.c.h.b16 %v4573
    %v4660 = vunpack.c.l.b16 %v4574
    %v4661 = vunpack.c.h.b16 %v4574
    %v4662 = vunpack.c.l.b16 %v4575
    %v4663 = vunpack.c.h.b16 %v4575
    %v4664 = vunpack.c.l.b16 %v4576
    %v4665 = vunpack.c.h.b16 %v4576
    %v4666 = vunpack.c.l.b16 %v4577
    %v4667 = vunpack.c.h.b16 %v4577
    %v4668 = vunpack.c.l.b16 %v4578
    %v4669 = vunpack.c.h.b16 %v4578
    %v4670 = vunpack.c.l.b16 %v4579
    %v4671 = vunpack.c.h.b16 %v4579
    %v4672 = vunpack.c.l.b16 %v4580
    %v4673 = vunpack.c.h.b16 %v4580
    %v4674 = vunpack.c.l.b16 %v4581
    %v4675 = vunpack.c.h.b16 %v4581
    %v4676 = vunpack.c.l.b16 %v4582
    %v4677 = vunpack.c.h.b16 %v4582
    %v4678 = vunpack.c.l.b16 %v4583
    %v4679 = vunpack.c.h.b16 %v4583
    %v4680 = vpack.c.b16 %v4620, %v4616
    %v4681 = vpack.c.b16 %v4621, %v4617
    %v4682 = vpack.c.b16 %v4622, %v4618
    %v4683 = vpack.c.b16 %v4623, %v4619
    %v4684 = vpack.c.b16 %v4628, %v4624
    %v4685 = vpack.c.b16 %v4629, %v4625
    %v4686 = vpack.c.b16 %v4630, %v4626
    %v4687 = vpack.c.b16 %v4631, %v4627
    %v4688 = vpack.c.b16 %v4636, %v4632
    %v4689 = vpack.c.b16 %v4637, %v4633
    %v4690 = vpack.c.b16 %v4638, %v4634
    %v4691 = vpack.c.b16 %v4639, %v4635
    %v4692 = vpack.c.b16 %v4644, %v4640
    %v4693 = vpack.c.b16 %v4645, %v4641
    %v4694 = vpack.c.b16 %v4646, %v4642
    %v4695 = vpack.c.b16 %v4647, %v4643
    %v4696 = vpack.c.b16 %v4652, %v4648
    %v4697 = vpack.c.b16 %v4653, %v4649
    %v4698 = vpack.c.b16 %v4654, %v4650
    %v4699 = vpack.c.b16 %v4655, %v4651
    %v4700 = vpack.c.b16 %v4660, %v4656
    %v4701 = vpack.c.b16 %v4661, %v4657
    %v4702 = vpack.c.b16 %v4662, %v4658
    %v4703 = vpack.c.b16 %v4663, %v4659
    %v4704 = vpack.c.b16 %v4668, %v4664
    %v4705 = vpack.c.b16 %v4669, %v4665
    %v4706 = vpack.c.b16 %v4670, %v4666
    %v4707 = vpack.c.b16 %v4671, %v4667
    %v4708 = vpack.c.b16 %v4676, %v4672
    %v4709 = vpack.c.b16 %v4677, %v4673
    %v4710 = vpack.c.b16 %v4678, %v4674
    %v4711 = vpack.c.b16 %v4679, %v4675
    %4744 = vmatpush.bf16.msra.mxu0 %v4708
    %4745 = vmatpush.bf16.msra.mxu0 %v4704
    %4746 = vmatpush.bf16.msra.mxu0 %v4700
    %4747 = vmatpush.bf16.msra.mxu0 %v4696
    %4748 = vmatpush.bf16.msra.mxu0 %v4692
    %4749 = vmatpush.bf16.msra.mxu0 %v4688
    %4750 = vmatpush.bf16.msra.mxu0 %v4684
    %4751 = vmatpush.bf16.msra.mxu0 %v4680
    %4752 = vmatmul.bf16.gmra.mxu0 %v4551
    %v4753 = vpop.f32.mrf.mxu0
    %v4754 = vadd.f32 0.0, %v4753
    %v4755 = vpop.f32.mrf.mxu0
    %4756 = vdwg.mxu0
    %4757 = vmatpush.bf16.msra.mxu0 %v4709
    %4758 = vmatpush.bf16.msra.mxu0 %v4705
    %4759 = vmatpush.bf16.msra.mxu0 %v4701
    %4760 = vmatpush.bf16.msra.mxu0 %v4697
    %4761 = vmatpush.bf16.msra.mxu0 %v4693
    %4762 = vmatpush.bf16.msra.mxu0 %v4689
    %4763 = vmatpush.bf16.msra.mxu0 %v4685
    %4764 = vmatpush.bf16.msra.mxu0 %v4681
    %4765 = vmatmul.bf16.gmra.mxu0 %v4551
    %v4766 = vpop.f32.mrf.mxu0
    %v4767 = vadd.f32 0.0, %v4766
    %v4768 = vpop.f32.mrf.mxu0
    %4769 = vdwg.mxu0
    %4770 = vmatpush.bf16.msra.mxu0 %v4710
    %4771 = vmatpush.bf16.msra.mxu0 %v4706
    %4772 = vmatpush.bf16.msra.mxu0 %v4702
    %4773 = vmatpush.bf16.msra.mxu0 %v4698
    %4774 = vmatpush.bf16.msra.mxu0 %v4694
    %4775 = vmatpush.bf16.msra.mxu0 %v4690
    %4776 = vmatpush.bf16.msra.mxu0 %v4686
    %4777 = vmatpush.bf16.msra.mxu0 %v4682
    %4778 = vmatmul.bf16.gmra.mxu0 %v4551
    %v4779 = vpop.f32.mrf.mxu0
    %v4780 = vadd.f32 0.0, %v4779
    %v4781 = vpop.f32.mrf.mxu0
    %4782 = vdwg.mxu0
    %4783 = vmatpush.bf16.msra.mxu0 %v4711
    %4784 = vmatpush.bf16.msra.mxu0 %v4707
    %4785 = vmatpush.bf16.msra.mxu0 %v4703
    %4786 = vmatpush.bf16.msra.mxu0 %v4699
    %4787 = vmatpush.bf16.msra.mxu0 %v4695
    %4788 = vmatpush.bf16.msra.mxu0 %v4691
    %4789 = vmatpush.bf16.msra.mxu0 %v4687
    %4790 = vmatpush.bf16.msra.mxu0 %v4683
    %4791 = vmatmul.bf16.gmra.mxu0 %v4551
    %v4792 = vpop.f32.mrf.mxu0
    %v4793 = vadd.f32 0.0, %v4792
    %v4794 = vpop.f32.mrf.mxu0
    %4795 = vdwg.mxu0
    %v4796 = vadd.f32 %v4547, %v4754
    %v4797 = vadd.f32 %v4548, %v4767
    %v4798 = vadd.f32 %v4549, %v4780
    %v4799 = vadd.f32 %v4550, %v4793
    %v4800 = vmul.f32 %v4796, 0.5
    %v4801 = vtanh.pop %v4800
    %v4802 = vadd.f32 %v4801, 1.0
    %v4803 = vmul.f32 %v4802, 0.5
    %v4804 = vmul.f32 %v4797, 0.5
    %v4805 = vtanh.pop %v4804
    %v4806 = vadd.f32 %v4805, 1.0
    %v4807 = vmul.f32 %v4806, 0.5
    %v4808 = vtanh.pop %v4798
    %v4809 = vmul.f32 %v4799, 0.5
    %v4810 = vtanh.pop %v4809
    %v4811 = vadd.f32 %v4810, 1.0
    %v4812 = vmul.f32 %v4811, 0.5
    %v4813 = vld [vmem:[#allocation3] sm:$0xff]
    %v4814 = vmul.f32 %v4807, %v4813
    %v4815 = vmul.f32 %v4803, %v4808
    %v4816 = vadd.f32 %v4814, %v4815
    %v4817 = vtanh.pop %v4816
    %v4818 = vmul.f32 %v4812, %v4817
    %4819 = vst [vmem:[#allocation3] sm:$0xff] %v4816
    %4820 = vst [vmem:[#allocation2] sm:$0xff] %v4818
    %v4821 = vld [vmem:[#allocation2] sm:$0xff]
    %v4822 = vld [vmem:[%s2234] sm:$0xff]
    %v4823 = vld [vmem:[%s2234 + $0x8] sm:$0xff]
    %v4824 = vld [vmem:[%s2234 + $0x10] sm:$0xff]
    %v4825 = vld [vmem:[%s2234 + $0x18] sm:$0xff]
    %v4826 = vpack.c.bf16 %v4821, %v4821
    %v4827 = vld [vmem:[#allocation11] sm:$0xff]
    %v4828 = vld [vmem:[#allocation11 + $0x8] sm:$0xff]
    %v4829 = vld [vmem:[#allocation11 + $0x10] sm:$0xff]
    %v4830 = vld [vmem:[#allocation11 + $0x18] sm:$0xff]
    %v4831 = vld [vmem:[#allocation11 + $0x20] sm:$0xff]
    %v4832 = vld [vmem:[#allocation11 + $0x28] sm:$0xff]
    %v4833 = vld [vmem:[#allocation11 + $0x30] sm:$0xff]
    %v4834 = vld [vmem:[#allocation11 + $0x38] sm:$0xff]
    %v4835 = vld [vmem:[#allocation11 + $0x40] sm:$0xff]
    %v4836 = vld [vmem:[#allocation11 + $0x48] sm:$0xff]
    %v4837 = vld [vmem:[#allocation11 + $0x50] sm:$0xff]
    %v4838 = vld [vmem:[#allocation11 + $0x58] sm:$0xff]
    %v4839 = vld [vmem:[#allocation11 + $0x60] sm:$0xff]
    %v4840 = vld [vmem:[#allocation11 + $0x68] sm:$0xff]
    %v4841 = vld [vmem:[#allocation11 + $0x70] sm:$0xff]
    %v4842 = vld [vmem:[#allocation11 + $0x78] sm:$0xff]
    %v4843 = vld [vmem:[#allocation11 + $0x80] sm:$0xff]
    %v4844 = vld [vmem:[#allocation11 + $0x88] sm:$0xff]
    %v4845 = vld [vmem:[#allocation11 + $0x90] sm:$0xff]
    %v4846 = vld [vmem:[#allocation11 + $0x98] sm:$0xff]
    %v4847 = vld [vmem:[#allocation11 + $0xa0] sm:$0xff]
    %v4848 = vld [vmem:[#allocation11 + $0xa8] sm:$0xff]
    %v4849 = vld [vmem:[#allocation11 + $0xb0] sm:$0xff]
    %v4850 = vld [vmem:[#allocation11 + $0xb8] sm:$0xff]
    %v4851 = vld [vmem:[#allocation11 + $0xc0] sm:$0xff]
    %v4852 = vld [vmem:[#allocation11 + $0xc8] sm:$0xff]
    %v4853 = vld [vmem:[#allocation11 + $0xd0] sm:$0xff]
    %v4854 = vld [vmem:[#allocation11 + $0xd8] sm:$0xff]
    %v4855 = vld [vmem:[#allocation11 + $0xe0] sm:$0xff]
    %v4856 = vld [vmem:[#allocation11 + $0xe8] sm:$0xff]
    %v4857 = vld [vmem:[#allocation11 + $0xf0] sm:$0xff]
    %v4858 = vld [vmem:[#allocation11 + $0xf8] sm:$0xff]
    %v4891 = vunpack.c.l.b16 %v4827
    %v4892 = vunpack.c.h.b16 %v4827
    %v4893 = vunpack.c.l.b16 %v4828
    %v4894 = vunpack.c.h.b16 %v4828
    %v4895 = vunpack.c.l.b16 %v4829
    %v4896 = vunpack.c.h.b16 %v4829
    %v4897 = vunpack.c.l.b16 %v4830
    %v4898 = vunpack.c.h.b16 %v4830
    %v4899 = vunpack.c.l.b16 %v4831
    %v4900 = vunpack.c.h.b16 %v4831
    %v4901 = vunpack.c.l.b16 %v4832
    %v4902 = vunpack.c.h.b16 %v4832
    %v4903 = vunpack.c.l.b16 %v4833
    %v4904 = vunpack.c.h.b16 %v4833
    %v4905 = vunpack.c.l.b16 %v4834
    %v4906 = vunpack.c.h.b16 %v4834
    %v4907 = vunpack.c.l.b16 %v4835
    %v4908 = vunpack.c.h.b16 %v4835
    %v4909 = vunpack.c.l.b16 %v4836
    %v4910 = vunpack.c.h.b16 %v4836
    %v4911 = vunpack.c.l.b16 %v4837
    %v4912 = vunpack.c.h.b16 %v4837
    %v4913 = vunpack.c.l.b16 %v4838
    %v4914 = vunpack.c.h.b16 %v4838
    %v4915 = vunpack.c.l.b16 %v4839
    %v4916 = vunpack.c.h.b16 %v4839
    %v4917 = vunpack.c.l.b16 %v4840
    %v4918 = vunpack.c.h.b16 %v4840
    %v4919 = vunpack.c.l.b16 %v4841
    %v4920 = vunpack.c.h.b16 %v4841
    %v4921 = vunpack.c.l.b16 %v4842
    %v4922 = vunpack.c.h.b16 %v4842
    %v4923 = vunpack.c.l.b16 %v4843
    %v4924 = vunpack.c.h.b16 %v4843
    %v4925 = vunpack.c.l.b16 %v4844
    %v4926 = vunpack.c.h.b16 %v4844
    %v4927 = vunpack.c.l.b16 %v4845
    %v4928 = vunpack.c.h.b16 %v4845
    %v4929 = vunpack.c.l.b16 %v4846
    %v4930 = vunpack.c.h.b16 %v4846
    %v4931 = vunpack.c.l.b16 %v4847
    %v4932 = vunpack.c.h.b16 %v4847
    %v4933 = vunpack.c.l.b16 %v4848
    %v4934 = vunpack.c.h.b16 %v4848
    %v4935 = vunpack.c.l.b16 %v4849
    %v4936 = vunpack.c.h.b16 %v4849
    %v4937 = vunpack.c.l.b16 %v4850
    %v4938 = vunpack.c.h.b16 %v4850
    %v4939 = vunpack.c.l.b16 %v4851
    %v4940 = vunpack.c.h.b16 %v4851
    %v4941 = vunpack.c.l.b16 %v4852
    %v4942 = vunpack.c.h.b16 %v4852
    %v4943 = vunpack.c.l.b16 %v4853
    %v4944 = vunpack.c.h.b16 %v4853
    %v4945 = vunpack.c.l.b16 %v4854
    %v4946 = vunpack.c.h.b16 %v4854
    %v4947 = vunpack.c.l.b16 %v4855
    %v4948 = vunpack.c.h.b16 %v4855
    %v4949 = vunpack.c.l.b16 %v4856
    %v4950 = vunpack.c.h.b16 %v4856
    %v4951 = vunpack.c.l.b16 %v4857
    %v4952 = vunpack.c.h.b16 %v4857
    %v4953 = vunpack.c.l.b16 %v4858
    %v4954 = vunpack.c.h.b16 %v4858
    %v4955 = vpack.c.b16 %v4895, %v4891
    %v4956 = vpack.c.b16 %v4896, %v4892
    %v4957 = vpack.c.b16 %v4897, %v4893
    %v4958 = vpack.c.b16 %v4898, %v4894
    %v4959 = vpack.c.b16 %v4903, %v4899
    %v4960 = vpack.c.b16 %v4904, %v4900
    %v4961 = vpack.c.b16 %v4905, %v4901
    %v4962 = vpack.c.b16 %v4906, %v4902
    %v4963 = vpack.c.b16 %v4911, %v4907
    %v4964 = vpack.c.b16 %v4912, %v4908
    %v4965 = vpack.c.b16 %v4913, %v4909
    %v4966 = vpack.c.b16 %v4914, %v4910
    %v4967 = vpack.c.b16 %v4919, %v4915
    %v4968 = vpack.c.b16 %v4920, %v4916
    %v4969 = vpack.c.b16 %v4921, %v4917
    %v4970 = vpack.c.b16 %v4922, %v4918
    %v4971 = vpack.c.b16 %v4927, %v4923
    %v4972 = vpack.c.b16 %v4928, %v4924
    %v4973 = vpack.c.b16 %v4929, %v4925
    %v4974 = vpack.c.b16 %v4930, %v4926
    %v4975 = vpack.c.b16 %v4935, %v4931
    %v4976 = vpack.c.b16 %v4936, %v4932
    %v4977 = vpack.c.b16 %v4937, %v4933
    %v4978 = vpack.c.b16 %v4938, %v4934
    %v4979 = vpack.c.b16 %v4943, %v4939
    %v4980 = vpack.c.b16 %v4944, %v4940
    %v4981 = vpack.c.b16 %v4945, %v4941
    %v4982 = vpack.c.b16 %v4946, %v4942
    %v4983 = vpack.c.b16 %v4951, %v4947
    %v4984 = vpack.c.b16 %v4952, %v4948
    %v4985 = vpack.c.b16 %v4953, %v4949
    %v4986 = vpack.c.b16 %v4954, %v4950
    %5019 = vmatpush.bf16.msra.mxu0 %v4983
    %5020 = vmatpush.bf16.msra.mxu0 %v4979
    %5021 = vmatpush.bf16.msra.mxu0 %v4975
    %5022 = vmatpush.bf16.msra.mxu0 %v4971
    %5023 = vmatpush.bf16.msra.mxu0 %v4967
    %5024 = vmatpush.bf16.msra.mxu0 %v4963
    %5025 = vmatpush.bf16.msra.mxu0 %v4959
    %5026 = vmatpush.bf16.msra.mxu0 %v4955
    %5027 = vmatmul.bf16.gmra.mxu0 %v4826
    %v5028 = vpop.f32.mrf.mxu0
    %v5029 = vadd.f32 0.0, %v5028
    %v5030 = vpop.f32.mrf.mxu0
    %5031 = vdwg.mxu0
    %5032 = vmatpush.bf16.msra.mxu0 %v4984
    %5033 = vmatpush.bf16.msra.mxu0 %v4980
    %5034 = vmatpush.bf16.msra.mxu0 %v4976
    %5035 = vmatpush.bf16.msra.mxu0 %v4972
    %5036 = vmatpush.bf16.msra.mxu0 %v4968
    %5037 = vmatpush.bf16.msra.mxu0 %v4964
    %5038 = vmatpush.bf16.msra.mxu0 %v4960
    %5039 = vmatpush.bf16.msra.mxu0 %v4956
    %5040 = vmatmul.bf16.gmra.mxu0 %v4826
    %v5041 = vpop.f32.mrf.mxu0
    %v5042 = vadd.f32 0.0, %v5041
    %v5043 = vpop.f32.mrf.mxu0
    %5044 = vdwg.mxu0
    %5045 = vmatpush.bf16.msra.mxu0 %v4985
    %5046 = vmatpush.bf16.msra.mxu0 %v4981
    %5047 = vmatpush.bf16.msra.mxu0 %v4977
    %5048 = vmatpush.bf16.msra.mxu0 %v4973
    %5049 = vmatpush.bf16.msra.mxu0 %v4969
    %5050 = vmatpush.bf16.msra.mxu0 %v4965
    %5051 = vmatpush.bf16.msra.mxu0 %v4961
    %5052 = vmatpush.bf16.msra.mxu0 %v4957
    %5053 = vmatmul.bf16.gmra.mxu0 %v4826
    %v5054 = vpop.f32.mrf.mxu0
    %v5055 = vadd.f32 0.0, %v5054
    %v5056 = vpop.f32.mrf.mxu0
    %5057 = vdwg.mxu0
    %5058 = vmatpush.bf16.msra.mxu0 %v4986
    %5059 = vmatpush.bf16.msra.mxu0 %v4982
    %5060 = vmatpush.bf16.msra.mxu0 %v4978
    %5061 = vmatpush.bf16.msra.mxu0 %v4974
    %5062 = vmatpush.bf16.msra.mxu0 %v4970
    %5063 = vmatpush.bf16.msra.mxu0 %v4966
    %5064 = vmatpush.bf16.msra.mxu0 %v4962
    %5065 = vmatpush.bf16.msra.mxu0 %v4958
    %5066 = vmatmul.bf16.gmra.mxu0 %v4826
    %v5067 = vpop.f32.mrf.mxu0
    %v5068 = vadd.f32 0.0, %v5067
    %v5069 = vpop.f32.mrf.mxu0
    %5070 = vdwg.mxu0
    %v5071 = vadd.f32 %v4822, %v5029
    %v5072 = vadd.f32 %v4823, %v5042
    %v5073 = vadd.f32 %v4824, %v5055
    %v5074 = vadd.f32 %v4825, %v5068
    %v5075 = vmul.f32 %v5071, 0.5
    %v5076 = vtanh.pop %v5075
    %v5077 = vadd.f32 %v5076, 1.0
    %v5078 = vmul.f32 %v5077, 0.5
    %v5079 = vmul.f32 %v5072, 0.5
    %v5080 = vtanh.pop %v5079
    %v5081 = vadd.f32 %v5080, 1.0
    %v5082 = vmul.f32 %v5081, 0.5
    %v5083 = vtanh.pop %v5073
    %v5084 = vmul.f32 %v5074, 0.5
    %v5085 = vtanh.pop %v5084
    %v5086 = vadd.f32 %v5085, 1.0
    %v5087 = vmul.f32 %v5086, 0.5
    %v5088 = vld [vmem:[#allocation3] sm:$0xff]
    %v5089 = vmul.f32 %v5082, %v5088
    %v5090 = vmul.f32 %v5078, %v5083
    %v5091 = vadd.f32 %v5089, %v5090
    %v5092 = vtanh.pop %v5091
    %v5093 = vmul.f32 %v5087, %v5092
    %5094 = vst [vmem:[#allocation3] sm:$0xff] %v5091
    %5095 = vst [vmem:[#allocation2] sm:$0xff] %v5093
    %v5096 = vld [vmem:[#allocation2] sm:$0xff]
    %v5097 = vpack.c.bf16 %v5096, %v5096
    %v5098 = vld [vmem:[%s7] sm:$0xf]
    %v5099 = vld [vmem:[%s7 + $0x4] sm:$0xf]
    %v5100 = vld [vmem:[%s7 + $0x8] sm:$0xf]
    %v5101 = vld [vmem:[%s7 + $0xc] sm:$0xf]
    %v5102 = vld [vmem:[%s7 + $0x10] sm:$0xf]
    %v5103 = vld [vmem:[%s7 + $0x14] sm:$0xf]
    %v5104 = vld [vmem:[%s7 + $0x18] sm:$0xf]
    %v5105 = vld [vmem:[%s7 + $0x1c] sm:$0xf]
    %v5106 = vld [vmem:[%s7 + $0x20] sm:$0xf]
    %v5107 = vld [vmem:[%s7 + $0x24] sm:$0xf]
    %v5108 = vld [vmem:[%s7 + $0x28] sm:$0xf]
    %v5109 = vld [vmem:[%s7 + $0x2c] sm:$0xf]
    %v5110 = vld [vmem:[%s7 + $0x30] sm:$0xf]
    %v5111 = vld [vmem:[%s7 + $0x34] sm:$0xf]
    %v5112 = vld [vmem:[%s7 + $0x38] sm:$0xf]
    %v5113 = vld [vmem:[%s7 + $0x3c] sm:$0xf]
    %v5114 = vld [vmem:[%s8] sm:$0x1]
    %v5116 = vperm.slane %v5114, 0
    %v5134 = vunpack.c.l.b16 %v5098
    %v5135 = vunpack.c.l.b16 %v5099
    %v5136 = vunpack.c.l.b16 %v5100
    %v5137 = vunpack.c.l.b16 %v5101
    %v5138 = vunpack.c.l.b16 %v5102
    %v5139 = vunpack.c.l.b16 %v5103
    %v5140 = vunpack.c.l.b16 %v5104
    %v5141 = vunpack.c.l.b16 %v5105
    %v5142 = vunpack.c.l.b16 %v5106
    %v5143 = vunpack.c.l.b16 %v5107
    %v5144 = vunpack.c.l.b16 %v5108
    %v5145 = vunpack.c.l.b16 %v5109
    %v5146 = vunpack.c.l.b16 %v5110
    %v5147 = vunpack.c.l.b16 %v5111
    %v5148 = vunpack.c.l.b16 %v5112
    %v5149 = vunpack.c.l.b16 %v5113
    %v5150 = vpack.c.b16 %v5135, %v5134
    %v5151 = vpack.c.b16 %v5137, %v5136
    %v5152 = vpack.c.b16 %v5139, %v5138
    %v5153 = vpack.c.b16 %v5141, %v5140
    %v5154 = vpack.c.b16 %v5143, %v5142
    %v5155 = vpack.c.b16 %v5145, %v5144
    %v5156 = vpack.c.b16 %v5147, %v5146
    %v5157 = vpack.c.b16 %v5149, %v5148
    %5166 = vmatpush.bf16.msra.mxu0 %v5157
    %5167 = vmatpush.bf16.msra.mxu0 %v5156
    %5168 = vmatpush.bf16.msra.mxu0 %v5155
    %5169 = vmatpush.bf16.msra.mxu0 %v5154
    %5170 = vmatpush.bf16.msra.mxu0 %v5153
    %5171 = vmatpush.bf16.msra.mxu0 %v5152
    %5172 = vmatpush.bf16.msra.mxu0 %v5151
    %5173 = vmatpush.bf16.msra.mxu0 %v5150
    %5174 = vmatmul.bf16.gmra.mxu0 %v5097
    %v5175 = vpop.f32.mrf.mxu0
    %v5176 = vadd.f32 %v5116, %v5175
    %v5177 = vpop.f32.mrf.mxu0
    %5178 = vdwg.mxu0
    %5179 = vst [vmem:[#allocation12] sm:$0xff] %v5176
    // Predicated region
    $region50: #{tpu_custom_call.1} parent=1 // pred_check
      _
    $region51: #{tpu_custom_call.1} parent=1 // pred_check_branch
      %5181 = sbr.rel (0) target = $region53
    $region52: #{tpu_custom_call.1} parent=1 // pred_region
      %5183 = vsyncadd [#allocation8], 0
      %s5185 = sshll.u32 [#allocation12], 4
      %s5186 = int_to_ptr.vmem [resolvable:$true] %s5185
      %s5187 = sshll.u32 %s9, 4
      %s5188 = int_to_ptr.hbm [resolvable:$true] %s5187
      %5190 = dma.vmem_to_hbm [thread:$0]  %s5186, 128, %s5188, [#allocation8]
    $region53: #{tpu_custom_call.1} parent=1 // pred_fallthru
      _
    // Predicated region
    $region54: #{tpu_custom_call.1} parent=1 // pred_check
      _
    $region55: #{tpu_custom_call.1} parent=1 // pred_check_branch
      %5192 = sbr.rel (0) target = $region57
    $region56: #{tpu_custom_call.1} parent=1 // pred_region
      %5194 = dma.done [#allocation8], 128
    $region57: #{tpu_custom_call.1} parent=1 // pred_fallthru
      _
    %5195 = vsyncpa [#allocation7], 1
    %5196 = vsyncpa [#allocation10], 1
    %5197 = vsyncpa [#allocation8], 1

</llo_original>
